<compile_context>
chip_gen: v6e
topology: v6e:2x2x1
jax: 0.10.0
libtpu: 0.0.40
codegen_flags: <defaults>
</compile_context>

<pallas_src>
import functools

import jax
import jax.numpy as jnp
from jax import lax
from jax.experimental import pallas as pl
from jax.experimental.pallas import tpu as pltpu


def _round_up(x, m):
    return (x + m - 1) // m * m


_TT_MAX = 32                       # max LSTM steps per grid iteration
_BT_MAX = 256                      # max batch rows per grid block
_GX_SCRATCH_ELEMS = 4 * 1024 * 1024  # cap pre-gate f32 scratch at ~16 MiB
_GATE_PERM = (0, 1, 3, 2)          # torch [i, f, g, o] -> kernel [i, f, o, g]


def _make_lstm_kernel(Hp, D, Tt, Bt, T_valid, needs_mask, unroll):
    """Build the recurrent kernel for a fixed static configuration."""

    def kernel(x_ref, h0_ref, c0_ref, wih_ref, whh_ref, bias_ref,
               out_ref, hn_ref, cn_ref,
               gx_sc, h_sc, c_sc):
        # x_ref   : (Tt, Bt, D)    raw input tile (matmul dtype)
        # h0/c0   : (Bt, Hp)       initial state for this batch block (f32)
        # wih     : (D, 4Hp)       fused input->gates weights  [i,f,o,g]
        # whh     : (Hp, 4Hp)      fused hidden->gates weights [i,f,o,g]
        # bias    : (1, 4Hp)       b_ih + b_hh (f32)
        # out     : (Tt, Bt, Hp)   per-step hidden output tile
        # hn/cn   : (Bt, Hp)       final states (resident blocks, written once)
        # gx_sc   : (Tt*Bt, 4Hp)   f32 pre-gate scratch (parallel GEMM result)
        # h_sc/c_sc : (Bt, Hp)     f32 recurrent carries across time blocks
        tb = pl.program_id(1)
        nT = pl.num_programs(1)

        @pl.when(tb == 0)
        def _():
            h_sc[...] = h0_ref[...].astype(jnp.float32)
            c_sc[...] = c0_ref[...].astype(jnp.float32)

        # --- parallel pre-gate GEMM, hoisted off the serial recurrence ------
        x2 = x_ref[...].reshape(Tt * Bt, D)
        gx_sc[...] = (
            jnp.dot(x2, wih_ref[...], preferred_element_type=jnp.float32)
            + bias_ref[...]
        )

        whh = whh_ref[...]  # loop-invariant; fetched once per grid step

        def step(k, carry):
            h, c = carry
            row = pl.multiple_of(k * Bt, Bt)
            # single fused MXU push per step: (Bt, Hp) @ (Hp, 4Hp) -> (Bt, 4Hp)
            gates = gx_sc[pl.ds(row, Bt), :] + jnp.dot(
                h.astype(whh.dtype), whh, preferred_element_type=jnp.float32)
            sig = jax.nn.sigmoid(gates[:, :3 * Hp])   # [i | f | o] contiguous
            g_g = jnp.tanh(gates[:, 3 * Hp:])
            i_g = sig[:, 0 * Hp:1 * Hp]
            f_g = sig[:, 1 * Hp:2 * Hp]
            o_g = sig[:, 2 * Hp:3 * Hp]
            c_new = f_g * c + i_g * g_g
            h_new = o_g * jnp.tanh(c_new)
            if needs_mask:  # only traced when T is not a multiple of Tt
                valid = (tb * Tt + k) < T_valid
                c_new = jnp.where(valid, c_new, c)
                h_new = jnp.where(valid, h_new, h)
            out_ref[k] = h_new.astype(out_ref.dtype)
            return h_new, c_new

        h, c = lax.fori_loop(0, Tt, step, (h_sc[...], c_sc[...]),
                             unroll=unroll)
        h_sc[...] = h
        c_sc[...] = c

        @pl.when(tb == nT - 1)
        def _():
            hn_ref[...] = h.astype(hn_ref.dtype)
            cn_ref[...] = c.astype(cn_ref.dtype)

    return kernel


@functools.partial(jax.jit, static_argnames=("matmul_dtype",))
def lstm_forward_pallas(x, h0, c0, w_ih, w_hh, b_ih, b_hh, *,
                        matmul_dtype=jnp.bfloat16):
    """x: (T, B, D) time-major; h0, c0: (B, H); w_ih: (4H, D); w_hh: (4H, H);
    biases: (4H,). Gate order [i, f, g, o] as in PyTorch nn.LSTM. Returns
    (out (T, B, H), (h_n, c_n) each (B, H))."""
    T, B, D = x.shape
    H = h0.shape[-1]
    out_dtype = x.dtype

    # ---- pad hidden size to the lane width and reorder gates to [i,f,o,g] --
    Hp = max(_round_up(H, 128), 128)
    pad_h = Hp - H
    perm = jnp.array(_GATE_PERM)
    w_ih4 = w_ih.reshape(4, H, D)[perm]
    w_hh4 = w_hh.reshape(4, H, H)[perm]
    b4 = (b_ih + b_hh).reshape(4, H)[perm]
    if pad_h:
        w_ih4 = jnp.pad(w_ih4, ((0, 0), (0, pad_h), (0, 0)))
        w_hh4 = jnp.pad(w_hh4, ((0, 0), (0, pad_h), (0, pad_h)))
        b4 = jnp.pad(b4, ((0, 0), (0, pad_h)))
    wih_t = jnp.transpose(w_ih4.reshape(4 * Hp, D)).astype(matmul_dtype)   # (D, 4Hp)
    whh_t = jnp.transpose(w_hh4.reshape(4 * Hp, Hp)).astype(matmul_dtype)  # (Hp, 4Hp)
    bias = b4.reshape(1, 4 * Hp).astype(jnp.float32)

    # ---- batch / time tiling (bounded VMEM footprint, megacore batch axis) -
    Bt = min(max(_round_up(B, 8), 8), _BT_MAX)
    Bp = _round_up(max(B, 1), Bt)
    nB = Bp // Bt

    tt_cap = max(1, _GX_SCRATCH_ELEMS // (Bt * 4 * Hp))
    Tt = max(1, min(T, _TT_MAX, tt_cap))
    Tp = _round_up(T, Tt)
    nT = Tp // Tt
    needs_mask = (Tp != T)
    unroll = min(Tt, 8)

    xp = jnp.pad(x, ((0, Tp - T), (0, Bp - B), (0, 0))).astype(matmul_dtype)
    h0p = jnp.pad(h0.astype(jnp.float32), ((0, Bp - B), (0, pad_h)))
    c0p = jnp.pad(c0.astype(jnp.float32), ((0, Bp - B), (0, pad_h)))

    kernel = _make_lstm_kernel(Hp, D, Tt, Bt, T, needs_mask, unroll)

    out_shapes = (
        jax.ShapeDtypeStruct((Tp, Bp, Hp), out_dtype),  # per-step hidden
        jax.ShapeDtypeStruct((Bp, Hp), out_dtype),      # h_n
        jax.ShapeDtypeStruct((Bp, Hp), out_dtype),      # c_n
    )

    grid_spec = pltpu.PrefetchScalarGridSpec(
        num_scalar_prefetch=0,
        grid=(nB, nT),
        in_specs=[
            pl.BlockSpec((Tt, Bt, D), lambda bb, tb: (tb, bb, 0)),   # x tile
            pl.BlockSpec((Bt, Hp), lambda bb, tb: (bb, 0)),          # h0
            pl.BlockSpec((Bt, Hp), lambda bb, tb: (bb, 0)),          # c0
            pl.BlockSpec((D, 4 * Hp), lambda bb, tb: (0, 0)),        # W_ih^T
            pl.BlockSpec((Hp, 4 * Hp), lambda bb, tb: (0, 0)),       # W_hh^T
            pl.BlockSpec((1, 4 * Hp), lambda bb, tb: (0, 0)),        # bias
        ],
        out_specs=[
            pl.BlockSpec((Tt, Bt, Hp), lambda bb, tb: (tb, bb, 0)),  # out tile
            pl.BlockSpec((Bt, Hp), lambda bb, tb: (bb, 0)),          # h_n
            pl.BlockSpec((Bt, Hp), lambda bb, tb: (bb, 0)),          # c_n
        ],
        scratch_shapes=[
            pltpu.VMEM((Tt * Bt, 4 * Hp), jnp.float32),  # pre-gate scratch
            pltpu.VMEM((Bt, Hp), jnp.float32),           # h carry
            pltpu.VMEM((Bt, Hp), jnp.float32),           # c carry
        ],
    )

    out, h_n, c_n = pl.pallas_call(
        kernel,
        out_shape=out_shapes,
        grid_spec=grid_spec,
        compiler_params=pltpu.CompilerParams(
            # batch rows are independent (megacore on v7x); time is a strict
            # recurrence.
            dimension_semantics=("parallel", "arbitrary"),
            vmem_limit_bytes=64 * 1024 * 1024,
        ),
    )(xp, h0p, c0p, wih_t, whh_t, bias)

    return out[:T, :B, :H], (h_n[:B, :H], c_n[:B, :H])


class Memory:
    """JAX/Pallas port of rsl_rl Memory (type='lstm', num_layers=1)."""

    def __init__(self, input_size, hidden_size=256, key=jax.random.PRNGKey(0),
                 matmul_dtype=jnp.bfloat16):
        self.input_size = input_size
        self.hidden_size = hidden_size
        # bf16 matmul operands by default (f32 accumulation / carries).
        self.matmul_dtype = matmul_dtype
        k = 1.0 / jnp.sqrt(hidden_size)
        ks = jax.random.split(key, 4)
        # PyTorch nn.LSTM parameter shapes, uniform(-k, k) init.
        self.w_ih = jax.random.uniform(ks[0], (4 * hidden_size, input_size),
                                       jnp.float32, -k, k)
        self.w_hh = jax.random.uniform(ks[1], (4 * hidden_size, hidden_size),
                                       jnp.float32, -k, k)
        self.b_ih = jax.random.uniform(ks[2], (4 * hidden_size,), jnp.float32, -k, k)
        self.b_hh = jax.random.uniform(ks[3], (4 * hidden_size,), jnp.float32, -k, k)
        self.hidden_states = None

    def forward(self, inp, masks=None, hidden_states=None):
        batch_mode = masks is not None
        if batch_mode:
            if hidden_states is None:
                raise ValueError("Hidden states not passed to memory module during policy update")
            h0, c0 = hidden_states            # each (1, B, H) as in nn.LSTM
            out, _ = lstm_forward_pallas(inp, h0[0], c0[0],
                                         self.w_ih, self.w_hh, self.b_ih, self.b_hh,
                                         matmul_dtype=self.matmul_dtype)
            # TODO(synk): unpad_trajectories(out, masks) (rsl_rl padding glue) not ported.
            return out
        else:
            B = inp.shape[0]
            if self.hidden_states is None:
                h0 = jnp.zeros((B, self.hidden_size), jnp.float32)
                c0 = jnp.zeros((B, self.hidden_size), jnp.float32)
            else:
                h0, c0 = self.hidden_states
            out, (h_n, c_n) = lstm_forward_pallas(inp[None, ...], h0, c0,
                                                  self.w_ih, self.w_hh,
                                                  self.b_ih, self.b_hh,
                                                  matmul_dtype=self.matmul_dtype)
            self.hidden_states = (h_n, c_n)
            return out

    def reset(self, dones=None):
        if self.hidden_states is None:
            return
        h, c = self.hidden_states
        keep = (dones != 1)[:, None].astype(h.dtype)
        self.hidden_states = (h * keep, c * keep)


def _lstm_ref(x, h0, c0, w_ih, w_hh, b_ih, b_hh):
    """Pure-JAX reference matching torch.nn.LSTM semantics (single layer)."""
    hi = jax.lax.Precision.HIGHEST

    def step(carry, xt):
        h, c = carry
        gates = (jnp.dot(xt, w_ih.T, precision=hi)
                 + jnp.dot(h, w_hh.T, precision=hi) + b_ih + b_hh)
        i, f, g, o = jnp.split(gates, 4, axis=-1)
        i = jax.nn.sigmoid(i)
        f = jax.nn.sigmoid(f)
        g = jnp.tanh(g)
        o = jax.nn.sigmoid(o)
        c = f * c + i * g
        h = o * jnp.tanh(c)
        return (h, c), h

    (h_n, c_n), out = jax.lax.scan(step, (h0, c0), x)
    return out, (h_n, c_n)


if __name__ == "__main__":
    T, B, D, H = 8, 4, 16, 256   # hidden_size=256 is the module default

    key = jax.random.PRNGKey(0)
    k_x, k_h, k_c, k_p = jax.random.split(key, 4)
    x = jax.random.normal(k_x, (T, B, D), jnp.float32)
    h0 = jax.random.normal(k_h, (1, B, H), jnp.float32)
    c0 = jax.random.normal(k_c, (1, B, H), jnp.float32)
    masks = jnp.ones((T, B), jnp.float32)

    mem = Memory(input_size=D, hidden_size=H, key=k_p)   # default bf16 recurrence

    # --- batch (policy-update) path, bf16 matmul operands --------------------
    out = jax.block_until_ready(mem.forward(x, masks=masks, hidden_states=(h0, c0)))
    out_ref, _ = _lstm_ref(x, h0[0], c0[0], mem.w_ih, mem.w_hh, mem.b_ih, mem.b_hh)
    assert out.shape == (T, B, H)
    assert jnp.allclose(out, out_ref, atol=5e-2, rtol=5e-2), "batch-mode (bf16) mismatch"

    # --- exactness check with f32 matmul operands; T=37 exercises the
    #     multi-time-block carry (Tt=32) + masked tail -------------------------
    T2 = 37
    x2 = jax.random.normal(jax.random.PRNGKey(2), (T2, B, D), jnp.float32)
    out2, (h2, c2) = lstm_forward_pallas(x2, h0[0], c0[0],
                                         mem.w_ih, mem.w_hh, mem.b_ih, mem.b_hh,
                                         matmul_dtype=jnp.float32)
    out2 = jax.block_until_ready(out2)
    out2_ref, (h2_ref, c2_ref) = _lstm_ref(x2, h0[0], c0[0],
                                           mem.w_ih, mem.w_hh, mem.b_ih, mem.b_hh)
    assert jnp.allclose(out2, out2_ref, atol=1e-3, rtol=1e-3), "f32 out mismatch"
    assert jnp.allclose(h2, h2_ref, atol=1e-3, rtol=1e-3), "h_n mismatch"
    assert jnp.allclose(c2, c2_ref, atol=1e-3, rtol=1e-3), "c_n mismatch"

    # --- stateful inference (rollout) path -----------------------------------
    step_in = jax.random.normal(jax.random.PRNGKey(1), (B, D), jnp.float32)
    step_out = jax.block_until_ready(mem.forward(step_in))
    assert step_out.shape == (1, B, H)
    mem.reset(dones=jnp.array([0, 1, 0, 1], jnp.int32))

    print("KERNEL_OK")
</pallas_src>

<mosaic_0001>
module attributes {stable_mosaic.version = 11 : i64} {
  func.func @kernel(%arg0: i32, %arg1: i32, %arg2: memref<8x8x16xbf16, #tpu.memory_space<vmem>>, %arg3: memref<8x256xf32, #tpu.memory_space<vmem>>, %arg4: memref<8x256xf32, #tpu.memory_space<vmem>>, %arg5: memref<16x1024xbf16, #tpu.memory_space<vmem>>, %arg6: memref<256x1024xbf16, #tpu.memory_space<vmem>>, %arg7: memref<1x1024xf32, #tpu.memory_space<vmem>>, %arg8: memref<8x8x256xf32, #tpu.memory_space<vmem>>, %arg9: memref<8x256xf32, #tpu.memory_space<vmem>>, %arg10: memref<8x256xf32, #tpu.memory_space<vmem>>, %arg11: memref<64x1024xf32, #tpu.memory_space<vmem>>, %arg12: memref<8x256xf32, #tpu.memory_space<vmem>>, %arg13: memref<8x256xf32, #tpu.memory_space<vmem>>) attributes {dimension_semantics = [#tpu.dimension_semantics<parallel>, #tpu.dimension_semantics<arbitrary>], iteration_bounds = array<i64: 1, 1>, scalar_prefetch = 0 : i64, scratch_operands = 3 : i64, tpu.core_type = #tpu.core_type<tc>, window_params = [{transform_indices = @transform_0, window_bounds = array<i64: 8, 8, 16>}, {transform_indices = @transform_1, window_bounds = array<i64: 8, 256>}, {transform_indices = @transform_2, window_bounds = array<i64: 8, 256>}, {pipeline_mode = #tpu.pipeline_mode<synchronous>, transform_indices = @transform_3, window_bounds = array<i64: 16, 1024>}, {pipeline_mode = #tpu.pipeline_mode<synchronous>, transform_indices = @transform_4, window_bounds = array<i64: 256, 1024>}, {pipeline_mode = #tpu.pipeline_mode<synchronous>, transform_indices = @transform_5, window_bounds = array<i64: 1, 1024>}, {transform_indices = @transform_6, window_bounds = array<i64: 8, 8, 256>}, {transform_indices = @transform_7, window_bounds = array<i64: 8, 256>}, {transform_indices = @transform_8, window_bounds = array<i64: 8, 256>}]} {
    %c0_i32 = arith.constant 0 : i32
    %0 = arith.cmpi eq, %arg1, %c0_i32 : i32
    %1 = arith.extui %0 : i1 to i32
    %c0_i32_0 = arith.constant 0 : i32
    %2 = arith.cmpi ne, %1, %c0_i32_0 : i32
    scf.if %2 {
      %c0_70 = arith.constant 0 : index
      %c0_71 = arith.constant 0 : index
      %235 = vector.load %arg3[%c0_70, %c0_71] : memref<8x256xf32, #tpu.memory_space<vmem>>, vector<8x256xf32>
      %c0_72 = arith.constant 0 : index
      %c0_73 = arith.constant 0 : index
      %236 = vector.load %arg12[%c0_72, %c0_73] : memref<8x256xf32, #tpu.memory_space<vmem>>, vector<8x256xf32>
      tpu.vector_store %arg12[%c0_72, %c0_73], %235 {strides = array<i32>} : memref<8x256xf32, #tpu.memory_space<vmem>>, vector<8x256xf32>,
      %c0_74 = arith.constant 0 : index
      %c0_75 = arith.constant 0 : index
      %237 = vector.load %arg4[%c0_74, %c0_75] : memref<8x256xf32, #tpu.memory_space<vmem>>, vector<8x256xf32>
      %c0_76 = arith.constant 0 : index
      %c0_77 = arith.constant 0 : index
      %238 = vector.load %arg13[%c0_76, %c0_77] : memref<8x256xf32, #tpu.memory_space<vmem>>, vector<8x256xf32>
      tpu.vector_store %arg13[%c0_76, %c0_77], %237 {strides = array<i32>} : memref<8x256xf32, #tpu.memory_space<vmem>>, vector<8x256xf32>,
    } else {
    }
    %c0 = arith.constant 0 : index
    %c0_1 = arith.constant 0 : index
    %c0_2 = arith.constant 0 : index
    %3 = vector.load %arg2[%c0, %c0_1, %c0_2] : memref<8x8x16xbf16, #tpu.memory_space<vmem>>, vector<8x8x16xbf16>
    %4 = vector.shape_cast %3 : vector<8x8x16xbf16> to vector<64x16xbf16>
    %c0_3 = arith.constant 0 : index
    %c0_4 = arith.constant 0 : index
    %5 = vector.load %arg5[%c0_3, %c0_4] : memref<16x1024xbf16, #tpu.memory_space<vmem>>, vector<16x1024xbf16>
    %cst = arith.constant dense<0.000000e+00> : vector<64x1024xf32>
    %6 = tpu.matmul %4, %5, %cst {dimension_numbers = #tpu.dot_dimension_numbers<[1], [0], [0], [1], [0, 0, 1, 1], [], []>} : vector<64x16xbf16>, vector<16x1024xbf16>, vector<64x1024xf32> -> vector<64x1024xf32>
    %c0_5 = arith.constant 0 : index
    %c0_6 = arith.constant 0 : index
    %7 = vector.load %arg7[%c0_5, %c0_6] : memref<1x1024xf32, #tpu.memory_space<vmem>>, vector<1x1024xf32>
    %8 = vector.broadcast %7 : vector<1x1024xf32> to vector<64x1024xf32>
    %9 = arith.addf %6, %8 : vector<64x1024xf32>
    %c0_7 = arith.constant 0 : index
    %c0_8 = arith.constant 0 : index
    %10 = vector.load %arg11[%c0_7, %c0_8] : memref<64x1024xf32, #tpu.memory_space<vmem>>, vector<64x1024xf32>
    tpu.vector_store %arg11[%c0_7, %c0_8], %9 {strides = array<i32>} : memref<64x1024xf32, #tpu.memory_space<vmem>>, vector<64x1024xf32>,
    %c0_9 = arith.constant 0 : index
    %c0_10 = arith.constant 0 : index
    %11 = vector.load %arg6[%c0_9, %c0_10] : memref<256x1024xbf16, #tpu.memory_space<vmem>>, vector<256x1024xbf16>
    %c0_11 = arith.constant 0 : index
    %c0_12 = arith.constant 0 : index
    %12 = vector.load %arg12[%c0_11, %c0_12] : memref<8x256xf32, #tpu.memory_space<vmem>>, vector<8x256xf32>
    %c0_13 = arith.constant 0 : index
    %c0_14 = arith.constant 0 : index
    %13 = vector.load %arg13[%c0_13, %c0_14] : memref<8x256xf32, #tpu.memory_space<vmem>>, vector<8x256xf32>
    %c0_i32_15 = arith.constant 0 : i32
    %c8_i32 = arith.constant 8 : i32
    %14 = arith.muli %c0_i32_15, %c8_i32 : i32
    %15 = tpu.assume_multiple %14, 8 : i32
    %16 = arith.index_cast %15 : i32 to index
    %c0_16 = arith.constant 0 : index
    %17 = vector.load %arg11[%16, %c0_16] : memref<64x1024xf32, #tpu.memory_space<vmem>>, vector<8x1024xf32>
    %18 = arith.truncf %12 : vector<8x256xf32> to vector<8x256xbf16>
    %cst_17 = arith.constant dense<0.000000e+00> : vector<8x1024xf32>
    %19 = tpu.matmul %18, %11, %cst_17 {dimension_numbers = #tpu.dot_dimension_numbers<[1], [0], [0], [1], [0, 0, 1, 1], [], []>} : vector<8x256xbf16>, vector<256x1024xbf16>, vector<8x1024xf32> -> vector<8x1024xf32>
    %20 = arith.addf %17, %19 : vector<8x1024xf32>
    %21 = vector.extract_strided_slice %20 {offsets = [0, 0], sizes = [8, 768], strides = [1, 1]} : vector<8x1024xf32> to vector<8x768xf32>
    %22 = arith.negf %21 : vector<8x768xf32>
    %23 = math.exp %22 : vector<8x768xf32>
    %cst_18 = arith.constant 1.000000e+00 : f32
    %24 = vector.broadcast %cst_18 : f32 to vector<8x768xf32>
    %25 = arith.addf %24, %23 : vector<8x768xf32>
    %26 = arith.divf %24, %25 : vector<8x768xf32>
    %27 = vector.extract_strided_slice %20 {offsets = [0, 768], sizes = [8, 256], strides = [1, 1]} : vector<8x1024xf32> to vector<8x256xf32>
    %28 = math.tanh %27 : vector<8x256xf32>
    %29 = vector.extract_strided_slice %26 {offsets = [0, 0], sizes = [8, 256], strides = [1, 1]} : vector<8x768xf32> to vector<8x256xf32>
    %30 = vector.extract_strided_slice %26 {offsets = [0, 256], sizes = [8, 256], strides = [1, 1]} : vector<8x768xf32> to vector<8x256xf32>
    %31 = vector.extract_strided_slice %26 {offsets = [0, 512], sizes = [8, 256], strides = [1, 1]} : vector<8x768xf32> to vector<8x256xf32>
    %32 = arith.mulf %30, %13 : vector<8x256xf32>
    %33 = arith.mulf %29, %28 : vector<8x256xf32>
    %34 = arith.addf %32, %33 : vector<8x256xf32>
    %35 = math.tanh %34 : vector<8x256xf32>
    %36 = arith.mulf %31, %35 : vector<8x256xf32>
    %37 = arith.index_cast %c0_i32_15 : i32 to index
    %c0_19 = arith.constant 0 : index
    %c0_20 = arith.constant 0 : index
    %38 = vector.load %arg8[%37, %c0_19, %c0_20] : memref<8x8x256xf32, #tpu.memory_space<vmem>>, vector<1x8x256xf32>
    %39 = vector.shape_cast %38 : vector<1x8x256xf32> to vector<8x256xf32>
    %40 = vector.shape_cast %36 : vector<8x256xf32> to vector<1x8x256xf32>
    tpu.vector_store %arg8[%37, %c0_19, %c0_20], %40 {strides = array<i32>} : memref<8x8x256xf32, #tpu.memory_space<vmem>>, vector<1x8x256xf32>,
    %c1_i32 = arith.constant 1 : i32
    %c8_i32_21 = arith.constant 8 : i32
    %41 = arith.muli %c1_i32, %c8_i32_21 : i32
    %42 = tpu.assume_multiple %41, 8 : i32
    %43 = arith.index_cast %42 : i32 to index
    %c0_22 = arith.constant 0 : index
    %44 = vector.load %arg11[%43, %c0_22] : memref<64x1024xf32, #tpu.memory_space<vmem>>, vector<8x1024xf32>
    %45 = arith.truncf %36 : vector<8x256xf32> to vector<8x256xbf16>
    %cst_23 = arith.constant dense<0.000000e+00> : vector<8x1024xf32>
    %46 = tpu.matmul %45, %11, %cst_23 {dimension_numbers = #tpu.dot_dimension_numbers<[1], [0], [0], [1], [0, 0, 1, 1], [], []>} : vector<8x256xbf16>, vector<256x1024xbf16>, vector<8x1024xf32> -> vector<8x1024xf32>
    %47 = arith.addf %44, %46 : vector<8x1024xf32>
    %48 = vector.extract_strided_slice %47 {offsets = [0, 0], sizes = [8, 768], strides = [1, 1]} : vector<8x1024xf32> to vector<8x768xf32>
    %49 = arith.negf %48 : vector<8x768xf32>
    %50 = math.exp %49 : vector<8x768xf32>
    %cst_24 = arith.constant 1.000000e+00 : f32
    %51 = vector.broadcast %cst_24 : f32 to vector<8x768xf32>
    %52 = arith.addf %51, %50 : vector<8x768xf32>
    %53 = arith.divf %51, %52 : vector<8x768xf32>
    %54 = vector.extract_strided_slice %47 {offsets = [0, 768], sizes = [8, 256], strides = [1, 1]} : vector<8x1024xf32> to vector<8x256xf32>
    %55 = math.tanh %54 : vector<8x256xf32>
    %56 = vector.extract_strided_slice %53 {offsets = [0, 0], sizes = [8, 256], strides = [1, 1]} : vector<8x768xf32> to vector<8x256xf32>
    %57 = vector.extract_strided_slice %53 {offsets = [0, 256], sizes = [8, 256], strides = [1, 1]} : vector<8x768xf32> to vector<8x256xf32>
    %58 = vector.extract_strided_slice %53 {offsets = [0, 512], sizes = [8, 256], strides = [1, 1]} : vector<8x768xf32> to vector<8x256xf32>
    %59 = arith.mulf %57, %34 : vector<8x256xf32>
    %60 = arith.mulf %56, %55 : vector<8x256xf32>
    %61 = arith.addf %59, %60 : vector<8x256xf32>
    %62 = math.tanh %61 : vector<8x256xf32>
    %63 = arith.mulf %58, %62 : vector<8x256xf32>
    %64 = arith.index_cast %c1_i32 : i32 to index
    %c0_25 = arith.constant 0 : index
    %c0_26 = arith.constant 0 : index
    %65 = vector.load %arg8[%64, %c0_25, %c0_26] : memref<8x8x256xf32, #tpu.memory_space<vmem>>, vector<1x8x256xf32>
    %66 = vector.shape_cast %65 : vector<1x8x256xf32> to vector<8x256xf32>
    %67 = vector.shape_cast %63 : vector<8x256xf32> to vector<1x8x256xf32>
    tpu.vector_store %arg8[%64, %c0_25, %c0_26], %67 {strides = array<i32>} : memref<8x8x256xf32, #tpu.memory_space<vmem>>, vector<1x8x256xf32>,
    %c2_i32 = arith.constant 2 : i32
    %c8_i32_27 = arith.constant 8 : i32
    %68 = arith.muli %c2_i32, %c8_i32_27 : i32
    %69 = tpu.assume_multiple %68, 8 : i32
    %70 = arith.index_cast %69 : i32 to index
    %c0_28 = arith.constant 0 : index
    %71 = vector.load %arg11[%70, %c0_28] : memref<64x1024xf32, #tpu.memory_space<vmem>>, vector<8x1024xf32>
    %72 = arith.truncf %63 : vector<8x256xf32> to vector<8x256xbf16>
    %cst_29 = arith.constant dense<0.000000e+00> : vector<8x1024xf32>
    %73 = tpu.matmul %72, %11, %cst_29 {dimension_numbers = #tpu.dot_dimension_numbers<[1], [0], [0], [1], [0, 0, 1, 1], [], []>} : vector<8x256xbf16>, vector<256x1024xbf16>, vector<8x1024xf32> -> vector<8x1024xf32>
    %74 = arith.addf %71, %73 : vector<8x1024xf32>
    %75 = vector.extract_strided_slice %74 {offsets = [0, 0], sizes = [8, 768], strides = [1, 1]} : vector<8x1024xf32> to vector<8x768xf32>
    %76 = arith.negf %75 : vector<8x768xf32>
    %77 = math.exp %76 : vector<8x768xf32>
    %cst_30 = arith.constant 1.000000e+00 : f32
    %78 = vector.broadcast %cst_30 : f32 to vector<8x768xf32>
    %79 = arith.addf %78, %77 : vector<8x768xf32>
    %80 = arith.divf %78, %79 : vector<8x768xf32>
    %81 = vector.extract_strided_slice %74 {offsets = [0, 768], sizes = [8, 256], strides = [1, 1]} : vector<8x1024xf32> to vector<8x256xf32>
    %82 = math.tanh %81 : vector<8x256xf32>
    %83 = vector.extract_strided_slice %80 {offsets = [0, 0], sizes = [8, 256], strides = [1, 1]} : vector<8x768xf32> to vector<8x256xf32>
    %84 = vector.extract_strided_slice %80 {offsets = [0, 256], sizes = [8, 256], strides = [1, 1]} : vector<8x768xf32> to vector<8x256xf32>
    %85 = vector.extract_strided_slice %80 {offsets = [0, 512], sizes = [8, 256], strides = [1, 1]} : vector<8x768xf32> to vector<8x256xf32>
    %86 = arith.mulf %84, %61 : vector<8x256xf32>
    %87 = arith.mulf %83, %82 : vector<8x256xf32>
    %88 = arith.addf %86, %87 : vector<8x256xf32>
    %89 = math.tanh %88 : vector<8x256xf32>
    %90 = arith.mulf %85, %89 : vector<8x256xf32>
    %91 = arith.index_cast %c2_i32 : i32 to index
    %c0_31 = arith.constant 0 : index
    %c0_32 = arith.constant 0 : index
    %92 = vector.load %arg8[%91, %c0_31, %c0_32] : memref<8x8x256xf32, #tpu.memory_space<vmem>>, vector<1x8x256xf32>
    %93 = vector.shape_cast %92 : vector<1x8x256xf32> to vector<8x256xf32>
    %94 = vector.shape_cast %90 : vector<8x256xf32> to vector<1x8x256xf32>
    tpu.vector_store %arg8[%91, %c0_31, %c0_32], %94 {strides = array<i32>} : memref<8x8x256xf32, #tpu.memory_space<vmem>>, vector<1x8x256xf32>,
    %c3_i32 = arith.constant 3 : i32
    %c8_i32_33 = arith.constant 8 : i32
    %95 = arith.muli %c3_i32, %c8_i32_33 : i32
    %96 = tpu.assume_multiple %95, 8 : i32
    %97 = arith.index_cast %96 : i32 to index
    %c0_34 = arith.constant 0 : index
    %98 = vector.load %arg11[%97, %c0_34] : memref<64x1024xf32, #tpu.memory_space<vmem>>, vector<8x1024xf32>
    %99 = arith.truncf %90 : vector<8x256xf32> to vector<8x256xbf16>
    %cst_35 = arith.constant dense<0.000000e+00> : vector<8x1024xf32>
    %100 = tpu.matmul %99, %11, %cst_35 {dimension_numbers = #tpu.dot_dimension_numbers<[1], [0], [0], [1], [0, 0, 1, 1], [], []>} : vector<8x256xbf16>, vector<256x1024xbf16>, vector<8x1024xf32> -> vector<8x1024xf32>
    %101 = arith.addf %98, %100 : vector<8x1024xf32>
    %102 = vector.extract_strided_slice %101 {offsets = [0, 0], sizes = [8, 768], strides = [1, 1]} : vector<8x1024xf32> to vector<8x768xf32>
    %103 = arith.negf %102 : vector<8x768xf32>
    %104 = math.exp %103 : vector<8x768xf32>
    %cst_36 = arith.constant 1.000000e+00 : f32
    %105 = vector.broadcast %cst_36 : f32 to vector<8x768xf32>
    %106 = arith.addf %105, %104 : vector<8x768xf32>
    %107 = arith.divf %105, %106 : vector<8x768xf32>
    %108 = vector.extract_strided_slice %101 {offsets = [0, 768], sizes = [8, 256], strides = [1, 1]} : vector<8x1024xf32> to vector<8x256xf32>
    %109 = math.tanh %108 : vector<8x256xf32>
    %110 = vector.extract_strided_slice %107 {offsets = [0, 0], sizes = [8, 256], strides = [1, 1]} : vector<8x768xf32> to vector<8x256xf32>
    %111 = vector.extract_strided_slice %107 {offsets = [0, 256], sizes = [8, 256], strides = [1, 1]} : vector<8x768xf32> to vector<8x256xf32>
    %112 = vector.extract_strided_slice %107 {offsets = [0, 512], sizes = [8, 256], strides = [1, 1]} : vector<8x768xf32> to vector<8x256xf32>
    %113 = arith.mulf %111, %88 : vector<8x256xf32>
    %114 = arith.mulf %110, %109 : vector<8x256xf32>
    %115 = arith.addf %113, %114 : vector<8x256xf32>
    %116 = math.tanh %115 : vector<8x256xf32>
    %117 = arith.mulf %112, %116 : vector<8x256xf32>
    %118 = arith.index_cast %c3_i32 : i32 to index
    %c0_37 = arith.constant 0 : index
    %c0_38 = arith.constant 0 : index
    %119 = vector.load %arg8[%118, %c0_37, %c0_38] : memref<8x8x256xf32, #tpu.memory_space<vmem>>, vector<1x8x256xf32>
    %120 = vector.shape_cast %119 : vector<1x8x256xf32> to vector<8x256xf32>
    %121 = vector.shape_cast %117 : vector<8x256xf32> to vector<1x8x256xf32>
    tpu.vector_store %arg8[%118, %c0_37, %c0_38], %121 {strides = array<i32>} : memref<8x8x256xf32, #tpu.memory_space<vmem>>, vector<1x8x256xf32>,
    %c4_i32 = arith.constant 4 : i32
    %c8_i32_39 = arith.constant 8 : i32
    %122 = arith.muli %c4_i32, %c8_i32_39 : i32
    %123 = tpu.assume_multiple %122, 8 : i32
    %124 = arith.index_cast %123 : i32 to index
    %c0_40 = arith.constant 0 : index
    %125 = vector.load %arg11[%124, %c0_40] : memref<64x1024xf32, #tpu.memory_space<vmem>>, vector<8x1024xf32>
    %126 = arith.truncf %117 : vector<8x256xf32> to vector<8x256xbf16>
    %cst_41 = arith.constant dense<0.000000e+00> : vector<8x1024xf32>
    %127 = tpu.matmul %126, %11, %cst_41 {dimension_numbers = #tpu.dot_dimension_numbers<[1], [0], [0], [1], [0, 0, 1, 1], [], []>} : vector<8x256xbf16>, vector<256x1024xbf16>, vector<8x1024xf32> -> vector<8x1024xf32>
    %128 = arith.addf %125, %127 : vector<8x1024xf32>
    %129 = vector.extract_strided_slice %128 {offsets = [0, 0], sizes = [8, 768], strides = [1, 1]} : vector<8x1024xf32> to vector<8x768xf32>
    %130 = arith.negf %129 : vector<8x768xf32>
    %131 = math.exp %130 : vector<8x768xf32>
    %cst_42 = arith.constant 1.000000e+00 : f32
    %132 = vector.broadcast %cst_42 : f32 to vector<8x768xf32>
    %133 = arith.addf %132, %131 : vector<8x768xf32>
    %134 = arith.divf %132, %133 : vector<8x768xf32>
    %135 = vector.extract_strided_slice %128 {offsets = [0, 768], sizes = [8, 256], strides = [1, 1]} : vector<8x1024xf32> to vector<8x256xf32>
    %136 = math.tanh %135 : vector<8x256xf32>
    %137 = vector.extract_strided_slice %134 {offsets = [0, 0], sizes = [8, 256], strides = [1, 1]} : vector<8x768xf32> to vector<8x256xf32>
    %138 = vector.extract_strided_slice %134 {offsets = [0, 256], sizes = [8, 256], strides = [1, 1]} : vector<8x768xf32> to vector<8x256xf32>
    %139 = vector.extract_strided_slice %134 {offsets = [0, 512], sizes = [8, 256], strides = [1, 1]} : vector<8x768xf32> to vector<8x256xf32>
    %140 = arith.mulf %138, %115 : vector<8x256xf32>
    %141 = arith.mulf %137, %136 : vector<8x256xf32>
    %142 = arith.addf %140, %141 : vector<8x256xf32>
    %143 = math.tanh %142 : vector<8x256xf32>
    %144 = arith.mulf %139, %143 : vector<8x256xf32>
    %145 = arith.index_cast %c4_i32 : i32 to index
    %c0_43 = arith.constant 0 : index
    %c0_44 = arith.constant 0 : index
    %146 = vector.load %arg8[%145, %c0_43, %c0_44] : memref<8x8x256xf32, #tpu.memory_space<vmem>>, vector<1x8x256xf32>
    %147 = vector.shape_cast %146 : vector<1x8x256xf32> to vector<8x256xf32>
    %148 = vector.shape_cast %144 : vector<8x256xf32> to vector<1x8x256xf32>
    tpu.vector_store %arg8[%145, %c0_43, %c0_44], %148 {strides = array<i32>} : memref<8x8x256xf32, #tpu.memory_space<vmem>>, vector<1x8x256xf32>,
    %c5_i32 = arith.constant 5 : i32
    %c8_i32_45 = arith.constant 8 : i32
    %149 = arith.muli %c5_i32, %c8_i32_45 : i32
    %150 = tpu.assume_multiple %149, 8 : i32
    %151 = arith.index_cast %150 : i32 to index
    %c0_46 = arith.constant 0 : index
    %152 = vector.load %arg11[%151, %c0_46] : memref<64x1024xf32, #tpu.memory_space<vmem>>, vector<8x1024xf32>
    %153 = arith.truncf %144 : vector<8x256xf32> to vector<8x256xbf16>
    %cst_47 = arith.constant dense<0.000000e+00> : vector<8x1024xf32>
    %154 = tpu.matmul %153, %11, %cst_47 {dimension_numbers = #tpu.dot_dimension_numbers<[1], [0], [0], [1], [0, 0, 1, 1], [], []>} : vector<8x256xbf16>, vector<256x1024xbf16>, vector<8x1024xf32> -> vector<8x1024xf32>
    %155 = arith.addf %152, %154 : vector<8x1024xf32>
    %156 = vector.extract_strided_slice %155 {offsets = [0, 0], sizes = [8, 768], strides = [1, 1]} : vector<8x1024xf32> to vector<8x768xf32>
    %157 = arith.negf %156 : vector<8x768xf32>
    %158 = math.exp %157 : vector<8x768xf32>
    %cst_48 = arith.constant 1.000000e+00 : f32
    %159 = vector.broadcast %cst_48 : f32 to vector<8x768xf32>
    %160 = arith.addf %159, %158 : vector<8x768xf32>
    %161 = arith.divf %159, %160 : vector<8x768xf32>
    %162 = vector.extract_strided_slice %155 {offsets = [0, 768], sizes = [8, 256], strides = [1, 1]} : vector<8x1024xf32> to vector<8x256xf32>
    %163 = math.tanh %162 : vector<8x256xf32>
    %164 = vector.extract_strided_slice %161 {offsets = [0, 0], sizes = [8, 256], strides = [1, 1]} : vector<8x768xf32> to vector<8x256xf32>
    %165 = vector.extract_strided_slice %161 {offsets = [0, 256], sizes = [8, 256], strides = [1, 1]} : vector<8x768xf32> to vector<8x256xf32>
    %166 = vector.extract_strided_slice %161 {offsets = [0, 512], sizes = [8, 256], strides = [1, 1]} : vector<8x768xf32> to vector<8x256xf32>
    %167 = arith.mulf %165, %142 : vector<8x256xf32>
    %168 = arith.mulf %164, %163 : vector<8x256xf32>
    %169 = arith.addf %167, %168 : vector<8x256xf32>
    %170 = math.tanh %169 : vector<8x256xf32>
    %171 = arith.mulf %166, %170 : vector<8x256xf32>
    %172 = arith.index_cast %c5_i32 : i32 to index
    %c0_49 = arith.constant 0 : index
    %c0_50 = arith.constant 0 : index
    %173 = vector.load %arg8[%172, %c0_49, %c0_50] : memref<8x8x256xf32, #tpu.memory_space<vmem>>, vector<1x8x256xf32>
    %174 = vector.shape_cast %173 : vector<1x8x256xf32> to vector<8x256xf32>
    %175 = vector.shape_cast %171 : vector<8x256xf32> to vector<1x8x256xf32>
    tpu.vector_store %arg8[%172, %c0_49, %c0_50], %175 {strides = array<i32>} : memref<8x8x256xf32, #tpu.memory_space<vmem>>, vector<1x8x256xf32>,
    %c6_i32 = arith.constant 6 : i32
    %c8_i32_51 = arith.constant 8 : i32
    %176 = arith.muli %c6_i32, %c8_i32_51 : i32
    %177 = tpu.assume_multiple %176, 8 : i32
    %178 = arith.index_cast %177 : i32 to index
    %c0_52 = arith.constant 0 : index
    %179 = vector.load %arg11[%178, %c0_52] : memref<64x1024xf32, #tpu.memory_space<vmem>>, vector<8x1024xf32>
    %180 = arith.truncf %171 : vector<8x256xf32> to vector<8x256xbf16>
    %cst_53 = arith.constant dense<0.000000e+00> : vector<8x1024xf32>
    %181 = tpu.matmul %180, %11, %cst_53 {dimension_numbers = #tpu.dot_dimension_numbers<[1], [0], [0], [1], [0, 0, 1, 1], [], []>} : vector<8x256xbf16>, vector<256x1024xbf16>, vector<8x1024xf32> -> vector<8x1024xf32>
    %182 = arith.addf %179, %181 : vector<8x1024xf32>
    %183 = vector.extract_strided_slice %182 {offsets = [0, 0], sizes = [8, 768], strides = [1, 1]} : vector<8x1024xf32> to vector<8x768xf32>
    %184 = arith.negf %183 : vector<8x768xf32>
    %185 = math.exp %184 : vector<8x768xf32>
    %cst_54 = arith.constant 1.000000e+00 : f32
    %186 = vector.broadcast %cst_54 : f32 to vector<8x768xf32>
    %187 = arith.addf %186, %185 : vector<8x768xf32>
    %188 = arith.divf %186, %187 : vector<8x768xf32>
    %189 = vector.extract_strided_slice %182 {offsets = [0, 768], sizes = [8, 256], strides = [1, 1]} : vector<8x1024xf32> to vector<8x256xf32>
    %190 = math.tanh %189 : vector<8x256xf32>
    %191 = vector.extract_strided_slice %188 {offsets = [0, 0], sizes = [8, 256], strides = [1, 1]} : vector<8x768xf32> to vector<8x256xf32>
    %192 = vector.extract_strided_slice %188 {offsets = [0, 256], sizes = [8, 256], strides = [1, 1]} : vector<8x768xf32> to vector<8x256xf32>
    %193 = vector.extract_strided_slice %188 {offsets = [0, 512], sizes = [8, 256], strides = [1, 1]} : vector<8x768xf32> to vector<8x256xf32>
    %194 = arith.mulf %192, %169 : vector<8x256xf32>
    %195 = arith.mulf %191, %190 : vector<8x256xf32>
    %196 = arith.addf %194, %195 : vector<8x256xf32>
    %197 = math.tanh %196 : vector<8x256xf32>
    %198 = arith.mulf %193, %197 : vector<8x256xf32>
    %199 = arith.index_cast %c6_i32 : i32 to index
    %c0_55 = arith.constant 0 : index
    %c0_56 = arith.constant 0 : index
    %200 = vector.load %arg8[%199, %c0_55, %c0_56] : memref<8x8x256xf32, #tpu.memory_space<vmem>>, vector<1x8x256xf32>
    %201 = vector.shape_cast %200 : vector<1x8x256xf32> to vector<8x256xf32>
    %202 = vector.shape_cast %198 : vector<8x256xf32> to vector<1x8x256xf32>
    tpu.vector_store %arg8[%199, %c0_55, %c0_56], %202 {strides = array<i32>} : memref<8x8x256xf32, #tpu.memory_space<vmem>>, vector<1x8x256xf32>,
    %c7_i32 = arith.constant 7 : i32
    %c8_i32_57 = arith.constant 8 : i32
    %203 = arith.muli %c7_i32, %c8_i32_57 : i32
    %204 = tpu.assume_multiple %203, 8 : i32
    %205 = arith.index_cast %204 : i32 to index
    %c0_58 = arith.constant 0 : index
    %206 = vector.load %arg11[%205, %c0_58] : memref<64x1024xf32, #tpu.memory_space<vmem>>, vector<8x1024xf32>
    %207 = arith.truncf %198 : vector<8x256xf32> to vector<8x256xbf16>
    %cst_59 = arith.constant dense<0.000000e+00> : vector<8x1024xf32>
    %208 = tpu.matmul %207, %11, %cst_59 {dimension_numbers = #tpu.dot_dimension_numbers<[1], [0], [0], [1], [0, 0, 1, 1], [], []>} : vector<8x256xbf16>, vector<256x1024xbf16>, vector<8x1024xf32> -> vector<8x1024xf32>
    %209 = arith.addf %206, %208 : vector<8x1024xf32>
    %210 = vector.extract_strided_slice %209 {offsets = [0, 0], sizes = [8, 768], strides = [1, 1]} : vector<8x1024xf32> to vector<8x768xf32>
    %211 = arith.negf %210 : vector<8x768xf32>
    %212 = math.exp %211 : vector<8x768xf32>
    %cst_60 = arith.constant 1.000000e+00 : f32
    %213 = vector.broadcast %cst_60 : f32 to vector<8x768xf32>
    %214 = arith.addf %213, %212 : vector<8x768xf32>
    %215 = arith.divf %213, %214 : vector<8x768xf32>
    %216 = vector.extract_strided_slice %209 {offsets = [0, 768], sizes = [8, 256], strides = [1, 1]} : vector<8x1024xf32> to vector<8x256xf32>
    %217 = math.tanh %216 : vector<8x256xf32>
    %218 = vector.extract_strided_slice %215 {offsets = [0, 0], sizes = [8, 256], strides = [1, 1]} : vector<8x768xf32> to vector<8x256xf32>
    %219 = vector.extract_strided_slice %215 {offsets = [0, 256], sizes = [8, 256], strides = [1, 1]} : vector<8x768xf32> to vector<8x256xf32>
    %220 = vector.extract_strided_slice %215 {offsets = [0, 512], sizes = [8, 256], strides = [1, 1]} : vector<8x768xf32> to vector<8x256xf32>
    %221 = arith.mulf %219, %196 : vector<8x256xf32>
    %222 = arith.mulf %218, %217 : vector<8x256xf32>
    %223 = arith.addf %221, %222 : vector<8x256xf32>
    %224 = math.tanh %223 : vector<8x256xf32>
    %225 = arith.mulf %220, %224 : vector<8x256xf32>
    %226 = arith.index_cast %c7_i32 : i32 to index
    %c0_61 = arith.constant 0 : index
    %c0_62 = arith.constant 0 : index
    %227 = vector.load %arg8[%226, %c0_61, %c0_62] : memref<8x8x256xf32, #tpu.memory_space<vmem>>, vector<1x8x256xf32>
    %228 = vector.shape_cast %227 : vector<1x8x256xf32> to vector<8x256xf32>
    %229 = vector.shape_cast %225 : vector<8x256xf32> to vector<1x8x256xf32>
    tpu.vector_store %arg8[%226, %c0_61, %c0_62], %229 {strides = array<i32>} : memref<8x8x256xf32, #tpu.memory_space<vmem>>, vector<1x8x256xf32>,
    %c8_i32_63 = arith.constant 8 : i32
    %c0_64 = arith.constant 0 : index
    %c0_65 = arith.constant 0 : index
    %230 = vector.load %arg12[%c0_64, %c0_65] : memref<8x256xf32, #tpu.memory_space<vmem>>, vector<8x256xf32>
    tpu.vector_store %arg12[%c0_64, %c0_65], %225 {strides = array<i32>} : memref<8x256xf32, #tpu.memory_space<vmem>>, vector<8x256xf32>,
    %c0_66 = arith.constant 0 : index
    %c0_67 = arith.constant 0 : index
    %231 = vector.load %arg13[%c0_66, %c0_67] : memref<8x256xf32, #tpu.memory_space<vmem>>, vector<8x256xf32>
    tpu.vector_store %arg13[%c0_66, %c0_67], %223 {strides = array<i32>} : memref<8x256xf32, #tpu.memory_space<vmem>>, vector<8x256xf32>,
    %c0_i32_68 = arith.constant 0 : i32
    %232 = arith.cmpi eq, %arg1, %c0_i32_68 : i32
    %233 = arith.extui %232 : i1 to i32
    %c0_i32_69 = arith.constant 0 : i32
    %234 = arith.cmpi ne, %233, %c0_i32_69 : i32
    scf.if %234 {
      %c0_70 = arith.constant 0 : index
      %c0_71 = arith.constant 0 : index
      %235 = vector.load %arg9[%c0_70, %c0_71] : memref<8x256xf32, #tpu.memory_space<vmem>>, vector<8x256xf32>
      tpu.vector_store %arg9[%c0_70, %c0_71], %225 {strides = array<i32>} : memref<8x256xf32, #tpu.memory_space<vmem>>, vector<8x256xf32>,
      %c0_72 = arith.constant 0 : index
      %c0_73 = arith.constant 0 : index
      %236 = vector.load %arg10[%c0_72, %c0_73] : memref<8x256xf32, #tpu.memory_space<vmem>>, vector<8x256xf32>
      tpu.vector_store %arg10[%c0_72, %c0_73], %223 {strides = array<i32>} : memref<8x256xf32, #tpu.memory_space<vmem>>, vector<8x256xf32>,
    } else {
    }
    return
  }
  func.func @transform_0(%arg0: i32, %arg1: i32) -> (i32, i32, i32) {
    %c0_i32 = arith.constant 0 : i32
    %c0_i32_0 = arith.constant 0 : i32
    return %arg1, %arg0, %c0_i32 : i32, i32, i32
  }
  func.func @transform_1(%arg0: i32, %arg1: i32) -> (i32, i32) {
    %c0_i32 = arith.constant 0 : i32
    %c0_i32_0 = arith.constant 0 : i32
    return %arg0, %c0_i32 : i32, i32
  }
  func.func @transform_2(%arg0: i32, %arg1: i32) -> (i32, i32) {
    %c0_i32 = arith.constant 0 : i32
    %c0_i32_0 = arith.constant 0 : i32
    return %arg0, %c0_i32 : i32, i32
  }
  func.func @transform_3(%arg0: i32, %arg1: i32) -> (i32, i32) {
    %c0_i32 = arith.constant 0 : i32
    %c0_i32_0 = arith.constant 0 : i32
    %c0_i32_1 = arith.constant 0 : i32
    return %c0_i32, %c0_i32_0 : i32, i32
  }
  func.func @transform_4(%arg0: i32, %arg1: i32) -> (i32, i32) {
    %c0_i32 = arith.constant 0 : i32
    %c0_i32_0 = arith.constant 0 : i32
    %c0_i32_1 = arith.constant 0 : i32
    return %c0_i32, %c0_i32_0 : i32, i32
  }
  func.func @transform_5(%arg0: i32, %arg1: i32) -> (i32, i32) {
    %c0_i32 = arith.constant 0 : i32
    %c0_i32_0 = arith.constant 0 : i32
    %c0_i32_1 = arith.constant 0 : i32
    return %c0_i32, %c0_i32_0 : i32, i32
  }
  func.func @transform_6(%arg0: i32, %arg1: i32) -> (i32, i32, i32) {
    %c0_i32 = arith.constant 0 : i32
    %c0_i32_0 = arith.constant 0 : i32
    return %arg1, %arg0, %c0_i32 : i32, i32, i32
  }
  func.func @transform_7(%arg0: i32, %arg1: i32) -> (i32, i32) {
    %c0_i32 = arith.constant 0 : i32
    %c0_i32_0 = arith.constant 0 : i32
    return %arg0, %c0_i32 : i32, i32
  }
  func.func @transform_8(%arg0: i32, %arg1: i32) -> (i32, i32) {
    %c0_i32 = arith.constant 0 : i32
    %c0_i32_0 = arith.constant 0 : i32
    return %arg0, %c0_i32 : i32, i32
  }
}

</mosaic_0001>

<llo_original>
// kernel: lstm_forward_pallas.1
$region0: #{lstm_forward_pallas.1}
  #allocation0 [shape = 'u32[]', space=smem, size = 0x4, offset = 0x4, fixed_abs, tag = 'smem constant byte address 0x4 - core index']
  #allocation1 [shape = 'u32[144,128]{1,0:T(1,128)}', space=vmem, size = 0x12000, scoped, tag = 'internal scratch']
  #allocation2 [shape = 'f32[64,1024]{1,0:T(8,128)}', space=vmem, size = 0x40000, scoped, tag = 'scratch operand']
  #allocation3 [shape = 'f32[8,256]{1,0:T(8,128)}', space=vmem, size = 0x2000, scoped, tag = 'scratch operand']
  #allocation4 [shape = 'f32[8,256]{1,0:T(8,128)}', space=vmem, size = 0x2000, scoped, tag = 'scratch operand']
  %s0 = inlined_call_operand.vmem [shape: bf16[8,8,16], index: 0, kind: input, shape index: {}]
  %s1 = inlined_call_operand.vmem [shape: f32[8,256], index: 1, kind: input, shape index: {}]
  %s2 = inlined_call_operand.vmem [shape: f32[8,256], index: 2, kind: input, shape index: {}]
  %s3 = inlined_call_operand.vmem [shape: bf16[16,1024], index: 3, kind: input, shape index: {}]
  %s4 = inlined_call_operand.vmem [shape: bf16[256,1024], index: 4, kind: input, shape index: {}]
  %s5 = inlined_call_operand.vmem [shape: f32[1,1024], index: 5, kind: input, shape index: {}]
  %s6 = inlined_call_operand.vmem [shape: f32[8,8,256], index: 6, kind: output, shape index: {0}]
  %s7 = inlined_call_operand.vmem [shape: f32[8,256], index: 7, kind: output, shape index: {1}]
  %s8 = inlined_call_operand.vmem [shape: f32[8,256], index: 8, kind: output, shape index: {2}]
  %9 = xla_tuple %s6, %s7, %s8
  %s10 = sld [smem:[#allocation0]]
  $region58: #{lstm_forward_pallas.1} parent=0
    _
  %s12 = ssub.s32 1, %s10
  %s13 = scalar_select 0, %s12, %s10
  // Predicated region
  $region2: #{lstm_forward_pallas.1} parent=0 // pred_check
    _
  $region3: #{lstm_forward_pallas.1} parent=0 // pred_check_branch
    %15 = sbr.rel (0) target = $region5
  $region4: #{lstm_forward_pallas.1} parent=0 // pred_region
    _
  $region5: #{lstm_forward_pallas.1} parent=0 // pred_fallthru
    _
  // Predicated region
  $region6: #{lstm_forward_pallas.1} parent=0 // pred_check
    _
  $region7: #{lstm_forward_pallas.1} parent=0 // pred_check_branch
    %17 = sbr.rel (0) target = $region9
  $region8: #{lstm_forward_pallas.1} parent=0 // pred_region
    _
  $region9: #{lstm_forward_pallas.1} parent=0 // pred_fallthru
    _
  // Predicated region
  $region10: #{lstm_forward_pallas.1} parent=0 // pred_check
    _
  $region11: #{lstm_forward_pallas.1} parent=0 // pred_check_branch
    %19 = sbr.rel (0) target = $region13
  $region12: #{lstm_forward_pallas.1} parent=0 // pred_region
    _
  $region13: #{lstm_forward_pallas.1} parent=0 // pred_fallthru
    _
  // Predicated region
  $region14: #{lstm_forward_pallas.1} parent=0 // pred_check
    _
  $region15: #{lstm_forward_pallas.1} parent=0 // pred_check_branch
    %21 = sbr.rel (0) target = $region17
  $region16: #{lstm_forward_pallas.1} parent=0 // pred_region
    _
  $region17: #{lstm_forward_pallas.1} parent=0 // pred_fallthru
    _
  // Predicated region
  $region18: #{lstm_forward_pallas.1} parent=0 // pred_check
    _
  $region19: #{lstm_forward_pallas.1} parent=0 // pred_check_branch
    %23 = sbr.rel (0) target = $region21
  $region20: #{lstm_forward_pallas.1} parent=0 // pred_region
    _
  $region21: #{lstm_forward_pallas.1} parent=0 // pred_fallthru
    _
  // Predicated region
  $region22: #{lstm_forward_pallas.1} parent=0 // pred_check
    _
  $region23: #{lstm_forward_pallas.1} parent=0 // pred_check_branch
    %25 = sbr.rel (0) target = $region25
  $region24: #{lstm_forward_pallas.1} parent=0 // pred_region
    _
  $region25: #{lstm_forward_pallas.1} parent=0 // pred_fallthru
    _
  %p27 = scmp.eq.s32.totalorder 0, 0
  // Predicated region
  $region26: #{lstm_forward_pallas.1} parent=0 // pred_check
    %p28 = pneg %p27
  $region27: #{lstm_forward_pallas.1} parent=0 // pred_check_branch
    %30 = sbr.rel (%p28) target = $region29
  $region28: #{lstm_forward_pallas.1} parent=0 // pred_region
    %v31 = vld [vmem:[%s1] sm:$0xff]
    %v32 = vld [vmem:[%s1 + $0x8] sm:$0xff]
    %33 = vst [vmem:[#allocation3] sm:$0xff] %v31
    %34 = vst [vmem:[#allocation3 + $0x8] sm:$0xff] %v32
    %v35 = vld [vmem:[%s2] sm:$0xff]
    %v36 = vld [vmem:[%s2 + $0x8] sm:$0xff]
    %37 = vst [vmem:[#allocation4] sm:$0xff] %v35
    %38 = vst [vmem:[#allocation4 + $0x8] sm:$0xff] %v36
  $region29: #{lstm_forward_pallas.1} parent=0 // pred_fallthru
    _
  %v39 = vld [vmem:[%s0] sm:$0xf]
  %v40 = vld [vmem:[%s0 + $0x4] sm:$0xf]
  %v41 = vld [vmem:[%s0 + $0x8] sm:$0xf]
  %v42 = vld [vmem:[%s0 + $0xc] sm:$0xf]
  %v43 = vld [vmem:[%s0 + $0x10] sm:$0xf]
  %v44 = vld [vmem:[%s0 + $0x14] sm:$0xf]
  %v45 = vld [vmem:[%s0 + $0x18] sm:$0xf]
  %v46 = vld [vmem:[%s0 + $0x1c] sm:$0xf]
  %v47 = vld [vmem:[%s3] sm:$0xff]
  %v48 = vld [vmem:[%s3 + $0x8] sm:$0xff]
  %v49 = vld [vmem:[%s3 + $0x10] sm:$0xff]
  %v50 = vld [vmem:[%s3 + $0x18] sm:$0xff]
  %v51 = vld [vmem:[%s3 + $0x20] sm:$0xff]
  %v52 = vld [vmem:[%s3 + $0x28] sm:$0xff]
  %v53 = vld [vmem:[%s3 + $0x30] sm:$0xff]
  %v54 = vld [vmem:[%s3 + $0x38] sm:$0xff]
  %v55 = vld [vmem:[%s5] sm:$0xff]
  %v57 = vlaneseq
  %v58 = vshrl.u32 %v57, 7
  %v59 = vsub.s32 0, %v58
  %v60 = vrot.slane %v55, %v59
  %v61 = vlaneseq
  %v62 = vshrl.u32 %v61, 7
  %v63 = vsub.s32 1, %v62
  %v64 = vrot.slane %v55, %v63
  %v65 = vlaneseq
  %v66 = vshrl.u32 %v65, 7
  %v67 = vsub.s32 2, %v66
  %v68 = vrot.slane %v55, %v67
  %v69 = vlaneseq
  %v70 = vshrl.u32 %v69, 7
  %v71 = vsub.s32 3, %v70
  %v72 = vrot.slane %v55, %v71
  %v73 = vlaneseq
  %v74 = vshrl.u32 %v73, 7
  %v75 = vsub.s32 4, %v74
  %v76 = vrot.slane %v55, %v75
  %v77 = vlaneseq
  %v78 = vshrl.u32 %v77, 7
  %v79 = vsub.s32 5, %v78
  %v80 = vrot.slane %v55, %v79
  %v81 = vlaneseq
  %v82 = vshrl.u32 %v81, 7
  %v83 = vsub.s32 6, %v82
  %v84 = vrot.slane %v55, %v83
  %v85 = vlaneseq
  %v86 = vshrl.u32 %v85, 7
  %v87 = vsub.s32 7, %v86
  %v88 = vrot.slane %v55, %v87
  %v105 = vunpack.c.l.b16 %v39
  %v106 = vunpack.c.l.b16 %v40
  %v107 = vunpack.c.l.b16 %v41
  %v108 = vunpack.c.l.b16 %v42
  %v109 = vunpack.c.l.b16 %v43
  %v110 = vunpack.c.l.b16 %v44
  %v111 = vunpack.c.l.b16 %v45
  %v112 = vunpack.c.l.b16 %v46
  %v113 = vpack.c.b16 %v106, %v105
  %v114 = vpack.c.b16 %v108, %v107
  %v115 = vpack.c.b16 %v110, %v109
  %v116 = vpack.c.b16 %v112, %v111
  %v125 = vunpack.c.l.b16 %v47
  %v126 = vunpack.c.h.b16 %v47
  %v127 = vunpack.c.l.b16 %v48
  %v128 = vunpack.c.h.b16 %v48
  %v129 = vunpack.c.l.b16 %v49
  %v130 = vunpack.c.h.b16 %v49
  %v131 = vunpack.c.l.b16 %v50
  %v132 = vunpack.c.h.b16 %v50
  %v133 = vunpack.c.l.b16 %v51
  %v134 = vunpack.c.h.b16 %v51
  %v135 = vunpack.c.l.b16 %v52
  %v136 = vunpack.c.h.b16 %v52
  %v137 = vunpack.c.l.b16 %v53
  %v138 = vunpack.c.h.b16 %v53
  %v139 = vunpack.c.l.b16 %v54
  %v140 = vunpack.c.h.b16 %v54
  %v141 = vpack.c.b16 %v133, %v125
  %v142 = vpack.c.b16 %v134, %v126
  %v143 = vpack.c.b16 %v135, %v127
  %v144 = vpack.c.b16 %v136, %v128
  %v145 = vpack.c.b16 %v137, %v129
  %v146 = vpack.c.b16 %v138, %v130
  %v147 = vpack.c.b16 %v139, %v131
  %v148 = vpack.c.b16 %v140, %v132
  %vm157 = vcmask 130048
  %v159 = vsel %vm157, %v113, 0
  %v162 = vsel %vm157, %v114, 0
  %v165 = vsel %vm157, %v115, 0
  %v168 = vsel %vm157, %v116, 0
  %170 = vmatprep.subr.bf16.mxu0 0
  %171 = vmatpush1.bf16.msra.mxu0 0
  %172 = vmatprep.subr.bf16.mxu0 0
  %173 = vmatpush1.bf16.msra.mxu0 0
  %174 = vmatprep.subr.bf16.mxu0 0
  %175 = vmatpush1.bf16.msra.mxu0 0
  %176 = vmatprep.subr.bf16.mxu0 0
  %177 = vmatpush1.bf16.msra.mxu0 0
  %178 = vmatprep.subr.bf16.mxu0 0
  %179 = vmatpush1.bf16.msra.mxu0 0
  %180 = vmatprep.subr.bf16.mxu0 0
  %181 = vmatpush1.bf16.msra.mxu0 0
  %182 = vmatprep.subr.bf16.mxu0 0
  %183 = vmatpush1.bf16.msra.mxu0 0
  %184 = vmatprep.subr.bf16.mxu0 %v142
  %185 = vmatpush1.bf16.msra.mxu0 %v141
  %186 = vmatprep.subr.bf16.mxu0 0
  %187 = vmatpush2.bf16.msra.mxu0 0
  %188 = vmatprep.subr.bf16.mxu0 0
  %189 = vmatpush2.bf16.msra.mxu0 0
  %190 = vmatprep.subr.bf16.mxu0 0
  %191 = vmatpush2.bf16.msra.mxu0 0
  %192 = vmatprep.subr.bf16.mxu0 0
  %193 = vmatpush2.bf16.msra.mxu0 0
  %194 = vmatprep.subr.bf16.mxu0 0
  %195 = vmatpush2.bf16.msra.mxu0 0
  %196 = vmatprep.subr.bf16.mxu0 0
  %197 = vmatpush2.bf16.msra.mxu0 0
  %198 = vmatprep.subr.bf16.mxu0 0
  %199 = vmatpush2.bf16.msra.mxu0 0
  %200 = vmatprep.subr.bf16.mxu0 0
  %201 = vmatpush2.bf16.msra.mxu0 0
  %202 = vmatprep.mubr.bf16.mxu0 0
  %203 = vmatmul.mubr.bf16.gmra.mxu0 %v159
  %v204 = vpop.f32.mrf.mxu0
  %v205 = vadd.f32 %v60, %v204
  %v206 = vpop.f32.mrf.mxu0
  %v207 = vadd.f32 %v64, %v206
  %v208 = vpop.f32.mrf.mxu0
  %v209 = vadd.f32 %v60, %v208
  %v210 = vpop.f32.mrf.mxu0
  %v211 = vadd.f32 %v64, %v210
  %212 = vmatprep.mubr.bf16.mxu0 0
  %213 = vmatmul.mubr.bf16.gmra.mxu0 %v162
  %v214 = vpop.f32.mrf.mxu0
  %v215 = vadd.f32 %v60, %v214
  %v216 = vpop.f32.mrf.mxu0
  %v217 = vadd.f32 %v64, %v216
  %v218 = vpop.f32.mrf.mxu0
  %v219 = vadd.f32 %v60, %v218
  %v220 = vpop.f32.mrf.mxu0
  %v221 = vadd.f32 %v64, %v220
  %222 = vmatprep.mubr.bf16.mxu0 0
  %223 = vmatmul.mubr.bf16.gmra.mxu0 %v165
  %v224 = vpop.f32.mrf.mxu0
  %v225 = vadd.f32 %v60, %v224
  %v226 = vpop.f32.mrf.mxu0
  %v227 = vadd.f32 %v64, %v226
  %v228 = vpop.f32.mrf.mxu0
  %v229 = vadd.f32 %v60, %v228
  %v230 = vpop.f32.mrf.mxu0
  %v231 = vadd.f32 %v64, %v230
  %232 = vmatprep.mubr.bf16.mxu0 0
  %233 = vmatmul.mubr.bf16.gmra.mxu0 %v168
  %v234 = vpop.f32.mrf.mxu0
  %v235 = vadd.f32 %v60, %v234
  %v236 = vpop.f32.mrf.mxu0
  %v237 = vadd.f32 %v64, %v236
  %v238 = vpop.f32.mrf.mxu0
  %v239 = vadd.f32 %v60, %v238
  %v240 = vpop.f32.mrf.mxu0
  %v241 = vadd.f32 %v64, %v240
  %242 = vdwg.mxu0
  %243 = vmatprep.subr.bf16.mxu0 0
  %244 = vmatpush1.bf16.msra.mxu0 0
  %245 = vmatprep.subr.bf16.mxu0 0
  %246 = vmatpush1.bf16.msra.mxu0 0
  %247 = vmatprep.subr.bf16.mxu0 0
  %248 = vmatpush1.bf16.msra.mxu0 0
  %249 = vmatprep.subr.bf16.mxu0 0
  %250 = vmatpush1.bf16.msra.mxu0 0
  %251 = vmatprep.subr.bf16.mxu0 0
  %252 = vmatpush1.bf16.msra.mxu0 0
  %253 = vmatprep.subr.bf16.mxu0 0
  %254 = vmatpush1.bf16.msra.mxu0 0
  %255 = vmatprep.subr.bf16.mxu0 0
  %256 = vmatpush1.bf16.msra.mxu0 0
  %257 = vmatprep.subr.bf16.mxu0 %v144
  %258 = vmatpush1.bf16.msra.mxu0 %v143
  %259 = vmatprep.subr.bf16.mxu0 0
  %260 = vmatpush2.bf16.msra.mxu0 0
  %261 = vmatprep.subr.bf16.mxu0 0
  %262 = vmatpush2.bf16.msra.mxu0 0
  %263 = vmatprep.subr.bf16.mxu0 0
  %264 = vmatpush2.bf16.msra.mxu0 0
  %265 = vmatprep.subr.bf16.mxu0 0
  %266 = vmatpush2.bf16.msra.mxu0 0
  %267 = vmatprep.subr.bf16.mxu0 0
  %268 = vmatpush2.bf16.msra.mxu0 0
  %269 = vmatprep.subr.bf16.mxu0 0
  %270 = vmatpush2.bf16.msra.mxu0 0
  %271 = vmatprep.subr.bf16.mxu0 0
  %272 = vmatpush2.bf16.msra.mxu0 0
  %273 = vmatprep.subr.bf16.mxu0 0
  %274 = vmatpush2.bf16.msra.mxu0 0
  %275 = vmatprep.mubr.bf16.mxu0 0
  %276 = vmatmul.mubr.bf16.gmra.mxu0 %v159
  %v277 = vpop.f32.mrf.mxu0
  %v278 = vadd.f32 %v68, %v277
  %v279 = vpop.f32.mrf.mxu0
  %v280 = vadd.f32 %v72, %v279
  %v281 = vpop.f32.mrf.mxu0
  %v282 = vadd.f32 %v68, %v281
  %v283 = vpop.f32.mrf.mxu0
  %v284 = vadd.f32 %v72, %v283
  %285 = vmatprep.mubr.bf16.mxu0 0
  %286 = vmatmul.mubr.bf16.gmra.mxu0 %v162
  %v287 = vpop.f32.mrf.mxu0
  %v288 = vadd.f32 %v68, %v287
  %v289 = vpop.f32.mrf.mxu0
  %v290 = vadd.f32 %v72, %v289
  %v291 = vpop.f32.mrf.mxu0
  %v292 = vadd.f32 %v68, %v291
  %v293 = vpop.f32.mrf.mxu0
  %v294 = vadd.f32 %v72, %v293
  %295 = vmatprep.mubr.bf16.mxu0 0
  %296 = vmatmul.mubr.bf16.gmra.mxu0 %v165
  %v297 = vpop.f32.mrf.mxu0
  %v298 = vadd.f32 %v68, %v297
  %v299 = vpop.f32.mrf.mxu0
  %v300 = vadd.f32 %v72, %v299
  %v301 = vpop.f32.mrf.mxu0
  %v302 = vadd.f32 %v68, %v301
  %v303 = vpop.f32.mrf.mxu0
  %v304 = vadd.f32 %v72, %v303
  %305 = vmatprep.mubr.bf16.mxu0 0
  %306 = vmatmul.mubr.bf16.gmra.mxu0 %v168
  %v307 = vpop.f32.mrf.mxu0
  %v308 = vadd.f32 %v68, %v307
  %v309 = vpop.f32.mrf.mxu0
  %v310 = vadd.f32 %v72, %v309
  %v311 = vpop.f32.mrf.mxu0
  %v312 = vadd.f32 %v68, %v311
  %v313 = vpop.f32.mrf.mxu0
  %v314 = vadd.f32 %v72, %v313
  %315 = vdwg.mxu0
  %316 = vmatprep.subr.bf16.mxu0 0
  %317 = vmatpush1.bf16.msra.mxu0 0
  %318 = vmatprep.subr.bf16.mxu0 0
  %319 = vmatpush1.bf16.msra.mxu0 0
  %320 = vmatprep.subr.bf16.mxu0 0
  %321 = vmatpush1.bf16.msra.mxu0 0
  %322 = vmatprep.subr.bf16.mxu0 0
  %323 = vmatpush1.bf16.msra.mxu0 0
  %324 = vmatprep.subr.bf16.mxu0 0
  %325 = vmatpush1.bf16.msra.mxu0 0
  %326 = vmatprep.subr.bf16.mxu0 0
  %327 = vmatpush1.bf16.msra.mxu0 0
  %328 = vmatprep.subr.bf16.mxu0 0
  %329 = vmatpush1.bf16.msra.mxu0 0
  %330 = vmatprep.subr.bf16.mxu0 %v146
  %331 = vmatpush1.bf16.msra.mxu0 %v145
  %332 = vmatprep.subr.bf16.mxu0 0
  %333 = vmatpush2.bf16.msra.mxu0 0
  %334 = vmatprep.subr.bf16.mxu0 0
  %335 = vmatpush2.bf16.msra.mxu0 0
  %336 = vmatprep.subr.bf16.mxu0 0
  %337 = vmatpush2.bf16.msra.mxu0 0
  %338 = vmatprep.subr.bf16.mxu0 0
  %339 = vmatpush2.bf16.msra.mxu0 0
  %340 = vmatprep.subr.bf16.mxu0 0
  %341 = vmatpush2.bf16.msra.mxu0 0
  %342 = vmatprep.subr.bf16.mxu0 0
  %343 = vmatpush2.bf16.msra.mxu0 0
  %344 = vmatprep.subr.bf16.mxu0 0
  %345 = vmatpush2.bf16.msra.mxu0 0
  %346 = vmatprep.subr.bf16.mxu0 0
  %347 = vmatpush2.bf16.msra.mxu0 0
  %348 = vmatprep.mubr.bf16.mxu0 0
  %349 = vmatmul.mubr.bf16.gmra.mxu0 %v159
  %v350 = vpop.f32.mrf.mxu0
  %v351 = vadd.f32 %v76, %v350
  %v352 = vpop.f32.mrf.mxu0
  %v353 = vadd.f32 %v80, %v352
  %v354 = vpop.f32.mrf.mxu0
  %v355 = vadd.f32 %v76, %v354
  %v356 = vpop.f32.mrf.mxu0
  %v357 = vadd.f32 %v80, %v356
  %358 = vmatprep.mubr.bf16.mxu0 0
  %359 = vmatmul.mubr.bf16.gmra.mxu0 %v162
  %v360 = vpop.f32.mrf.mxu0
  %v361 = vadd.f32 %v76, %v360
  %v362 = vpop.f32.mrf.mxu0
  %v363 = vadd.f32 %v80, %v362
  %v364 = vpop.f32.mrf.mxu0
  %v365 = vadd.f32 %v76, %v364
  %v366 = vpop.f32.mrf.mxu0
  %v367 = vadd.f32 %v80, %v366
  %368 = vmatprep.mubr.bf16.mxu0 0
  %369 = vmatmul.mubr.bf16.gmra.mxu0 %v165
  %v370 = vpop.f32.mrf.mxu0
  %v371 = vadd.f32 %v76, %v370
  %v372 = vpop.f32.mrf.mxu0
  %v373 = vadd.f32 %v80, %v372
  %v374 = vpop.f32.mrf.mxu0
  %v375 = vadd.f32 %v76, %v374
  %v376 = vpop.f32.mrf.mxu0
  %v377 = vadd.f32 %v80, %v376
  %378 = vmatprep.mubr.bf16.mxu0 0
  %379 = vmatmul.mubr.bf16.gmra.mxu0 %v168
  %v380 = vpop.f32.mrf.mxu0
  %v381 = vadd.f32 %v76, %v380
  %v382 = vpop.f32.mrf.mxu0
  %v383 = vadd.f32 %v80, %v382
  %v384 = vpop.f32.mrf.mxu0
  %v385 = vadd.f32 %v76, %v384
  %v386 = vpop.f32.mrf.mxu0
  %v387 = vadd.f32 %v80, %v386
  %388 = vdwg.mxu0
  %389 = vmatprep.subr.bf16.mxu0 0
  %390 = vmatpush1.bf16.msra.mxu0 0
  %391 = vmatprep.subr.bf16.mxu0 0
  %392 = vmatpush1.bf16.msra.mxu0 0
  %393 = vmatprep.subr.bf16.mxu0 0
  %394 = vmatpush1.bf16.msra.mxu0 0
  %395 = vmatprep.subr.bf16.mxu0 0
  %396 = vmatpush1.bf16.msra.mxu0 0
  %397 = vmatprep.subr.bf16.mxu0 0
  %398 = vmatpush1.bf16.msra.mxu0 0
  %399 = vmatprep.subr.bf16.mxu0 0
  %400 = vmatpush1.bf16.msra.mxu0 0
  %401 = vmatprep.subr.bf16.mxu0 0
  %402 = vmatpush1.bf16.msra.mxu0 0
  %403 = vmatprep.subr.bf16.mxu0 %v148
  %404 = vmatpush1.bf16.msra.mxu0 %v147
  %405 = vmatprep.subr.bf16.mxu0 0
  %406 = vmatpush2.bf16.msra.mxu0 0
  %407 = vmatprep.subr.bf16.mxu0 0
  %408 = vmatpush2.bf16.msra.mxu0 0
  %409 = vmatprep.subr.bf16.mxu0 0
  %410 = vmatpush2.bf16.msra.mxu0 0
  %411 = vmatprep.subr.bf16.mxu0 0
  %412 = vmatpush2.bf16.msra.mxu0 0
  %413 = vmatprep.subr.bf16.mxu0 0
  %414 = vmatpush2.bf16.msra.mxu0 0
  %415 = vmatprep.subr.bf16.mxu0 0
  %416 = vmatpush2.bf16.msra.mxu0 0
  %417 = vmatprep.subr.bf16.mxu0 0
  %418 = vmatpush2.bf16.msra.mxu0 0
  %419 = vmatprep.subr.bf16.mxu0 0
  %420 = vmatpush2.bf16.msra.mxu0 0
  %421 = vmatprep.mubr.bf16.mxu0 0
  %422 = vmatmul.mubr.bf16.gmra.mxu0 %v159
  %v423 = vpop.f32.mrf.mxu0
  %v424 = vadd.f32 %v84, %v423
  %v425 = vpop.f32.mrf.mxu0
  %v426 = vadd.f32 %v88, %v425
  %v427 = vpop.f32.mrf.mxu0
  %v428 = vadd.f32 %v84, %v427
  %v429 = vpop.f32.mrf.mxu0
  %v430 = vadd.f32 %v88, %v429
  %431 = vmatprep.mubr.bf16.mxu0 0
  %432 = vmatmul.mubr.bf16.gmra.mxu0 %v162
  %v433 = vpop.f32.mrf.mxu0
  %v434 = vadd.f32 %v84, %v433
  %v435 = vpop.f32.mrf.mxu0
  %v436 = vadd.f32 %v88, %v435
  %v437 = vpop.f32.mrf.mxu0
  %v438 = vadd.f32 %v84, %v437
  %v439 = vpop.f32.mrf.mxu0
  %v440 = vadd.f32 %v88, %v439
  %441 = vmatprep.mubr.bf16.mxu0 0
  %442 = vmatmul.mubr.bf16.gmra.mxu0 %v165
  %v443 = vpop.f32.mrf.mxu0
  %v444 = vadd.f32 %v84, %v443
  %v445 = vpop.f32.mrf.mxu0
  %v446 = vadd.f32 %v88, %v445
  %v447 = vpop.f32.mrf.mxu0
  %v448 = vadd.f32 %v84, %v447
  %v449 = vpop.f32.mrf.mxu0
  %v450 = vadd.f32 %v88, %v449
  %451 = vmatprep.mubr.bf16.mxu0 0
  %452 = vmatmul.mubr.bf16.gmra.mxu0 %v168
  %v453 = vpop.f32.mrf.mxu0
  %v454 = vadd.f32 %v84, %v453
  %v455 = vpop.f32.mrf.mxu0
  %v456 = vadd.f32 %v88, %v455
  %v457 = vpop.f32.mrf.mxu0
  %v458 = vadd.f32 %v84, %v457
  %v459 = vpop.f32.mrf.mxu0
  %v460 = vadd.f32 %v88, %v459
  %461 = vdwg.mxu0
  %462 = vst [vmem:[#allocation2] sm:$0xff] %v205
  %463 = vst [vmem:[#allocation2 + $0x8] sm:$0xff] %v207
  %464 = vst [vmem:[#allocation2 + $0x10] sm:$0xff] %v278
  %465 = vst [vmem:[#allocation2 + $0x18] sm:$0xff] %v280
  %466 = vst [vmem:[#allocation2 + $0x20] sm:$0xff] %v351
  %467 = vst [vmem:[#allocation2 + $0x28] sm:$0xff] %v353
  %468 = vst [vmem:[#allocation2 + $0x30] sm:$0xff] %v424
  %469 = vst [vmem:[#allocation2 + $0x38] sm:$0xff] %v426
  %470 = vst [vmem:[#allocation2 + $0x40] sm:$0xff] %v209
  %471 = vst [vmem:[#allocation2 + $0x48] sm:$0xff] %v211
  %472 = vst [vmem:[#allocation2 + $0x50] sm:$0xff] %v282
  %473 = vst [vmem:[#allocation2 + $0x58] sm:$0xff] %v284
  %474 = vst [vmem:[#allocation2 + $0x60] sm:$0xff] %v355
  %475 = vst [vmem:[#allocation2 + $0x68] sm:$0xff] %v357
  %476 = vst [vmem:[#allocation2 + $0x70] sm:$0xff] %v428
  %477 = vst [vmem:[#allocation2 + $0x78] sm:$0xff] %v430
  %478 = vst [vmem:[#allocation2 + $0x80] sm:$0xff] %v215
  %479 = vst [vmem:[#allocation2 + $0x88] sm:$0xff] %v217
  %480 = vst [vmem:[#allocation2 + $0x90] sm:$0xff] %v288
  %481 = vst [vmem:[#allocation2 + $0x98] sm:$0xff] %v290
  %482 = vst [vmem:[#allocation2 + $0xa0] sm:$0xff] %v361
  %483 = vst [vmem:[#allocation2 + $0xa8] sm:$0xff] %v363
  %484 = vst [vmem:[#allocation2 + $0xb0] sm:$0xff] %v434
  %485 = vst [vmem:[#allocation2 + $0xb8] sm:$0xff] %v436
  %486 = vst [vmem:[#allocation2 + $0xc0] sm:$0xff] %v219
  %487 = vst [vmem:[#allocation2 + $0xc8] sm:$0xff] %v221
  %488 = vst [vmem:[#allocation2 + $0xd0] sm:$0xff] %v292
  %489 = vst [vmem:[#allocation2 + $0xd8] sm:$0xff] %v294
  %490 = vst [vmem:[#allocation2 + $0xe0] sm:$0xff] %v365
  %491 = vst [vmem:[#allocation2 + $0xe8] sm:$0xff] %v367
  %492 = vst [vmem:[#allocation2 + $0xf0] sm:$0xff] %v438
  %493 = vst [vmem:[#allocation2 + $0xf8] sm:$0xff] %v440
  %494 = vst [vmem:[#allocation2 + $0x100] sm:$0xff] %v225
  %495 = vst [vmem:[#allocation2 + $0x108] sm:$0xff] %v227
  %496 = vst [vmem:[#allocation2 + $0x110] sm:$0xff] %v298
  %497 = vst [vmem:[#allocation2 + $0x118] sm:$0xff] %v300
  %498 = vst [vmem:[#allocation2 + $0x120] sm:$0xff] %v371
  %499 = vst [vmem:[#allocation2 + $0x128] sm:$0xff] %v373
  %500 = vst [vmem:[#allocation2 + $0x130] sm:$0xff] %v444
  %501 = vst [vmem:[#allocation2 + $0x138] sm:$0xff] %v446
  %502 = vst [vmem:[#allocation2 + $0x140] sm:$0xff] %v229
  %503 = vst [vmem:[#allocation2 + $0x148] sm:$0xff] %v231
  %504 = vst [vmem:[#allocation2 + $0x150] sm:$0xff] %v302
  %505 = vst [vmem:[#allocation2 + $0x158] sm:$0xff] %v304
  %506 = vst [vmem:[#allocation2 + $0x160] sm:$0xff] %v375
  %507 = vst [vmem:[#allocation2 + $0x168] sm:$0xff] %v377
  %508 = vst [vmem:[#allocation2 + $0x170] sm:$0xff] %v448
  %509 = vst [vmem:[#allocation2 + $0x178] sm:$0xff] %v450
  %510 = vst [vmem:[#allocation2 + $0x180] sm:$0xff] %v235
  %511 = vst [vmem:[#allocation2 + $0x188] sm:$0xff] %v237
  %512 = vst [vmem:[#allocation2 + $0x190] sm:$0xff] %v308
  %513 = vst [vmem:[#allocation2 + $0x198] sm:$0xff] %v310
  %514 = vst [vmem:[#allocation2 + $0x1a0] sm:$0xff] %v381
  %515 = vst [vmem:[#allocation2 + $0x1a8] sm:$0xff] %v383
  %516 = vst [vmem:[#allocation2 + $0x1b0] sm:$0xff] %v454
  %517 = vst [vmem:[#allocation2 + $0x1b8] sm:$0xff] %v456
  %518 = vst [vmem:[#allocation2 + $0x1c0] sm:$0xff] %v239
  %519 = vst [vmem:[#allocation2 + $0x1c8] sm:$0xff] %v241
  %520 = vst [vmem:[#allocation2 + $0x1d0] sm:$0xff] %v312
  %521 = vst [vmem:[#allocation2 + $0x1d8] sm:$0xff] %v314
  %522 = vst [vmem:[#allocation2 + $0x1e0] sm:$0xff] %v385
  %523 = vst [vmem:[#allocation2 + $0x1e8] sm:$0xff] %v387
  %524 = vst [vmem:[#allocation2 + $0x1f0] sm:$0xff] %v458
  %525 = vst [vmem:[#allocation2 + $0x1f8] sm:$0xff] %v460
  %v526 = vld [vmem:[%s4] sm:$0xff]
  %v527 = vld [vmem:[%s4 + $0x8] sm:$0xff]
  %v528 = vld [vmem:[%s4 + $0x10] sm:$0xff]
  %v529 = vld [vmem:[%s4 + $0x18] sm:$0xff]
  %v530 = vld [vmem:[%s4 + $0x20] sm:$0xff]
  %v531 = vld [vmem:[%s4 + $0x28] sm:$0xff]
  %v532 = vld [vmem:[%s4 + $0x30] sm:$0xff]
  %v533 = vld [vmem:[%s4 + $0x38] sm:$0xff]
  %v534 = vld [vmem:[%s4 + $0x40] sm:$0xff]
  %v535 = vld [vmem:[%s4 + $0x48] sm:$0xff]
  %v536 = vld [vmem:[%s4 + $0x50] sm:$0xff]
  %v537 = vld [vmem:[%s4 + $0x58] sm:$0xff]
  %v538 = vld [vmem:[%s4 + $0x60] sm:$0xff]
  %v539 = vld [vmem:[%s4 + $0x68] sm:$0xff]
  %v540 = vld [vmem:[%s4 + $0x70] sm:$0xff]
  %v541 = vld [vmem:[%s4 + $0x78] sm:$0xff]
  %v542 = vld [vmem:[%s4 + $0x80] sm:$0xff]
  %v543 = vld [vmem:[%s4 + $0x88] sm:$0xff]
  %v544 = vld [vmem:[%s4 + $0x90] sm:$0xff]
  %v545 = vld [vmem:[%s4 + $0x98] sm:$0xff]
  %v546 = vld [vmem:[%s4 + $0xa0] sm:$0xff]
  %v547 = vld [vmem:[%s4 + $0xa8] sm:$0xff]
  %v548 = vld [vmem:[%s4 + $0xb0] sm:$0xff]
  %v549 = vld [vmem:[%s4 + $0xb8] sm:$0xff]
  %v550 = vld [vmem:[%s4 + $0xc0] sm:$0xff]
  %v551 = vld [vmem:[%s4 + $0xc8] sm:$0xff]
  %v552 = vld [vmem:[%s4 + $0xd0] sm:$0xff]
  %v553 = vld [vmem:[%s4 + $0xd8] sm:$0xff]
  %v554 = vld [vmem:[%s4 + $0xe0] sm:$0xff]
  %v555 = vld [vmem:[%s4 + $0xe8] sm:$0xff]
  %v556 = vld [vmem:[%s4 + $0xf0] sm:$0xff]
  %v557 = vld [vmem:[%s4 + $0xf8] sm:$0xff]
  %v558 = vld [vmem:[%s4 + $0x100] sm:$0xff]
  %v559 = vld [vmem:[%s4 + $0x108] sm:$0xff]
  %v560 = vld [vmem:[%s4 + $0x110] sm:$0xff]
  %v561 = vld [vmem:[%s4 + $0x118] sm:$0xff]
  %v562 = vld [vmem:[%s4 + $0x120] sm:$0xff]
  %v563 = vld [vmem:[%s4 + $0x128] sm:$0xff]
  %v564 = vld [vmem:[%s4 + $0x130] sm:$0xff]
  %v565 = vld [vmem:[%s4 + $0x138] sm:$0xff]
  %v566 = vld [vmem:[%s4 + $0x140] sm:$0xff]
  %v567 = vld [vmem:[%s4 + $0x148] sm:$0xff]
  %v568 = vld [vmem:[%s4 + $0x150] sm:$0xff]
  %v569 = vld [vmem:[%s4 + $0x158] sm:$0xff]
  %v570 = vld [vmem:[%s4 + $0x160] sm:$0xff]
  %v571 = vld [vmem:[%s4 + $0x168] sm:$0xff]
  %v572 = vld [vmem:[%s4 + $0x170] sm:$0xff]
  %v573 = vld [vmem:[%s4 + $0x178] sm:$0xff]
  %v574 = vld [vmem:[%s4 + $0x180] sm:$0xff]
  %v575 = vld [vmem:[%s4 + $0x188] sm:$0xff]
  %v576 = vld [vmem:[%s4 + $0x190] sm:$0xff]
  %v577 = vld [vmem:[%s4 + $0x198] sm:$0xff]
  %v578 = vld [vmem:[%s4 + $0x1a0] sm:$0xff]
  %v579 = vld [vmem:[%s4 + $0x1a8] sm:$0xff]
  %v580 = vld [vmem:[%s4 + $0x1b0] sm:$0xff]
  %v581 = vld [vmem:[%s4 + $0x1b8] sm:$0xff]
  %v582 = vld [vmem:[%s4 + $0x1c0] sm:$0xff]
  %v583 = vld [vmem:[%s4 + $0x1c8] sm:$0xff]
  %v584 = vld [vmem:[%s4 + $0x1d0] sm:$0xff]
  %v585 = vld [vmem:[%s4 + $0x1d8] sm:$0xff]
  %v586 = vld [vmem:[%s4 + $0x1e0] sm:$0xff]
  %v587 = vld [vmem:[%s4 + $0x1e8] sm:$0xff]
  %v588 = vld [vmem:[%s4 + $0x1f0] sm:$0xff]
  %v589 = vld [vmem:[%s4 + $0x1f8] sm:$0xff]
  %v590 = vld [vmem:[%s4 + $0x200] sm:$0xff]
  %v591 = vld [vmem:[%s4 + $0x208] sm:$0xff]
  %v592 = vld [vmem:[%s4 + $0x210] sm:$0xff]
  %v593 = vld [vmem:[%s4 + $0x218] sm:$0xff]
  %v594 = vld [vmem:[%s4 + $0x220] sm:$0xff]
  %v595 = vld [vmem:[%s4 + $0x228] sm:$0xff]
  %v596 = vld [vmem:[%s4 + $0x230] sm:$0xff]
  %v597 = vld [vmem:[%s4 + $0x238] sm:$0xff]
  %v598 = vld [vmem:[%s4 + $0x240] sm:$0xff]
  %v599 = vld [vmem:[%s4 + $0x248] sm:$0xff]
  %v600 = vld [vmem:[%s4 + $0x250] sm:$0xff]
  %v601 = vld [vmem:[%s4 + $0x258] sm:$0xff]
  %v602 = vld [vmem:[%s4 + $0x260] sm:$0xff]
  %v603 = vld [vmem:[%s4 + $0x268] sm:$0xff]
  %v604 = vld [vmem:[%s4 + $0x270] sm:$0xff]
  %v605 = vld [vmem:[%s4 + $0x278] sm:$0xff]
  %v606 = vld [vmem:[%s4 + $0x280] sm:$0xff]
  %v607 = vld [vmem:[%s4 + $0x288] sm:$0xff]
  %v608 = vld [vmem:[%s4 + $0x290] sm:$0xff]
  %v609 = vld [vmem:[%s4 + $0x298] sm:$0xff]
  %v610 = vld [vmem:[%s4 + $0x2a0] sm:$0xff]
  %v611 = vld [vmem:[%s4 + $0x2a8] sm:$0xff]
  %v612 = vld [vmem:[%s4 + $0x2b0] sm:$0xff]
  %v613 = vld [vmem:[%s4 + $0x2b8] sm:$0xff]
  %v614 = vld [vmem:[%s4 + $0x2c0] sm:$0xff]
  %v615 = vld [vmem:[%s4 + $0x2c8] sm:$0xff]
  %v616 = vld [vmem:[%s4 + $0x2d0] sm:$0xff]
  %v617 = vld [vmem:[%s4 + $0x2d8] sm:$0xff]
  %v618 = vld [vmem:[%s4 + $0x2e0] sm:$0xff]
  %v619 = vld [vmem:[%s4 + $0x2e8] sm:$0xff]
  %v620 = vld [vmem:[%s4 + $0x2f0] sm:$0xff]
  %v621 = vld [vmem:[%s4 + $0x2f8] sm:$0xff]
  %v622 = vld [vmem:[%s4 + $0x300] sm:$0xff]
  %v623 = vld [vmem:[%s4 + $0x308] sm:$0xff]
  %v624 = vld [vmem:[%s4 + $0x310] sm:$0xff]
  %v625 = vld [vmem:[%s4 + $0x318] sm:$0xff]
  %v626 = vld [vmem:[%s4 + $0x320] sm:$0xff]
  %v627 = vld [vmem:[%s4 + $0x328] sm:$0xff]
  %v628 = vld [vmem:[%s4 + $0x330] sm:$0xff]
  %v629 = vld [vmem:[%s4 + $0x338] sm:$0xff]
  %v630 = vld [vmem:[%s4 + $0x340] sm:$0xff]
  %v631 = vld [vmem:[%s4 + $0x348] sm:$0xff]
  %v632 = vld [vmem:[%s4 + $0x350] sm:$0xff]
  %v633 = vld [vmem:[%s4 + $0x358] sm:$0xff]
  %v634 = vld [vmem:[%s4 + $0x360] sm:$0xff]
  %v635 = vld [vmem:[%s4 + $0x368] sm:$0xff]
  %v636 = vld [vmem:[%s4 + $0x370] sm:$0xff]
  %v637 = vld [vmem:[%s4 + $0x378] sm:$0xff]
  %v638 = vld [vmem:[%s4 + $0x380] sm:$0xff]
  %v639 = vld [vmem:[%s4 + $0x388] sm:$0xff]
  %v640 = vld [vmem:[%s4 + $0x390] sm:$0xff]
  %v641 = vld [vmem:[%s4 + $0x398] sm:$0xff]
  %v642 = vld [vmem:[%s4 + $0x3a0] sm:$0xff]
  %v643 = vld [vmem:[%s4 + $0x3a8] sm:$0xff]
  %v644 = vld [vmem:[%s4 + $0x3b0] sm:$0xff]
  %v645 = vld [vmem:[%s4 + $0x3b8] sm:$0xff]
  %v646 = vld [vmem:[%s4 + $0x3c0] sm:$0xff]
  %v647 = vld [vmem:[%s4 + $0x3c8] sm:$0xff]
  %v648 = vld [vmem:[%s4 + $0x3d0] sm:$0xff]
  %v649 = vld [vmem:[%s4 + $0x3d8] sm:$0xff]
  %v650 = vld [vmem:[%s4 + $0x3e0] sm:$0xff]
  %v651 = vld [vmem:[%s4 + $0x3e8] sm:$0xff]
  %v652 = vld [vmem:[%s4 + $0x3f0] sm:$0xff]
  %v653 = vld [vmem:[%s4 + $0x3f8] sm:$0xff]
  %v654 = vld [vmem:[#allocation3] sm:$0xff]
  %v655 = vld [vmem:[#allocation3 + $0x8] sm:$0xff]
  %v656 = vld [vmem:[#allocation4] sm:$0xff]
  %v657 = vld [vmem:[#allocation4 + $0x8] sm:$0xff]
  %s658 = smul.u32 0, 8
  %s659 = smul.addr %s658, 8
  %s660 = scalar_lea.vmem [#allocation2], %s659
  %v661 = vld [vmem:[%s660] sm:$0xff]
  %v662 = vld [vmem:[%s660 + $0x8] sm:$0xff]
  %v663 = vld [vmem:[%s660 + $0x10] sm:$0xff]
  %v664 = vld [vmem:[%s660 + $0x18] sm:$0xff]
  %v665 = vld [vmem:[%s660 + $0x20] sm:$0xff]
  %v666 = vld [vmem:[%s660 + $0x28] sm:$0xff]
  %v667 = vld [vmem:[%s660 + $0x30] sm:$0xff]
  %v668 = vld [vmem:[%s660 + $0x38] sm:$0xff]
  %v669 = vpack.c.bf16 %v654, %v654
  %v670 = vpack.c.bf16 %v655, %v655
  %v799 = vunpack.c.l.b16 %v526
  %v800 = vunpack.c.h.b16 %v526
  %v801 = vunpack.c.l.b16 %v527
  %v802 = vunpack.c.h.b16 %v527
  %v803 = vunpack.c.l.b16 %v528
  %v804 = vunpack.c.h.b16 %v528
  %v805 = vunpack.c.l.b16 %v529
  %v806 = vunpack.c.h.b16 %v529
  %v807 = vunpack.c.l.b16 %v530
  %v808 = vunpack.c.h.b16 %v530
  %v809 = vunpack.c.l.b16 %v531
  %v810 = vunpack.c.h.b16 %v531
  %v811 = vunpack.c.l.b16 %v532
  %v812 = vunpack.c.h.b16 %v532
  %v813 = vunpack.c.l.b16 %v533
  %v814 = vunpack.c.h.b16 %v533
  %v815 = vunpack.c.l.b16 %v534
  %v816 = vunpack.c.h.b16 %v534
  %v817 = vunpack.c.l.b16 %v535
  %v818 = vunpack.c.h.b16 %v535
  %v819 = vunpack.c.l.b16 %v536
  %v820 = vunpack.c.h.b16 %v536
  %v821 = vunpack.c.l.b16 %v537
  %v822 = vunpack.c.h.b16 %v537
  %v823 = vunpack.c.l.b16 %v538
  %v824 = vunpack.c.h.b16 %v538
  %v825 = vunpack.c.l.b16 %v539
  %v826 = vunpack.c.h.b16 %v539
  %v827 = vunpack.c.l.b16 %v540
  %v828 = vunpack.c.h.b16 %v540
  %v829 = vunpack.c.l.b16 %v541
  %v830 = vunpack.c.h.b16 %v541
  %v831 = vunpack.c.l.b16 %v542
  %v832 = vunpack.c.h.b16 %v542
  %v833 = vunpack.c.l.b16 %v543
  %v834 = vunpack.c.h.b16 %v543
  %v835 = vunpack.c.l.b16 %v544
  %v836 = vunpack.c.h.b16 %v544
  %v837 = vunpack.c.l.b16 %v545
  %v838 = vunpack.c.h.b16 %v545
  %v839 = vunpack.c.l.b16 %v546
  %v840 = vunpack.c.h.b16 %v546
  %v841 = vunpack.c.l.b16 %v547
  %v842 = vunpack.c.h.b16 %v547
  %v843 = vunpack.c.l.b16 %v548
  %v844 = vunpack.c.h.b16 %v548
  %v845 = vunpack.c.l.b16 %v549
  %v846 = vunpack.c.h.b16 %v549
  %v847 = vunpack.c.l.b16 %v550
  %v848 = vunpack.c.h.b16 %v550
  %v849 = vunpack.c.l.b16 %v551
  %v850 = vunpack.c.h.b16 %v551
  %v851 = vunpack.c.l.b16 %v552
  %v852 = vunpack.c.h.b16 %v552
  %v853 = vunpack.c.l.b16 %v553
  %v854 = vunpack.c.h.b16 %v553
  %v855 = vunpack.c.l.b16 %v554
  %v856 = vunpack.c.h.b16 %v554
  %v857 = vunpack.c.l.b16 %v555
  %v858 = vunpack.c.h.b16 %v555
  %v859 = vunpack.c.l.b16 %v556
  %v860 = vunpack.c.h.b16 %v556
  %v861 = vunpack.c.l.b16 %v557
  %v862 = vunpack.c.h.b16 %v557
  %v863 = vunpack.c.l.b16 %v558
  %v864 = vunpack.c.h.b16 %v558
  %v865 = vunpack.c.l.b16 %v559
  %v866 = vunpack.c.h.b16 %v559
  %v867 = vunpack.c.l.b16 %v560
  %v868 = vunpack.c.h.b16 %v560
  %v869 = vunpack.c.l.b16 %v561
  %v870 = vunpack.c.h.b16 %v561
  %v871 = vunpack.c.l.b16 %v562
  %v872 = vunpack.c.h.b16 %v562
  %v873 = vunpack.c.l.b16 %v563
  %v874 = vunpack.c.h.b16 %v563
  %v875 = vunpack.c.l.b16 %v564
  %v876 = vunpack.c.h.b16 %v564
  %v877 = vunpack.c.l.b16 %v565
  %v878 = vunpack.c.h.b16 %v565
  %v879 = vunpack.c.l.b16 %v566
  %v880 = vunpack.c.h.b16 %v566
  %v881 = vunpack.c.l.b16 %v567
  %v882 = vunpack.c.h.b16 %v567
  %v883 = vunpack.c.l.b16 %v568
  %v884 = vunpack.c.h.b16 %v568
  %v885 = vunpack.c.l.b16 %v569
  %v886 = vunpack.c.h.b16 %v569
  %v887 = vunpack.c.l.b16 %v570
  %v888 = vunpack.c.h.b16 %v570
  %v889 = vunpack.c.l.b16 %v571
  %v890 = vunpack.c.h.b16 %v571
  %v891 = vunpack.c.l.b16 %v572
  %v892 = vunpack.c.h.b16 %v572
  %v893 = vunpack.c.l.b16 %v573
  %v894 = vunpack.c.h.b16 %v573
  %v895 = vunpack.c.l.b16 %v574
  %v896 = vunpack.c.h.b16 %v574
  %v897 = vunpack.c.l.b16 %v575
  %v898 = vunpack.c.h.b16 %v575
  %v899 = vunpack.c.l.b16 %v576
  %v900 = vunpack.c.h.b16 %v576
  %v901 = vunpack.c.l.b16 %v577
  %v902 = vunpack.c.h.b16 %v577
  %v903 = vunpack.c.l.b16 %v578
  %v904 = vunpack.c.h.b16 %v578
  %v905 = vunpack.c.l.b16 %v579
  %v906 = vunpack.c.h.b16 %v579
  %v907 = vunpack.c.l.b16 %v580
  %v908 = vunpack.c.h.b16 %v580
  %v909 = vunpack.c.l.b16 %v581
  %v910 = vunpack.c.h.b16 %v581
  %v911 = vunpack.c.l.b16 %v582
  %v912 = vunpack.c.h.b16 %v582
  %v913 = vunpack.c.l.b16 %v583
  %v914 = vunpack.c.h.b16 %v583
  %v915 = vunpack.c.l.b16 %v584
  %v916 = vunpack.c.h.b16 %v584
  %v917 = vunpack.c.l.b16 %v585
  %v918 = vunpack.c.h.b16 %v585
  %v919 = vunpack.c.l.b16 %v586
  %v920 = vunpack.c.h.b16 %v586
  %v921 = vunpack.c.l.b16 %v587
  %v922 = vunpack.c.h.b16 %v587
  %v923 = vunpack.c.l.b16 %v588
  %v924 = vunpack.c.h.b16 %v588
  %v925 = vunpack.c.l.b16 %v589
  %v926 = vunpack.c.h.b16 %v589
  %v927 = vunpack.c.l.b16 %v590
  %v928 = vunpack.c.h.b16 %v590
  %v929 = vunpack.c.l.b16 %v591
  %v930 = vunpack.c.h.b16 %v591
  %v931 = vunpack.c.l.b16 %v592
  %v932 = vunpack.c.h.b16 %v592
  %v933 = vunpack.c.l.b16 %v593
  %v934 = vunpack.c.h.b16 %v593
  %v935 = vunpack.c.l.b16 %v594
  %v936 = vunpack.c.h.b16 %v594
  %v937 = vunpack.c.l.b16 %v595
  %v938 = vunpack.c.h.b16 %v595
  %v939 = vunpack.c.l.b16 %v596
  %v940 = vunpack.c.h.b16 %v596
  %v941 = vunpack.c.l.b16 %v597
  %v942 = vunpack.c.h.b16 %v597
  %v943 = vunpack.c.l.b16 %v598
  %v944 = vunpack.c.h.b16 %v598
  %v945 = vunpack.c.l.b16 %v599
  %v946 = vunpack.c.h.b16 %v599
  %v947 = vunpack.c.l.b16 %v600
  %v948 = vunpack.c.h.b16 %v600
  %v949 = vunpack.c.l.b16 %v601
  %v950 = vunpack.c.h.b16 %v601
  %v951 = vunpack.c.l.b16 %v602
  %v952 = vunpack.c.h.b16 %v602
  %v953 = vunpack.c.l.b16 %v603
  %v954 = vunpack.c.h.b16 %v603
  %v955 = vunpack.c.l.b16 %v604
  %v956 = vunpack.c.h.b16 %v604
  %v957 = vunpack.c.l.b16 %v605
  %v958 = vunpack.c.h.b16 %v605
  %v959 = vunpack.c.l.b16 %v606
  %v960 = vunpack.c.h.b16 %v606
  %v961 = vunpack.c.l.b16 %v607
  %v962 = vunpack.c.h.b16 %v607
  %v963 = vunpack.c.l.b16 %v608
  %v964 = vunpack.c.h.b16 %v608
  %v965 = vunpack.c.l.b16 %v609
  %v966 = vunpack.c.h.b16 %v609
  %v967 = vunpack.c.l.b16 %v610
  %v968 = vunpack.c.h.b16 %v610
  %v969 = vunpack.c.l.b16 %v611
  %v970 = vunpack.c.h.b16 %v611
  %v971 = vunpack.c.l.b16 %v612
  %v972 = vunpack.c.h.b16 %v612
  %v973 = vunpack.c.l.b16 %v613
  %v974 = vunpack.c.h.b16 %v613
  %v975 = vunpack.c.l.b16 %v614
  %v976 = vunpack.c.h.b16 %v614
  %v977 = vunpack.c.l.b16 %v615
  %v978 = vunpack.c.h.b16 %v615
  %v979 = vunpack.c.l.b16 %v616
  %v980 = vunpack.c.h.b16 %v616
  %v981 = vunpack.c.l.b16 %v617
  %v982 = vunpack.c.h.b16 %v617
  %v983 = vunpack.c.l.b16 %v618
  %v984 = vunpack.c.h.b16 %v618
  %v985 = vunpack.c.l.b16 %v619
  %v986 = vunpack.c.h.b16 %v619
  %v987 = vunpack.c.l.b16 %v620
  %v988 = vunpack.c.h.b16 %v620
  %v989 = vunpack.c.l.b16 %v621
  %v990 = vunpack.c.h.b16 %v621
  %v991 = vunpack.c.l.b16 %v622
  %v992 = vunpack.c.h.b16 %v622
  %v993 = vunpack.c.l.b16 %v623
  %v994 = vunpack.c.h.b16 %v623
  %v995 = vunpack.c.l.b16 %v624
  %v996 = vunpack.c.h.b16 %v624
  %v997 = vunpack.c.l.b16 %v625
  %v998 = vunpack.c.h.b16 %v625
  %v999 = vunpack.c.l.b16 %v626
  %v1000 = vunpack.c.h.b16 %v626
  %v1001 = vunpack.c.l.b16 %v627
  %v1002 = vunpack.c.h.b16 %v627
  %v1003 = vunpack.c.l.b16 %v628
  %v1004 = vunpack.c.h.b16 %v628
  %v1005 = vunpack.c.l.b16 %v629
  %v1006 = vunpack.c.h.b16 %v629
  %v1007 = vunpack.c.l.b16 %v630
  %v1008 = vunpack.c.h.b16 %v630
  %v1009 = vunpack.c.l.b16 %v631
  %v1010 = vunpack.c.h.b16 %v631
  %v1011 = vunpack.c.l.b16 %v632
  %v1012 = vunpack.c.h.b16 %v632
  %v1013 = vunpack.c.l.b16 %v633
  %v1014 = vunpack.c.h.b16 %v633
  %v1015 = vunpack.c.l.b16 %v634
  %v1016 = vunpack.c.h.b16 %v634
  %v1017 = vunpack.c.l.b16 %v635
  %v1018 = vunpack.c.h.b16 %v635
  %v1019 = vunpack.c.l.b16 %v636
  %v1020 = vunpack.c.h.b16 %v636
  %v1021 = vunpack.c.l.b16 %v637
  %v1022 = vunpack.c.h.b16 %v637
  %v1023 = vunpack.c.l.b16 %v638
  %v1024 = vunpack.c.h.b16 %v638
  %v1025 = vunpack.c.l.b16 %v639
  %v1026 = vunpack.c.h.b16 %v639
  %v1027 = vunpack.c.l.b16 %v640
  %v1028 = vunpack.c.h.b16 %v640
  %v1029 = vunpack.c.l.b16 %v641
  %v1030 = vunpack.c.h.b16 %v641
  %v1031 = vunpack.c.l.b16 %v642
  %v1032 = vunpack.c.h.b16 %v642
  %v1033 = vunpack.c.l.b16 %v643
  %v1034 = vunpack.c.h.b16 %v643
  %v1035 = vunpack.c.l.b16 %v644
  %v1036 = vunpack.c.h.b16 %v644
  %v1037 = vunpack.c.l.b16 %v645
  %v1038 = vunpack.c.h.b16 %v645
  %v1039 = vunpack.c.l.b16 %v646
  %v1040 = vunpack.c.h.b16 %v646
  %v1041 = vunpack.c.l.b16 %v647
  %v1042 = vunpack.c.h.b16 %v647
  %v1043 = vunpack.c.l.b16 %v648
  %v1044 = vunpack.c.h.b16 %v648
  %v1045 = vunpack.c.l.b16 %v649
  %v1046 = vunpack.c.h.b16 %v649
  %v1047 = vunpack.c.l.b16 %v650
  %v1048 = vunpack.c.h.b16 %v650
  %v1049 = vunpack.c.l.b16 %v651
  %v1050 = vunpack.c.h.b16 %v651
  %v1051 = vunpack.c.l.b16 %v652
  %v1052 = vunpack.c.h.b16 %v652
  %v1053 = vunpack.c.l.b16 %v653
  %v1054 = vunpack.c.h.b16 %v653
  %v1055 = vpack.c.b16 %v807, %v799
  %v1056 = vpack.c.b16 %v808, %v800
  %v1057 = vpack.c.b16 %v809, %v801
  %v1058 = vpack.c.b16 %v810, %v802
  %v1059 = vpack.c.b16 %v811, %v803
  %v1060 = vpack.c.b16 %v812, %v804
  %v1061 = vpack.c.b16 %v813, %v805
  %v1062 = vpack.c.b16 %v814, %v806
  %v1063 = vpack.c.b16 %v823, %v815
  %v1064 = vpack.c.b16 %v824, %v816
  %v1065 = vpack.c.b16 %v825, %v817
  %v1066 = vpack.c.b16 %v826, %v818
  %v1067 = vpack.c.b16 %v827, %v819
  %v1068 = vpack.c.b16 %v828, %v820
  %v1069 = vpack.c.b16 %v829, %v821
  %v1070 = vpack.c.b16 %v830, %v822
  %v1071 = vpack.c.b16 %v839, %v831
  %v1072 = vpack.c.b16 %v840, %v832
  %v1073 = vpack.c.b16 %v841, %v833
  %v1074 = vpack.c.b16 %v842, %v834
  %v1075 = vpack.c.b16 %v843, %v835
  %v1076 = vpack.c.b16 %v844, %v836
  %v1077 = vpack.c.b16 %v845, %v837
  %v1078 = vpack.c.b16 %v846, %v838
  %v1079 = vpack.c.b16 %v855, %v847
  %v1080 = vpack.c.b16 %v856, %v848
  %v1081 = vpack.c.b16 %v857, %v849
  %v1082 = vpack.c.b16 %v858, %v850
  %v1083 = vpack.c.b16 %v859, %v851
  %v1084 = vpack.c.b16 %v860, %v852
  %v1085 = vpack.c.b16 %v861, %v853
  %v1086 = vpack.c.b16 %v862, %v854
  %v1087 = vpack.c.b16 %v871, %v863
  %v1088 = vpack.c.b16 %v872, %v864
  %v1089 = vpack.c.b16 %v873, %v865
  %v1090 = vpack.c.b16 %v874, %v866
  %v1091 = vpack.c.b16 %v875, %v867
  %v1092 = vpack.c.b16 %v876, %v868
  %v1093 = vpack.c.b16 %v877, %v869
  %v1094 = vpack.c.b16 %v878, %v870
  %v1095 = vpack.c.b16 %v887, %v879
  %v1096 = vpack.c.b16 %v888, %v880
  %v1097 = vpack.c.b16 %v889, %v881
  %v1098 = vpack.c.b16 %v890, %v882
  %v1099 = vpack.c.b16 %v891, %v883
  %v1100 = vpack.c.b16 %v892, %v884
  %v1101 = vpack.c.b16 %v893, %v885
  %v1102 = vpack.c.b16 %v894, %v886
  %v1103 = vpack.c.b16 %v903, %v895
  %v1104 = vpack.c.b16 %v904, %v896
  %v1105 = vpack.c.b16 %v905, %v897
  %v1106 = vpack.c.b16 %v906, %v898
  %v1107 = vpack.c.b16 %v907, %v899
  %v1108 = vpack.c.b16 %v908, %v900
  %v1109 = vpack.c.b16 %v909, %v901
  %v1110 = vpack.c.b16 %v910, %v902
  %v1111 = vpack.c.b16 %v919, %v911
  %v1112 = vpack.c.b16 %v920, %v912
  %v1113 = vpack.c.b16 %v921, %v913
  %v1114 = vpack.c.b16 %v922, %v914
  %v1115 = vpack.c.b16 %v923, %v915
  %v1116 = vpack.c.b16 %v924, %v916
  %v1117 = vpack.c.b16 %v925, %v917
  %v1118 = vpack.c.b16 %v926, %v918
  %v1119 = vpack.c.b16 %v935, %v927
  %v1120 = vpack.c.b16 %v936, %v928
  %v1121 = vpack.c.b16 %v937, %v929
  %v1122 = vpack.c.b16 %v938, %v930
  %v1123 = vpack.c.b16 %v939, %v931
  %v1124 = vpack.c.b16 %v940, %v932
  %v1125 = vpack.c.b16 %v941, %v933
  %v1126 = vpack.c.b16 %v942, %v934
  %v1127 = vpack.c.b16 %v951, %v943
  %v1128 = vpack.c.b16 %v952, %v944
  %v1129 = vpack.c.b16 %v953, %v945
  %v1130 = vpack.c.b16 %v954, %v946
  %v1131 = vpack.c.b16 %v955, %v947
  %v1132 = vpack.c.b16 %v956, %v948
  %v1133 = vpack.c.b16 %v957, %v949
  %v1134 = vpack.c.b16 %v958, %v950
  %v1135 = vpack.c.b16 %v967, %v959
  %v1136 = vpack.c.b16 %v968, %v960
  %v1137 = vpack.c.b16 %v969, %v961
  %v1138 = vpack.c.b16 %v970, %v962
  %v1139 = vpack.c.b16 %v971, %v963
  %v1140 = vpack.c.b16 %v972, %v964
  %v1141 = vpack.c.b16 %v973, %v965
  %v1142 = vpack.c.b16 %v974, %v966
  %v1143 = vpack.c.b16 %v983, %v975
  %v1144 = vpack.c.b16 %v984, %v976
  %v1145 = vpack.c.b16 %v985, %v977
  %v1146 = vpack.c.b16 %v986, %v978
  %v1147 = vpack.c.b16 %v987, %v979
  %v1148 = vpack.c.b16 %v988, %v980
  %v1149 = vpack.c.b16 %v989, %v981
  %v1150 = vpack.c.b16 %v990, %v982
  %v1151 = vpack.c.b16 %v999, %v991
  %v1152 = vpack.c.b16 %v1000, %v992
  %v1153 = vpack.c.b16 %v1001, %v993
  %v1154 = vpack.c.b16 %v1002, %v994
  %v1155 = vpack.c.b16 %v1003, %v995
  %v1156 = vpack.c.b16 %v1004, %v996
  %v1157 = vpack.c.b16 %v1005, %v997
  %v1158 = vpack.c.b16 %v1006, %v998
  %v1159 = vpack.c.b16 %v1015, %v1007
  %v1160 = vpack.c.b16 %v1016, %v1008
  %v1161 = vpack.c.b16 %v1017, %v1009
  %v1162 = vpack.c.b16 %v1018, %v1010
  %v1163 = vpack.c.b16 %v1019, %v1011
  %v1164 = vpack.c.b16 %v1020, %v1012
  %v1165 = vpack.c.b16 %v1021, %v1013
  %v1166 = vpack.c.b16 %v1022, %v1014
  %v1167 = vpack.c.b16 %v1031, %v1023
  %v1168 = vpack.c.b16 %v1032, %v1024
  %v1169 = vpack.c.b16 %v1033, %v1025
  %v1170 = vpack.c.b16 %v1034, %v1026
  %v1171 = vpack.c.b16 %v1035, %v1027
  %v1172 = vpack.c.b16 %v1036, %v1028
  %v1173 = vpack.c.b16 %v1037, %v1029
  %v1174 = vpack.c.b16 %v1038, %v1030
  %v1175 = vpack.c.b16 %v1047, %v1039
  %v1176 = vpack.c.b16 %v1048, %v1040
  %v1177 = vpack.c.b16 %v1049, %v1041
  %v1178 = vpack.c.b16 %v1050, %v1042
  %v1179 = vpack.c.b16 %v1051, %v1043
  %v1180 = vpack.c.b16 %v1052, %v1044
  %v1181 = vpack.c.b16 %v1053, %v1045
  %v1182 = vpack.c.b16 %v1054, %v1046
  %1311 = vmatprep.subr.bf16.mxu0 %v1112
  %1312 = vmatpush1.bf16.msra.mxu0 %v1111
  %1313 = vmatprep.subr.bf16.mxu0 %v1104
  %1314 = vmatpush1.bf16.msra.mxu0 %v1103
  %1315 = vmatprep.subr.bf16.mxu0 %v1096
  %1316 = vmatpush1.bf16.msra.mxu0 %v1095
  %1317 = vmatprep.subr.bf16.mxu0 %v1088
  %1318 = vmatpush1.bf16.msra.mxu0 %v1087
  %1319 = vmatprep.subr.bf16.mxu0 %v1080
  %1320 = vmatpush1.bf16.msra.mxu0 %v1079
  %1321 = vmatprep.subr.bf16.mxu0 %v1072
  %1322 = vmatpush1.bf16.msra.mxu0 %v1071
  %1323 = vmatprep.subr.bf16.mxu0 %v1064
  %1324 = vmatpush1.bf16.msra.mxu0 %v1063
  %1325 = vmatprep.subr.bf16.mxu0 %v1056
  %1326 = vmatpush1.bf16.msra.mxu0 %v1055
  %1327 = vmatprep.subr.bf16.mxu0 %v1176
  %1328 = vmatpush2.bf16.msra.mxu0 %v1175
  %1329 = vmatprep.subr.bf16.mxu0 %v1168
  %1330 = vmatpush2.bf16.msra.mxu0 %v1167
  %1331 = vmatprep.subr.bf16.mxu0 %v1160
  %1332 = vmatpush2.bf16.msra.mxu0 %v1159
  %1333 = vmatprep.subr.bf16.mxu0 %v1152
  %1334 = vmatpush2.bf16.msra.mxu0 %v1151
  %1335 = vmatprep.subr.bf16.mxu0 %v1144
  %1336 = vmatpush2.bf16.msra.mxu0 %v1143
  %1337 = vmatprep.subr.bf16.mxu0 %v1136
  %1338 = vmatpush2.bf16.msra.mxu0 %v1135
  %1339 = vmatprep.subr.bf16.mxu0 %v1128
  %1340 = vmatpush2.bf16.msra.mxu0 %v1127
  %1341 = vmatprep.subr.bf16.mxu0 %v1120
  %1342 = vmatpush2.bf16.msra.mxu0 %v1119
  %1343 = vmatprep.mubr.bf16.mxu0 %v670
  %1344 = vmatmul.mubr.bf16.gmra.mxu0 %v669
  %v1345 = vpop.f32.mrf.mxu0
  %v1346 = vadd.f32 0.0, %v1345
  %v1347 = vpop.f32.mrf.mxu0
  %v1348 = vadd.f32 0.0, %v1347
  %v1349 = vpop.f32.mrf.mxu0
  %v1350 = vpop.f32.mrf.mxu0
  %1351 = vdwg.mxu0
  %1352 = vmatprep.subr.bf16.mxu0 %v1114
  %1353 = vmatpush1.bf16.msra.mxu0 %v1113
  %1354 = vmatprep.subr.bf16.mxu0 %v1106
  %1355 = vmatpush1.bf16.msra.mxu0 %v1105
  %1356 = vmatprep.subr.bf16.mxu0 %v1098
  %1357 = vmatpush1.bf16.msra.mxu0 %v1097
  %1358 = vmatprep.subr.bf16.mxu0 %v1090
  %1359 = vmatpush1.bf16.msra.mxu0 %v1089
  %1360 = vmatprep.subr.bf16.mxu0 %v1082
  %1361 = vmatpush1.bf16.msra.mxu0 %v1081
  %1362 = vmatprep.subr.bf16.mxu0 %v1074
  %1363 = vmatpush1.bf16.msra.mxu0 %v1073
  %1364 = vmatprep.subr.bf16.mxu0 %v1066
  %1365 = vmatpush1.bf16.msra.mxu0 %v1065
  %1366 = vmatprep.subr.bf16.mxu0 %v1058
  %1367 = vmatpush1.bf16.msra.mxu0 %v1057
  %1368 = vmatprep.subr.bf16.mxu0 %v1178
  %1369 = vmatpush2.bf16.msra.mxu0 %v1177
  %1370 = vmatprep.subr.bf16.mxu0 %v1170
  %1371 = vmatpush2.bf16.msra.mxu0 %v1169
  %1372 = vmatprep.subr.bf16.mxu0 %v1162
  %1373 = vmatpush2.bf16.msra.mxu0 %v1161
  %1374 = vmatprep.subr.bf16.mxu0 %v1154
  %1375 = vmatpush2.bf16.msra.mxu0 %v1153
  %1376 = vmatprep.subr.bf16.mxu0 %v1146
  %1377 = vmatpush2.bf16.msra.mxu0 %v1145
  %1378 = vmatprep.subr.bf16.mxu0 %v1138
  %1379 = vmatpush2.bf16.msra.mxu0 %v1137
  %1380 = vmatprep.subr.bf16.mxu0 %v1130
  %1381 = vmatpush2.bf16.msra.mxu0 %v1129
  %1382 = vmatprep.subr.bf16.mxu0 %v1122
  %1383 = vmatpush2.bf16.msra.mxu0 %v1121
  %1384 = vmatprep.mubr.bf16.mxu0 %v670
  %1385 = vmatmul.mubr.bf16.gmra.mxu0 %v669
  %v1386 = vpop.f32.mrf.mxu0
  %v1387 = vadd.f32 0.0, %v1386
  %v1388 = vpop.f32.mrf.mxu0
  %v1389 = vadd.f32 0.0, %v1388
  %v1390 = vpop.f32.mrf.mxu0
  %v1391 = vpop.f32.mrf.mxu0
  %1392 = vdwg.mxu0
  %1393 = vmatprep.subr.bf16.mxu0 %v1116
  %1394 = vmatpush1.bf16.msra.mxu0 %v1115
  %1395 = vmatprep.subr.bf16.mxu0 %v1108
  %1396 = vmatpush1.bf16.msra.mxu0 %v1107
  %1397 = vmatprep.subr.bf16.mxu0 %v1100
  %1398 = vmatpush1.bf16.msra.mxu0 %v1099
  %1399 = vmatprep.subr.bf16.mxu0 %v1092
  %1400 = vmatpush1.bf16.msra.mxu0 %v1091
  %1401 = vmatprep.subr.bf16.mxu0 %v1084
  %1402 = vmatpush1.bf16.msra.mxu0 %v1083
  %1403 = vmatprep.subr.bf16.mxu0 %v1076
  %1404 = vmatpush1.bf16.msra.mxu0 %v1075
  %1405 = vmatprep.subr.bf16.mxu0 %v1068
  %1406 = vmatpush1.bf16.msra.mxu0 %v1067
  %1407 = vmatprep.subr.bf16.mxu0 %v1060
  %1408 = vmatpush1.bf16.msra.mxu0 %v1059
  %1409 = vmatprep.subr.bf16.mxu0 %v1180
  %1410 = vmatpush2.bf16.msra.mxu0 %v1179
  %1411 = vmatprep.subr.bf16.mxu0 %v1172
  %1412 = vmatpush2.bf16.msra.mxu0 %v1171
  %1413 = vmatprep.subr.bf16.mxu0 %v1164
  %1414 = vmatpush2.bf16.msra.mxu0 %v1163
  %1415 = vmatprep.subr.bf16.mxu0 %v1156
  %1416 = vmatpush2.bf16.msra.mxu0 %v1155
  %1417 = vmatprep.subr.bf16.mxu0 %v1148
  %1418 = vmatpush2.bf16.msra.mxu0 %v1147
  %1419 = vmatprep.subr.bf16.mxu0 %v1140
  %1420 = vmatpush2.bf16.msra.mxu0 %v1139
  %1421 = vmatprep.subr.bf16.mxu0 %v1132
  %1422 = vmatpush2.bf16.msra.mxu0 %v1131
  %1423 = vmatprep.subr.bf16.mxu0 %v1124
  %1424 = vmatpush2.bf16.msra.mxu0 %v1123
  %1425 = vmatprep.mubr.bf16.mxu0 %v670
  %1426 = vmatmul.mubr.bf16.gmra.mxu0 %v669
  %v1427 = vpop.f32.mrf.mxu0
  %v1428 = vadd.f32 0.0, %v1427
  %v1429 = vpop.f32.mrf.mxu0
  %v1430 = vadd.f32 0.0, %v1429
  %v1431 = vpop.f32.mrf.mxu0
  %v1432 = vpop.f32.mrf.mxu0
  %1433 = vdwg.mxu0
  %1434 = vmatprep.subr.bf16.mxu0 %v1118
  %1435 = vmatpush1.bf16.msra.mxu0 %v1117
  %1436 = vmatprep.subr.bf16.mxu0 %v1110
  %1437 = vmatpush1.bf16.msra.mxu0 %v1109
  %1438 = vmatprep.subr.bf16.mxu0 %v1102
  %1439 = vmatpush1.bf16.msra.mxu0 %v1101
  %1440 = vmatprep.subr.bf16.mxu0 %v1094
  %1441 = vmatpush1.bf16.msra.mxu0 %v1093
  %1442 = vmatprep.subr.bf16.mxu0 %v1086
  %1443 = vmatpush1.bf16.msra.mxu0 %v1085
  %1444 = vmatprep.subr.bf16.mxu0 %v1078
  %1445 = vmatpush1.bf16.msra.mxu0 %v1077
  %1446 = vmatprep.subr.bf16.mxu0 %v1070
  %1447 = vmatpush1.bf16.msra.mxu0 %v1069
  %1448 = vmatprep.subr.bf16.mxu0 %v1062
  %1449 = vmatpush1.bf16.msra.mxu0 %v1061
  %1450 = vmatprep.subr.bf16.mxu0 %v1182
  %1451 = vmatpush2.bf16.msra.mxu0 %v1181
  %1452 = vmatprep.subr.bf16.mxu0 %v1174
  %1453 = vmatpush2.bf16.msra.mxu0 %v1173
  %1454 = vmatprep.subr.bf16.mxu0 %v1166
  %1455 = vmatpush2.bf16.msra.mxu0 %v1165
  %1456 = vmatprep.subr.bf16.mxu0 %v1158
  %1457 = vmatpush2.bf16.msra.mxu0 %v1157
  %1458 = vmatprep.subr.bf16.mxu0 %v1150
  %1459 = vmatpush2.bf16.msra.mxu0 %v1149
  %1460 = vmatprep.subr.bf16.mxu0 %v1142
  %1461 = vmatpush2.bf16.msra.mxu0 %v1141
  %1462 = vmatprep.subr.bf16.mxu0 %v1134
  %1463 = vmatpush2.bf16.msra.mxu0 %v1133
  %1464 = vmatprep.subr.bf16.mxu0 %v1126
  %1465 = vmatpush2.bf16.msra.mxu0 %v1125
  %1466 = vmatprep.mubr.bf16.mxu0 %v670
  %1467 = vmatmul.mubr.bf16.gmra.mxu0 %v669
  %v1468 = vpop.f32.mrf.mxu0
  %v1469 = vadd.f32 0.0, %v1468
  %v1470 = vpop.f32.mrf.mxu0
  %v1471 = vadd.f32 0.0, %v1470
  %v1472 = vpop.f32.mrf.mxu0
  %v1473 = vpop.f32.mrf.mxu0
  %1474 = vdwg.mxu0
  %v1475 = vadd.f32 %v661, %v1346
  %v1476 = vadd.f32 %v662, %v1348
  %v1477 = vadd.f32 %v663, %v1387
  %v1478 = vadd.f32 %v664, %v1389
  %v1479 = vadd.f32 %v665, %v1428
  %v1480 = vadd.f32 %v666, %v1430
  %v1481 = vadd.f32 %v667, %v1469
  %v1482 = vadd.f32 %v668, %v1471
  %v1483 = vxor.u32 %v1475, 2147483648
  %v1484 = vxor.u32 %v1476, 2147483648
  %v1485 = vxor.u32 %v1477, 2147483648
  %v1486 = vxor.u32 %v1478, 2147483648
  %v1487 = vxor.u32 %v1479, 2147483648
  %v1488 = vxor.u32 %v1480, 2147483648
  %v1489 = vmul.f32 %v1483, 1.442695
  %v1490 = vpow.pop %v1489
  %v1491 = vmul.f32 %v1484, 1.442695
  %v1492 = vpow.pop %v1491
  %v1493 = vmul.f32 %v1485, 1.442695
  %v1494 = vpow.pop %v1493
  %v1495 = vmul.f32 %v1486, 1.442695
  %v1496 = vpow.pop %v1495
  %v1497 = vmul.f32 %v1487, 1.442695
  %v1498 = vpow.pop %v1497
  %v1499 = vmul.f32 %v1488, 1.442695
  %v1500 = vpow.pop %v1499
  %v1501 = vadd.f32 %v1490, 1.0
  %v1502 = vadd.f32 %v1492, 1.0
  %v1503 = vadd.f32 %v1494, 1.0
  %v1504 = vadd.f32 %v1496, 1.0
  %v1505 = vadd.f32 %v1498, 1.0
  %v1506 = vadd.f32 %v1500, 1.0
  %v1507 = vrcp.pop %v1501
  %v1508 = vmul.f32 1.0, %v1507
  %v1509 = vrcp.pop %v1502
  %v1510 = vmul.f32 1.0, %v1509
  %v1511 = vrcp.pop %v1503
  %v1512 = vmul.f32 1.0, %v1511
  %v1513 = vrcp.pop %v1504
  %v1514 = vmul.f32 1.0, %v1513
  %v1515 = vrcp.pop %v1505
  %v1516 = vmul.f32 1.0, %v1515
  %v1517 = vrcp.pop %v1506
  %v1518 = vmul.f32 1.0, %v1517
  %v1519 = vtanh.pop %v1481
  %v1520 = vtanh.pop %v1482
  %v1521 = vmul.f32 %v1512, %v656
  %v1522 = vmul.f32 %v1514, %v657
  %v1523 = vmul.f32 %v1508, %v1519
  %v1524 = vmul.f32 %v1510, %v1520
  %v1525 = vadd.f32 %v1521, %v1523
  %v1526 = vadd.f32 %v1522, %v1524
  %v1527 = vtanh.pop %v1525
  %v1528 = vtanh.pop %v1526
  %v1529 = vmul.f32 %v1516, %v1527
  %v1530 = vmul.f32 %v1518, %v1528
  %1531 = vst [vmem:[%s6] sm:$0xff] %v1529
  %1532 = vst [vmem:[%s6 + $0x8] sm:$0xff] %v1530
  %s1533 = smul.u32 1, 8
  %s1534 = smul.addr %s1533, 8
  %s1535 = scalar_lea.vmem [#allocation2], %s1534
  %v1536 = vld [vmem:[%s1535] sm:$0xff]
  %v1537 = vld [vmem:[%s1535 + $0x8] sm:$0xff]
  %v1538 = vld [vmem:[%s1535 + $0x10] sm:$0xff]
  %v1539 = vld [vmem:[%s1535 + $0x18] sm:$0xff]
  %v1540 = vld [vmem:[%s1535 + $0x20] sm:$0xff]
  %v1541 = vld [vmem:[%s1535 + $0x28] sm:$0xff]
  %v1542 = vld [vmem:[%s1535 + $0x30] sm:$0xff]
  %v1543 = vld [vmem:[%s1535 + $0x38] sm:$0xff]
  %v1544 = vpack.c.bf16 %v1529, %v1529
  %v1545 = vpack.c.bf16 %v1530, %v1530
  %1546 = vmatprep.subr.bf16.mxu0 %v1112
  %1547 = vmatpush1.bf16.msra.mxu0 %v1111
  %1548 = vmatprep.subr.bf16.mxu0 %v1104
  %1549 = vmatpush1.bf16.msra.mxu0 %v1103
  %1550 = vmatprep.subr.bf16.mxu0 %v1096
  %1551 = vmatpush1.bf16.msra.mxu0 %v1095
  %1552 = vmatprep.subr.bf16.mxu0 %v1088
  %1553 = vmatpush1.bf16.msra.mxu0 %v1087
  %1554 = vmatprep.subr.bf16.mxu0 %v1080
  %1555 = vmatpush1.bf16.msra.mxu0 %v1079
  %1556 = vmatprep.subr.bf16.mxu0 %v1072
  %1557 = vmatpush1.bf16.msra.mxu0 %v1071
  %1558 = vmatprep.subr.bf16.mxu0 %v1064
  %1559 = vmatpush1.bf16.msra.mxu0 %v1063
  %1560 = vmatprep.subr.bf16.mxu0 %v1056
  %1561 = vmatpush1.bf16.msra.mxu0 %v1055
  %1562 = vmatprep.subr.bf16.mxu0 %v1176
  %1563 = vmatpush2.bf16.msra.mxu0 %v1175
  %1564 = vmatprep.subr.bf16.mxu0 %v1168
  %1565 = vmatpush2.bf16.msra.mxu0 %v1167
  %1566 = vmatprep.subr.bf16.mxu0 %v1160
  %1567 = vmatpush2.bf16.msra.mxu0 %v1159
  %1568 = vmatprep.subr.bf16.mxu0 %v1152
  %1569 = vmatpush2.bf16.msra.mxu0 %v1151
  %1570 = vmatprep.subr.bf16.mxu0 %v1144
  %1571 = vmatpush2.bf16.msra.mxu0 %v1143
  %1572 = vmatprep.subr.bf16.mxu0 %v1136
  %1573 = vmatpush2.bf16.msra.mxu0 %v1135
  %1574 = vmatprep.subr.bf16.mxu0 %v1128
  %1575 = vmatpush2.bf16.msra.mxu0 %v1127
  %1576 = vmatprep.subr.bf16.mxu0 %v1120
  %1577 = vmatpush2.bf16.msra.mxu0 %v1119
  %1578 = vmatprep.mubr.bf16.mxu0 %v1545
  %1579 = vmatmul.mubr.bf16.gmra.mxu0 %v1544
  %v1580 = vpop.f32.mrf.mxu0
  %v1581 = vadd.f32 0.0, %v1580
  %v1582 = vpop.f32.mrf.mxu0
  %v1583 = vadd.f32 0.0, %v1582
  %v1584 = vpop.f32.mrf.mxu0
  %v1585 = vpop.f32.mrf.mxu0
  %1586 = vdwg.mxu0
  %1587 = vmatprep.subr.bf16.mxu0 %v1114
  %1588 = vmatpush1.bf16.msra.mxu0 %v1113
  %1589 = vmatprep.subr.bf16.mxu0 %v1106
  %1590 = vmatpush1.bf16.msra.mxu0 %v1105
  %1591 = vmatprep.subr.bf16.mxu0 %v1098
  %1592 = vmatpush1.bf16.msra.mxu0 %v1097
  %1593 = vmatprep.subr.bf16.mxu0 %v1090
  %1594 = vmatpush1.bf16.msra.mxu0 %v1089
  %1595 = vmatprep.subr.bf16.mxu0 %v1082
  %1596 = vmatpush1.bf16.msra.mxu0 %v1081
  %1597 = vmatprep.subr.bf16.mxu0 %v1074
  %1598 = vmatpush1.bf16.msra.mxu0 %v1073
  %1599 = vmatprep.subr.bf16.mxu0 %v1066
  %1600 = vmatpush1.bf16.msra.mxu0 %v1065
  %1601 = vmatprep.subr.bf16.mxu0 %v1058
  %1602 = vmatpush1.bf16.msra.mxu0 %v1057
  %1603 = vmatprep.subr.bf16.mxu0 %v1178
  %1604 = vmatpush2.bf16.msra.mxu0 %v1177
  %1605 = vmatprep.subr.bf16.mxu0 %v1170
  %1606 = vmatpush2.bf16.msra.mxu0 %v1169
  %1607 = vmatprep.subr.bf16.mxu0 %v1162
  %1608 = vmatpush2.bf16.msra.mxu0 %v1161
  %1609 = vmatprep.subr.bf16.mxu0 %v1154
  %1610 = vmatpush2.bf16.msra.mxu0 %v1153
  %1611 = vmatprep.subr.bf16.mxu0 %v1146
  %1612 = vmatpush2.bf16.msra.mxu0 %v1145
  %1613 = vmatprep.subr.bf16.mxu0 %v1138
  %1614 = vmatpush2.bf16.msra.mxu0 %v1137
  %1615 = vmatprep.subr.bf16.mxu0 %v1130
  %1616 = vmatpush2.bf16.msra.mxu0 %v1129
  %1617 = vmatprep.subr.bf16.mxu0 %v1122
  %1618 = vmatpush2.bf16.msra.mxu0 %v1121
  %1619 = vmatprep.mubr.bf16.mxu0 %v1545
  %1620 = vmatmul.mubr.bf16.gmra.mxu0 %v1544
  %v1621 = vpop.f32.mrf.mxu0
  %v1622 = vadd.f32 0.0, %v1621
  %v1623 = vpop.f32.mrf.mxu0
  %v1624 = vadd.f32 0.0, %v1623
  %v1625 = vpop.f32.mrf.mxu0
  %v1626 = vpop.f32.mrf.mxu0
  %1627 = vdwg.mxu0
  %1628 = vmatprep.subr.bf16.mxu0 %v1116
  %1629 = vmatpush1.bf16.msra.mxu0 %v1115
  %1630 = vmatprep.subr.bf16.mxu0 %v1108
  %1631 = vmatpush1.bf16.msra.mxu0 %v1107
  %1632 = vmatprep.subr.bf16.mxu0 %v1100
  %1633 = vmatpush1.bf16.msra.mxu0 %v1099
  %1634 = vmatprep.subr.bf16.mxu0 %v1092
  %1635 = vmatpush1.bf16.msra.mxu0 %v1091
  %1636 = vmatprep.subr.bf16.mxu0 %v1084
  %1637 = vmatpush1.bf16.msra.mxu0 %v1083
  %1638 = vmatprep.subr.bf16.mxu0 %v1076
  %1639 = vmatpush1.bf16.msra.mxu0 %v1075
  %1640 = vmatprep.subr.bf16.mxu0 %v1068
  %1641 = vmatpush1.bf16.msra.mxu0 %v1067
  %1642 = vmatprep.subr.bf16.mxu0 %v1060
  %1643 = vmatpush1.bf16.msra.mxu0 %v1059
  %1644 = vmatprep.subr.bf16.mxu0 %v1180
  %1645 = vmatpush2.bf16.msra.mxu0 %v1179
  %1646 = vmatprep.subr.bf16.mxu0 %v1172
  %1647 = vmatpush2.bf16.msra.mxu0 %v1171
  %1648 = vmatprep.subr.bf16.mxu0 %v1164
  %1649 = vmatpush2.bf16.msra.mxu0 %v1163
  %1650 = vmatprep.subr.bf16.mxu0 %v1156
  %1651 = vmatpush2.bf16.msra.mxu0 %v1155
  %1652 = vmatprep.subr.bf16.mxu0 %v1148
  %1653 = vmatpush2.bf16.msra.mxu0 %v1147
  %1654 = vmatprep.subr.bf16.mxu0 %v1140
  %1655 = vmatpush2.bf16.msra.mxu0 %v1139
  %1656 = vmatprep.subr.bf16.mxu0 %v1132
  %1657 = vmatpush2.bf16.msra.mxu0 %v1131
  %1658 = vmatprep.subr.bf16.mxu0 %v1124
  %1659 = vmatpush2.bf16.msra.mxu0 %v1123
  %1660 = vmatprep.mubr.bf16.mxu0 %v1545
  %1661 = vmatmul.mubr.bf16.gmra.mxu0 %v1544
  %v1662 = vpop.f32.mrf.mxu0
  %v1663 = vadd.f32 0.0, %v1662
  %v1664 = vpop.f32.mrf.mxu0
  %v1665 = vadd.f32 0.0, %v1664
  %v1666 = vpop.f32.mrf.mxu0
  %v1667 = vpop.f32.mrf.mxu0
  %1668 = vdwg.mxu0
  %1669 = vmatprep.subr.bf16.mxu0 %v1118
  %1670 = vmatpush1.bf16.msra.mxu0 %v1117
  %1671 = vmatprep.subr.bf16.mxu0 %v1110
  %1672 = vmatpush1.bf16.msra.mxu0 %v1109
  %1673 = vmatprep.subr.bf16.mxu0 %v1102
  %1674 = vmatpush1.bf16.msra.mxu0 %v1101
  %1675 = vmatprep.subr.bf16.mxu0 %v1094
  %1676 = vmatpush1.bf16.msra.mxu0 %v1093
  %1677 = vmatprep.subr.bf16.mxu0 %v1086
  %1678 = vmatpush1.bf16.msra.mxu0 %v1085
  %1679 = vmatprep.subr.bf16.mxu0 %v1078
  %1680 = vmatpush1.bf16.msra.mxu0 %v1077
  %1681 = vmatprep.subr.bf16.mxu0 %v1070
  %1682 = vmatpush1.bf16.msra.mxu0 %v1069
  %1683 = vmatprep.subr.bf16.mxu0 %v1062
  %1684 = vmatpush1.bf16.msra.mxu0 %v1061
  %1685 = vmatprep.subr.bf16.mxu0 %v1182
  %1686 = vmatpush2.bf16.msra.mxu0 %v1181
  %1687 = vmatprep.subr.bf16.mxu0 %v1174
  %1688 = vmatpush2.bf16.msra.mxu0 %v1173
  %1689 = vmatprep.subr.bf16.mxu0 %v1166
  %1690 = vmatpush2.bf16.msra.mxu0 %v1165
  %1691 = vmatprep.subr.bf16.mxu0 %v1158
  %1692 = vmatpush2.bf16.msra.mxu0 %v1157
  %1693 = vmatprep.subr.bf16.mxu0 %v1150
  %1694 = vmatpush2.bf16.msra.mxu0 %v1149
  %1695 = vmatprep.subr.bf16.mxu0 %v1142
  %1696 = vmatpush2.bf16.msra.mxu0 %v1141
  %1697 = vmatprep.subr.bf16.mxu0 %v1134
  %1698 = vmatpush2.bf16.msra.mxu0 %v1133
  %1699 = vmatprep.subr.bf16.mxu0 %v1126
  %1700 = vmatpush2.bf16.msra.mxu0 %v1125
  %1701 = vmatprep.mubr.bf16.mxu0 %v1545
  %1702 = vmatmul.mubr.bf16.gmra.mxu0 %v1544
  %v1703 = vpop.f32.mrf.mxu0
  %v1704 = vadd.f32 0.0, %v1703
  %v1705 = vpop.f32.mrf.mxu0
  %v1706 = vadd.f32 0.0, %v1705
  %v1707 = vpop.f32.mrf.mxu0
  %v1708 = vpop.f32.mrf.mxu0
  %1709 = vdwg.mxu0
  %v1710 = vadd.f32 %v1536, %v1581
  %v1711 = vadd.f32 %v1537, %v1583
  %v1712 = vadd.f32 %v1538, %v1622
  %v1713 = vadd.f32 %v1539, %v1624
  %v1714 = vadd.f32 %v1540, %v1663
  %v1715 = vadd.f32 %v1541, %v1665
  %v1716 = vadd.f32 %v1542, %v1704
  %v1717 = vadd.f32 %v1543, %v1706
  %v1718 = vxor.u32 %v1710, 2147483648
  %v1719 = vxor.u32 %v1711, 2147483648
  %v1720 = vxor.u32 %v1712, 2147483648
  %v1721 = vxor.u32 %v1713, 2147483648
  %v1722 = vxor.u32 %v1714, 2147483648
  %v1723 = vxor.u32 %v1715, 2147483648
  %v1724 = vmul.f32 %v1718, 1.442695
  %v1725 = vpow.pop %v1724
  %v1726 = vmul.f32 %v1719, 1.442695
  %v1727 = vpow.pop %v1726
  %v1728 = vmul.f32 %v1720, 1.442695
  %v1729 = vpow.pop %v1728
  %v1730 = vmul.f32 %v1721, 1.442695
  %v1731 = vpow.pop %v1730
  %v1732 = vmul.f32 %v1722, 1.442695
  %v1733 = vpow.pop %v1732
  %v1734 = vmul.f32 %v1723, 1.442695
  %v1735 = vpow.pop %v1734
  %v1736 = vadd.f32 %v1725, 1.0
  %v1737 = vadd.f32 %v1727, 1.0
  %v1738 = vadd.f32 %v1729, 1.0
  %v1739 = vadd.f32 %v1731, 1.0
  %v1740 = vadd.f32 %v1733, 1.0
  %v1741 = vadd.f32 %v1735, 1.0
  %v1742 = vrcp.pop %v1736
  %v1743 = vmul.f32 1.0, %v1742
  %v1744 = vrcp.pop %v1737
  %v1745 = vmul.f32 1.0, %v1744
  %v1746 = vrcp.pop %v1738
  %v1747 = vmul.f32 1.0, %v1746
  %v1748 = vrcp.pop %v1739
  %v1749 = vmul.f32 1.0, %v1748
  %v1750 = vrcp.pop %v1740
  %v1751 = vmul.f32 1.0, %v1750
  %v1752 = vrcp.pop %v1741
  %v1753 = vmul.f32 1.0, %v1752
  %v1754 = vtanh.pop %v1716
  %v1755 = vtanh.pop %v1717
  %v1756 = vmul.f32 %v1747, %v1525
  %v1757 = vmul.f32 %v1749, %v1526
  %v1758 = vmul.f32 %v1743, %v1754
  %v1759 = vmul.f32 %v1745, %v1755
  %v1760 = vadd.f32 %v1756, %v1758
  %v1761 = vadd.f32 %v1757, %v1759
  %v1762 = vtanh.pop %v1760
  %v1763 = vtanh.pop %v1761
  %v1764 = vmul.f32 %v1751, %v1762
  %v1765 = vmul.f32 %v1753, %v1763
  %s1766 = scalar_lea.vmem %s6, 16
  %1767 = vst [vmem:[%s1766] sm:$0xff] %v1764
  %1768 = vst [vmem:[%s1766 + $0x8] sm:$0xff] %v1765
  %s1769 = smul.u32 2, 8
  %s1770 = smul.addr %s1769, 8
  %s1771 = scalar_lea.vmem [#allocation2], %s1770
  %v1772 = vld [vmem:[%s1771] sm:$0xff]
  %v1773 = vld [vmem:[%s1771 + $0x8] sm:$0xff]
  %v1774 = vld [vmem:[%s1771 + $0x10] sm:$0xff]
  %v1775 = vld [vmem:[%s1771 + $0x18] sm:$0xff]
  %v1776 = vld [vmem:[%s1771 + $0x20] sm:$0xff]
  %v1777 = vld [vmem:[%s1771 + $0x28] sm:$0xff]
  %v1778 = vld [vmem:[%s1771 + $0x30] sm:$0xff]
  %v1779 = vld [vmem:[%s1771 + $0x38] sm:$0xff]
  %v1780 = vpack.c.bf16 %v1764, %v1764
  %v1781 = vpack.c.bf16 %v1765, %v1765
  %1782 = vmatprep.subr.bf16.mxu0 %v1112
  %1783 = vmatpush1.bf16.msra.mxu0 %v1111
  %1784 = vmatprep.subr.bf16.mxu0 %v1104
  %1785 = vmatpush1.bf16.msra.mxu0 %v1103
  %1786 = vmatprep.subr.bf16.mxu0 %v1096
  %1787 = vmatpush1.bf16.msra.mxu0 %v1095
  %1788 = vmatprep.subr.bf16.mxu0 %v1088
  %1789 = vmatpush1.bf16.msra.mxu0 %v1087
  %1790 = vmatprep.subr.bf16.mxu0 %v1080
  %1791 = vmatpush1.bf16.msra.mxu0 %v1079
  %1792 = vmatprep.subr.bf16.mxu0 %v1072
  %1793 = vmatpush1.bf16.msra.mxu0 %v1071
  %1794 = vmatprep.subr.bf16.mxu0 %v1064
  %1795 = vmatpush1.bf16.msra.mxu0 %v1063
  %1796 = vmatprep.subr.bf16.mxu0 %v1056
  %1797 = vmatpush1.bf16.msra.mxu0 %v1055
  %1798 = vmatprep.subr.bf16.mxu0 %v1176
  %1799 = vmatpush2.bf16.msra.mxu0 %v1175
  %1800 = vmatprep.subr.bf16.mxu0 %v1168
  %1801 = vmatpush2.bf16.msra.mxu0 %v1167
  %1802 = vmatprep.subr.bf16.mxu0 %v1160
  %1803 = vmatpush2.bf16.msra.mxu0 %v1159
  %1804 = vmatprep.subr.bf16.mxu0 %v1152
  %1805 = vmatpush2.bf16.msra.mxu0 %v1151
  %1806 = vmatprep.subr.bf16.mxu0 %v1144
  %1807 = vmatpush2.bf16.msra.mxu0 %v1143
  %1808 = vmatprep.subr.bf16.mxu0 %v1136
  %1809 = vmatpush2.bf16.msra.mxu0 %v1135
  %1810 = vmatprep.subr.bf16.mxu0 %v1128
  %1811 = vmatpush2.bf16.msra.mxu0 %v1127
  %1812 = vmatprep.subr.bf16.mxu0 %v1120
  %1813 = vmatpush2.bf16.msra.mxu0 %v1119
  %1814 = vmatprep.mubr.bf16.mxu0 %v1781
  %1815 = vmatmul.mubr.bf16.gmra.mxu0 %v1780
  %v1816 = vpop.f32.mrf.mxu0
  %v1817 = vadd.f32 0.0, %v1816
  %v1818 = vpop.f32.mrf.mxu0
  %v1819 = vadd.f32 0.0, %v1818
  %v1820 = vpop.f32.mrf.mxu0
  %v1821 = vpop.f32.mrf.mxu0
  %1822 = vdwg.mxu0
  %1823 = vmatprep.subr.bf16.mxu0 %v1114
  %1824 = vmatpush1.bf16.msra.mxu0 %v1113
  %1825 = vmatprep.subr.bf16.mxu0 %v1106
  %1826 = vmatpush1.bf16.msra.mxu0 %v1105
  %1827 = vmatprep.subr.bf16.mxu0 %v1098
  %1828 = vmatpush1.bf16.msra.mxu0 %v1097
  %1829 = vmatprep.subr.bf16.mxu0 %v1090
  %1830 = vmatpush1.bf16.msra.mxu0 %v1089
  %1831 = vmatprep.subr.bf16.mxu0 %v1082
  %1832 = vmatpush1.bf16.msra.mxu0 %v1081
  %1833 = vmatprep.subr.bf16.mxu0 %v1074
  %1834 = vmatpush1.bf16.msra.mxu0 %v1073
  %1835 = vmatprep.subr.bf16.mxu0 %v1066
  %1836 = vmatpush1.bf16.msra.mxu0 %v1065
  %1837 = vmatprep.subr.bf16.mxu0 %v1058
  %1838 = vmatpush1.bf16.msra.mxu0 %v1057
  %1839 = vmatprep.subr.bf16.mxu0 %v1178
  %1840 = vmatpush2.bf16.msra.mxu0 %v1177
  %1841 = vmatprep.subr.bf16.mxu0 %v1170
  %1842 = vmatpush2.bf16.msra.mxu0 %v1169
  %1843 = vmatprep.subr.bf16.mxu0 %v1162
  %1844 = vmatpush2.bf16.msra.mxu0 %v1161
  %1845 = vmatprep.subr.bf16.mxu0 %v1154
  %1846 = vmatpush2.bf16.msra.mxu0 %v1153
  %1847 = vmatprep.subr.bf16.mxu0 %v1146
  %1848 = vmatpush2.bf16.msra.mxu0 %v1145
  %1849 = vmatprep.subr.bf16.mxu0 %v1138
  %1850 = vmatpush2.bf16.msra.mxu0 %v1137
  %1851 = vmatprep.subr.bf16.mxu0 %v1130
  %1852 = vmatpush2.bf16.msra.mxu0 %v1129
  %1853 = vmatprep.subr.bf16.mxu0 %v1122
  %1854 = vmatpush2.bf16.msra.mxu0 %v1121
  %1855 = vmatprep.mubr.bf16.mxu0 %v1781
  %1856 = vmatmul.mubr.bf16.gmra.mxu0 %v1780
  %v1857 = vpop.f32.mrf.mxu0
  %v1858 = vadd.f32 0.0, %v1857
  %v1859 = vpop.f32.mrf.mxu0
  %v1860 = vadd.f32 0.0, %v1859
  %v1861 = vpop.f32.mrf.mxu0
  %v1862 = vpop.f32.mrf.mxu0
  %1863 = vdwg.mxu0
  %1864 = vmatprep.subr.bf16.mxu0 %v1116
  %1865 = vmatpush1.bf16.msra.mxu0 %v1115
  %1866 = vmatprep.subr.bf16.mxu0 %v1108
  %1867 = vmatpush1.bf16.msra.mxu0 %v1107
  %1868 = vmatprep.subr.bf16.mxu0 %v1100
  %1869 = vmatpush1.bf16.msra.mxu0 %v1099
  %1870 = vmatprep.subr.bf16.mxu0 %v1092
  %1871 = vmatpush1.bf16.msra.mxu0 %v1091
  %1872 = vmatprep.subr.bf16.mxu0 %v1084
  %1873 = vmatpush1.bf16.msra.mxu0 %v1083
  %1874 = vmatprep.subr.bf16.mxu0 %v1076
  %1875 = vmatpush1.bf16.msra.mxu0 %v1075
  %1876 = vmatprep.subr.bf16.mxu0 %v1068
  %1877 = vmatpush1.bf16.msra.mxu0 %v1067
  %1878 = vmatprep.subr.bf16.mxu0 %v1060
  %1879 = vmatpush1.bf16.msra.mxu0 %v1059
  %1880 = vmatprep.subr.bf16.mxu0 %v1180
  %1881 = vmatpush2.bf16.msra.mxu0 %v1179
  %1882 = vmatprep.subr.bf16.mxu0 %v1172
  %1883 = vmatpush2.bf16.msra.mxu0 %v1171
  %1884 = vmatprep.subr.bf16.mxu0 %v1164
  %1885 = vmatpush2.bf16.msra.mxu0 %v1163
  %1886 = vmatprep.subr.bf16.mxu0 %v1156
  %1887 = vmatpush2.bf16.msra.mxu0 %v1155
  %1888 = vmatprep.subr.bf16.mxu0 %v1148
  %1889 = vmatpush2.bf16.msra.mxu0 %v1147
  %1890 = vmatprep.subr.bf16.mxu0 %v1140
  %1891 = vmatpush2.bf16.msra.mxu0 %v1139
  %1892 = vmatprep.subr.bf16.mxu0 %v1132
  %1893 = vmatpush2.bf16.msra.mxu0 %v1131
  %1894 = vmatprep.subr.bf16.mxu0 %v1124
  %1895 = vmatpush2.bf16.msra.mxu0 %v1123
  %1896 = vmatprep.mubr.bf16.mxu0 %v1781
  %1897 = vmatmul.mubr.bf16.gmra.mxu0 %v1780
  %v1898 = vpop.f32.mrf.mxu0
  %v1899 = vadd.f32 0.0, %v1898
  %v1900 = vpop.f32.mrf.mxu0
  %v1901 = vadd.f32 0.0, %v1900
  %v1902 = vpop.f32.mrf.mxu0
  %v1903 = vpop.f32.mrf.mxu0
  %1904 = vdwg.mxu0
  %1905 = vmatprep.subr.bf16.mxu0 %v1118
  %1906 = vmatpush1.bf16.msra.mxu0 %v1117
  %1907 = vmatprep.subr.bf16.mxu0 %v1110
  %1908 = vmatpush1.bf16.msra.mxu0 %v1109
  %1909 = vmatprep.subr.bf16.mxu0 %v1102
  %1910 = vmatpush1.bf16.msra.mxu0 %v1101
  %1911 = vmatprep.subr.bf16.mxu0 %v1094
  %1912 = vmatpush1.bf16.msra.mxu0 %v1093
  %1913 = vmatprep.subr.bf16.mxu0 %v1086
  %1914 = vmatpush1.bf16.msra.mxu0 %v1085
  %1915 = vmatprep.subr.bf16.mxu0 %v1078
  %1916 = vmatpush1.bf16.msra.mxu0 %v1077
  %1917 = vmatprep.subr.bf16.mxu0 %v1070
  %1918 = vmatpush1.bf16.msra.mxu0 %v1069
  %1919 = vmatprep.subr.bf16.mxu0 %v1062
  %1920 = vmatpush1.bf16.msra.mxu0 %v1061
  %1921 = vmatprep.subr.bf16.mxu0 %v1182
  %1922 = vmatpush2.bf16.msra.mxu0 %v1181
  %1923 = vmatprep.subr.bf16.mxu0 %v1174
  %1924 = vmatpush2.bf16.msra.mxu0 %v1173
  %1925 = vmatprep.subr.bf16.mxu0 %v1166
  %1926 = vmatpush2.bf16.msra.mxu0 %v1165
  %1927 = vmatprep.subr.bf16.mxu0 %v1158
  %1928 = vmatpush2.bf16.msra.mxu0 %v1157
  %1929 = vmatprep.subr.bf16.mxu0 %v1150
  %1930 = vmatpush2.bf16.msra.mxu0 %v1149
  %1931 = vmatprep.subr.bf16.mxu0 %v1142
  %1932 = vmatpush2.bf16.msra.mxu0 %v1141
  %1933 = vmatprep.subr.bf16.mxu0 %v1134
  %1934 = vmatpush2.bf16.msra.mxu0 %v1133
  %1935 = vmatprep.subr.bf16.mxu0 %v1126
  %1936 = vmatpush2.bf16.msra.mxu0 %v1125
  %1937 = vmatprep.mubr.bf16.mxu0 %v1781
  %1938 = vmatmul.mubr.bf16.gmra.mxu0 %v1780
  %v1939 = vpop.f32.mrf.mxu0
  %v1940 = vadd.f32 0.0, %v1939
  %v1941 = vpop.f32.mrf.mxu0
  %v1942 = vadd.f32 0.0, %v1941
  %v1943 = vpop.f32.mrf.mxu0
  %v1944 = vpop.f32.mrf.mxu0
  %1945 = vdwg.mxu0
  %v1946 = vadd.f32 %v1772, %v1817
  %v1947 = vadd.f32 %v1773, %v1819
  %v1948 = vadd.f32 %v1774, %v1858
  %v1949 = vadd.f32 %v1775, %v1860
  %v1950 = vadd.f32 %v1776, %v1899
  %v1951 = vadd.f32 %v1777, %v1901
  %v1952 = vadd.f32 %v1778, %v1940
  %v1953 = vadd.f32 %v1779, %v1942
  %v1954 = vxor.u32 %v1946, 2147483648
  %v1955 = vxor.u32 %v1947, 2147483648
  %v1956 = vxor.u32 %v1948, 2147483648
  %v1957 = vxor.u32 %v1949, 2147483648
  %v1958 = vxor.u32 %v1950, 2147483648
  %v1959 = vxor.u32 %v1951, 2147483648
  %v1960 = vmul.f32 %v1954, 1.442695
  %v1961 = vpow.pop %v1960
  %v1962 = vmul.f32 %v1955, 1.442695
  %v1963 = vpow.pop %v1962
  %v1964 = vmul.f32 %v1956, 1.442695
  %v1965 = vpow.pop %v1964
  %v1966 = vmul.f32 %v1957, 1.442695
  %v1967 = vpow.pop %v1966
  %v1968 = vmul.f32 %v1958, 1.442695
  %v1969 = vpow.pop %v1968
  %v1970 = vmul.f32 %v1959, 1.442695
  %v1971 = vpow.pop %v1970
  %v1972 = vadd.f32 %v1961, 1.0
  %v1973 = vadd.f32 %v1963, 1.0
  %v1974 = vadd.f32 %v1965, 1.0
  %v1975 = vadd.f32 %v1967, 1.0
  %v1976 = vadd.f32 %v1969, 1.0
  %v1977 = vadd.f32 %v1971, 1.0
  %v1978 = vrcp.pop %v1972
  %v1979 = vmul.f32 1.0, %v1978
  %v1980 = vrcp.pop %v1973
  %v1981 = vmul.f32 1.0, %v1980
  %v1982 = vrcp.pop %v1974
  %v1983 = vmul.f32 1.0, %v1982
  %v1984 = vrcp.pop %v1975
  %v1985 = vmul.f32 1.0, %v1984
  %v1986 = vrcp.pop %v1976
  %v1987 = vmul.f32 1.0, %v1986
  %v1988 = vrcp.pop %v1977
  %v1989 = vmul.f32 1.0, %v1988
  %v1990 = vtanh.pop %v1952
  %v1991 = vtanh.pop %v1953
  %v1992 = vmul.f32 %v1983, %v1760
  %v1993 = vmul.f32 %v1985, %v1761
  %v1994 = vmul.f32 %v1979, %v1990
  %v1995 = vmul.f32 %v1981, %v1991
  %v1996 = vadd.f32 %v1992, %v1994
  %v1997 = vadd.f32 %v1993, %v1995
  %v1998 = vtanh.pop %v1996
  %v1999 = vtanh.pop %v1997
  %v2000 = vmul.f32 %v1987, %v1998
  %v2001 = vmul.f32 %v1989, %v1999
  %s2002 = scalar_lea.vmem %s6, 32
  %2003 = vst [vmem:[%s2002] sm:$0xff] %v2000
  %2004 = vst [vmem:[%s2002 + $0x8] sm:$0xff] %v2001
  %s2005 = smul.u32 3, 8
  %s2006 = smul.addr %s2005, 8
  %s2007 = scalar_lea.vmem [#allocation2], %s2006
  %v2008 = vld [vmem:[%s2007] sm:$0xff]
  %v2009 = vld [vmem:[%s2007 + $0x8] sm:$0xff]
  %v2010 = vld [vmem:[%s2007 + $0x10] sm:$0xff]
  %v2011 = vld [vmem:[%s2007 + $0x18] sm:$0xff]
  %v2012 = vld [vmem:[%s2007 + $0x20] sm:$0xff]
  %v2013 = vld [vmem:[%s2007 + $0x28] sm:$0xff]
  %v2014 = vld [vmem:[%s2007 + $0x30] sm:$0xff]
  %v2015 = vld [vmem:[%s2007 + $0x38] sm:$0xff]
  %v2016 = vpack.c.bf16 %v2000, %v2000
  %v2017 = vpack.c.bf16 %v2001, %v2001
  %2018 = vmatprep.subr.bf16.mxu0 %v1112
  %2019 = vmatpush1.bf16.msra.mxu0 %v1111
  %2020 = vmatprep.subr.bf16.mxu0 %v1104
  %2021 = vmatpush1.bf16.msra.mxu0 %v1103
  %2022 = vmatprep.subr.bf16.mxu0 %v1096
  %2023 = vmatpush1.bf16.msra.mxu0 %v1095
  %2024 = vmatprep.subr.bf16.mxu0 %v1088
  %2025 = vmatpush1.bf16.msra.mxu0 %v1087
  %2026 = vmatprep.subr.bf16.mxu0 %v1080
  %2027 = vmatpush1.bf16.msra.mxu0 %v1079
  %2028 = vmatprep.subr.bf16.mxu0 %v1072
  %2029 = vmatpush1.bf16.msra.mxu0 %v1071
  %2030 = vmatprep.subr.bf16.mxu0 %v1064
  %2031 = vmatpush1.bf16.msra.mxu0 %v1063
  %2032 = vmatprep.subr.bf16.mxu0 %v1056
  %2033 = vmatpush1.bf16.msra.mxu0 %v1055
  %2034 = vmatprep.subr.bf16.mxu0 %v1176
  %2035 = vmatpush2.bf16.msra.mxu0 %v1175
  %2036 = vmatprep.subr.bf16.mxu0 %v1168
  %2037 = vmatpush2.bf16.msra.mxu0 %v1167
  %2038 = vmatprep.subr.bf16.mxu0 %v1160
  %2039 = vmatpush2.bf16.msra.mxu0 %v1159
  %2040 = vmatprep.subr.bf16.mxu0 %v1152
  %2041 = vmatpush2.bf16.msra.mxu0 %v1151
  %2042 = vmatprep.subr.bf16.mxu0 %v1144
  %2043 = vmatpush2.bf16.msra.mxu0 %v1143
  %2044 = vmatprep.subr.bf16.mxu0 %v1136
  %2045 = vmatpush2.bf16.msra.mxu0 %v1135
  %2046 = vmatprep.subr.bf16.mxu0 %v1128
  %2047 = vmatpush2.bf16.msra.mxu0 %v1127
  %2048 = vmatprep.subr.bf16.mxu0 %v1120
  %2049 = vmatpush2.bf16.msra.mxu0 %v1119
  %2050 = vmatprep.mubr.bf16.mxu0 %v2017
  %2051 = vmatmul.mubr.bf16.gmra.mxu0 %v2016
  %v2052 = vpop.f32.mrf.mxu0
  %v2053 = vadd.f32 0.0, %v2052
  %v2054 = vpop.f32.mrf.mxu0
  %v2055 = vadd.f32 0.0, %v2054
  %v2056 = vpop.f32.mrf.mxu0
  %v2057 = vpop.f32.mrf.mxu0
  %2058 = vdwg.mxu0
  %2059 = vmatprep.subr.bf16.mxu0 %v1114
  %2060 = vmatpush1.bf16.msra.mxu0 %v1113
  %2061 = vmatprep.subr.bf16.mxu0 %v1106
  %2062 = vmatpush1.bf16.msra.mxu0 %v1105
  %2063 = vmatprep.subr.bf16.mxu0 %v1098
  %2064 = vmatpush1.bf16.msra.mxu0 %v1097
  %2065 = vmatprep.subr.bf16.mxu0 %v1090
  %2066 = vmatpush1.bf16.msra.mxu0 %v1089
  %2067 = vmatprep.subr.bf16.mxu0 %v1082
  %2068 = vmatpush1.bf16.msra.mxu0 %v1081
  %2069 = vmatprep.subr.bf16.mxu0 %v1074
  %2070 = vmatpush1.bf16.msra.mxu0 %v1073
  %2071 = vmatprep.subr.bf16.mxu0 %v1066
  %2072 = vmatpush1.bf16.msra.mxu0 %v1065
  %2073 = vmatprep.subr.bf16.mxu0 %v1058
  %2074 = vmatpush1.bf16.msra.mxu0 %v1057
  %2075 = vmatprep.subr.bf16.mxu0 %v1178
  %2076 = vmatpush2.bf16.msra.mxu0 %v1177
  %2077 = vmatprep.subr.bf16.mxu0 %v1170
  %2078 = vmatpush2.bf16.msra.mxu0 %v1169
  %2079 = vmatprep.subr.bf16.mxu0 %v1162
  %2080 = vmatpush2.bf16.msra.mxu0 %v1161
  %2081 = vmatprep.subr.bf16.mxu0 %v1154
  %2082 = vmatpush2.bf16.msra.mxu0 %v1153
  %2083 = vmatprep.subr.bf16.mxu0 %v1146
  %2084 = vmatpush2.bf16.msra.mxu0 %v1145
  %2085 = vmatprep.subr.bf16.mxu0 %v1138
  %2086 = vmatpush2.bf16.msra.mxu0 %v1137
  %2087 = vmatprep.subr.bf16.mxu0 %v1130
  %2088 = vmatpush2.bf16.msra.mxu0 %v1129
  %2089 = vmatprep.subr.bf16.mxu0 %v1122
  %2090 = vmatpush2.bf16.msra.mxu0 %v1121
  %2091 = vmatprep.mubr.bf16.mxu0 %v2017
  %2092 = vmatmul.mubr.bf16.gmra.mxu0 %v2016
  %v2093 = vpop.f32.mrf.mxu0
  %v2094 = vadd.f32 0.0, %v2093
  %v2095 = vpop.f32.mrf.mxu0
  %v2096 = vadd.f32 0.0, %v2095
  %v2097 = vpop.f32.mrf.mxu0
  %v2098 = vpop.f32.mrf.mxu0
  %2099 = vdwg.mxu0
  %2100 = vmatprep.subr.bf16.mxu0 %v1116
  %2101 = vmatpush1.bf16.msra.mxu0 %v1115
  %2102 = vmatprep.subr.bf16.mxu0 %v1108
  %2103 = vmatpush1.bf16.msra.mxu0 %v1107
  %2104 = vmatprep.subr.bf16.mxu0 %v1100
  %2105 = vmatpush1.bf16.msra.mxu0 %v1099
  %2106 = vmatprep.subr.bf16.mxu0 %v1092
  %2107 = vmatpush1.bf16.msra.mxu0 %v1091
  %2108 = vmatprep.subr.bf16.mxu0 %v1084
  %2109 = vmatpush1.bf16.msra.mxu0 %v1083
  %2110 = vmatprep.subr.bf16.mxu0 %v1076
  %2111 = vmatpush1.bf16.msra.mxu0 %v1075
  %2112 = vmatprep.subr.bf16.mxu0 %v1068
  %2113 = vmatpush1.bf16.msra.mxu0 %v1067
  %2114 = vmatprep.subr.bf16.mxu0 %v1060
  %2115 = vmatpush1.bf16.msra.mxu0 %v1059
  %2116 = vmatprep.subr.bf16.mxu0 %v1180
  %2117 = vmatpush2.bf16.msra.mxu0 %v1179
  %2118 = vmatprep.subr.bf16.mxu0 %v1172
  %2119 = vmatpush2.bf16.msra.mxu0 %v1171
  %2120 = vmatprep.subr.bf16.mxu0 %v1164
  %2121 = vmatpush2.bf16.msra.mxu0 %v1163
  %2122 = vmatprep.subr.bf16.mxu0 %v1156
  %2123 = vmatpush2.bf16.msra.mxu0 %v1155
  %2124 = vmatprep.subr.bf16.mxu0 %v1148
  %2125 = vmatpush2.bf16.msra.mxu0 %v1147
  %2126 = vmatprep.subr.bf16.mxu0 %v1140
  %2127 = vmatpush2.bf16.msra.mxu0 %v1139
  %2128 = vmatprep.subr.bf16.mxu0 %v1132
  %2129 = vmatpush2.bf16.msra.mxu0 %v1131
  %2130 = vmatprep.subr.bf16.mxu0 %v1124
  %2131 = vmatpush2.bf16.msra.mxu0 %v1123
  %2132 = vmatprep.mubr.bf16.mxu0 %v2017
  %2133 = vmatmul.mubr.bf16.gmra.mxu0 %v2016
  %v2134 = vpop.f32.mrf.mxu0
  %v2135 = vadd.f32 0.0, %v2134
  %v2136 = vpop.f32.mrf.mxu0
  %v2137 = vadd.f32 0.0, %v2136
  %v2138 = vpop.f32.mrf.mxu0
  %v2139 = vpop.f32.mrf.mxu0
  %2140 = vdwg.mxu0
  %2141 = vmatprep.subr.bf16.mxu0 %v1118
  %2142 = vmatpush1.bf16.msra.mxu0 %v1117
  %2143 = vmatprep.subr.bf16.mxu0 %v1110
  %2144 = vmatpush1.bf16.msra.mxu0 %v1109
  %2145 = vmatprep.subr.bf16.mxu0 %v1102
  %2146 = vmatpush1.bf16.msra.mxu0 %v1101
  %2147 = vmatprep.subr.bf16.mxu0 %v1094
  %2148 = vmatpush1.bf16.msra.mxu0 %v1093
  %2149 = vmatprep.subr.bf16.mxu0 %v1086
  %2150 = vmatpush1.bf16.msra.mxu0 %v1085
  %2151 = vmatprep.subr.bf16.mxu0 %v1078
  %2152 = vmatpush1.bf16.msra.mxu0 %v1077
  %2153 = vmatprep.subr.bf16.mxu0 %v1070
  %2154 = vmatpush1.bf16.msra.mxu0 %v1069
  %2155 = vmatprep.subr.bf16.mxu0 %v1062
  %2156 = vmatpush1.bf16.msra.mxu0 %v1061
  %2157 = vmatprep.subr.bf16.mxu0 %v1182
  %2158 = vmatpush2.bf16.msra.mxu0 %v1181
  %2159 = vmatprep.subr.bf16.mxu0 %v1174
  %2160 = vmatpush2.bf16.msra.mxu0 %v1173
  %2161 = vmatprep.subr.bf16.mxu0 %v1166
  %2162 = vmatpush2.bf16.msra.mxu0 %v1165
  %2163 = vmatprep.subr.bf16.mxu0 %v1158
  %2164 = vmatpush2.bf16.msra.mxu0 %v1157
  %2165 = vmatprep.subr.bf16.mxu0 %v1150
  %2166 = vmatpush2.bf16.msra.mxu0 %v1149
  %2167 = vmatprep.subr.bf16.mxu0 %v1142
  %2168 = vmatpush2.bf16.msra.mxu0 %v1141
  %2169 = vmatprep.subr.bf16.mxu0 %v1134
  %2170 = vmatpush2.bf16.msra.mxu0 %v1133
  %2171 = vmatprep.subr.bf16.mxu0 %v1126
  %2172 = vmatpush2.bf16.msra.mxu0 %v1125
  %2173 = vmatprep.mubr.bf16.mxu0 %v2017
  %2174 = vmatmul.mubr.bf16.gmra.mxu0 %v2016
  %v2175 = vpop.f32.mrf.mxu0
  %v2176 = vadd.f32 0.0, %v2175
  %v2177 = vpop.f32.mrf.mxu0
  %v2178 = vadd.f32 0.0, %v2177
  %v2179 = vpop.f32.mrf.mxu0
  %v2180 = vpop.f32.mrf.mxu0
  %2181 = vdwg.mxu0
  %v2182 = vadd.f32 %v2008, %v2053
  %v2183 = vadd.f32 %v2009, %v2055
  %v2184 = vadd.f32 %v2010, %v2094
  %v2185 = vadd.f32 %v2011, %v2096
  %v2186 = vadd.f32 %v2012, %v2135
  %v2187 = vadd.f32 %v2013, %v2137
  %v2188 = vadd.f32 %v2014, %v2176
  %v2189 = vadd.f32 %v2015, %v2178
  %v2190 = vxor.u32 %v2182, 2147483648
  %v2191 = vxor.u32 %v2183, 2147483648
  %v2192 = vxor.u32 %v2184, 2147483648
  %v2193 = vxor.u32 %v2185, 2147483648
  %v2194 = vxor.u32 %v2186, 2147483648
  %v2195 = vxor.u32 %v2187, 2147483648
  %v2196 = vmul.f32 %v2190, 1.442695
  %v2197 = vpow.pop %v2196
  %v2198 = vmul.f32 %v2191, 1.442695
  %v2199 = vpow.pop %v2198
  %v2200 = vmul.f32 %v2192, 1.442695
  %v2201 = vpow.pop %v2200
  %v2202 = vmul.f32 %v2193, 1.442695
  %v2203 = vpow.pop %v2202
  %v2204 = vmul.f32 %v2194, 1.442695
  %v2205 = vpow.pop %v2204
  %v2206 = vmul.f32 %v2195, 1.442695
  %v2207 = vpow.pop %v2206
  %v2208 = vadd.f32 %v2197, 1.0
  %v2209 = vadd.f32 %v2199, 1.0
  %v2210 = vadd.f32 %v2201, 1.0
  %v2211 = vadd.f32 %v2203, 1.0
  %v2212 = vadd.f32 %v2205, 1.0
  %v2213 = vadd.f32 %v2207, 1.0
  %v2214 = vrcp.pop %v2208
  %v2215 = vmul.f32 1.0, %v2214
  %v2216 = vrcp.pop %v2209
  %v2217 = vmul.f32 1.0, %v2216
  %v2218 = vrcp.pop %v2210
  %v2219 = vmul.f32 1.0, %v2218
  %v2220 = vrcp.pop %v2211
  %v2221 = vmul.f32 1.0, %v2220
  %v2222 = vrcp.pop %v2212
  %v2223 = vmul.f32 1.0, %v2222
  %v2224 = vrcp.pop %v2213
  %v2225 = vmul.f32 1.0, %v2224
  %v2226 = vtanh.pop %v2188
  %v2227 = vtanh.pop %v2189
  %v2228 = vmul.f32 %v2219, %v1996
  %v2229 = vmul.f32 %v2221, %v1997
  %v2230 = vmul.f32 %v2215, %v2226
  %v2231 = vmul.f32 %v2217, %v2227
  %v2232 = vadd.f32 %v2228, %v2230
  %v2233 = vadd.f32 %v2229, %v2231
  %v2234 = vtanh.pop %v2232
  %v2235 = vtanh.pop %v2233
  %v2236 = vmul.f32 %v2223, %v2234
  %v2237 = vmul.f32 %v2225, %v2235
  %s2238 = scalar_lea.vmem %s6, 48
  %2239 = vst [vmem:[%s2238] sm:$0xff] %v2236
  %2240 = vst [vmem:[%s2238 + $0x8] sm:$0xff] %v2237
  %s2241 = smul.u32 4, 8
  %s2242 = smul.addr %s2241, 8
  %s2243 = scalar_lea.vmem [#allocation2], %s2242
  %v2244 = vld [vmem:[%s2243] sm:$0xff]
  %v2245 = vld [vmem:[%s2243 + $0x8] sm:$0xff]
  %v2246 = vld [vmem:[%s2243 + $0x10] sm:$0xff]
  %v2247 = vld [vmem:[%s2243 + $0x18] sm:$0xff]
  %v2248 = vld [vmem:[%s2243 + $0x20] sm:$0xff]
  %v2249 = vld [vmem:[%s2243 + $0x28] sm:$0xff]
  %v2250 = vld [vmem:[%s2243 + $0x30] sm:$0xff]
  %v2251 = vld [vmem:[%s2243 + $0x38] sm:$0xff]
  %v2252 = vpack.c.bf16 %v2236, %v2236
  %v2253 = vpack.c.bf16 %v2237, %v2237
  %2254 = vmatprep.subr.bf16.mxu0 %v1112
  %2255 = vmatpush1.bf16.msra.mxu0 %v1111
  %2256 = vmatprep.subr.bf16.mxu0 %v1104
  %2257 = vmatpush1.bf16.msra.mxu0 %v1103
  %2258 = vmatprep.subr.bf16.mxu0 %v1096
  %2259 = vmatpush1.bf16.msra.mxu0 %v1095
  %2260 = vmatprep.subr.bf16.mxu0 %v1088
  %2261 = vmatpush1.bf16.msra.mxu0 %v1087
  %2262 = vmatprep.subr.bf16.mxu0 %v1080
  %2263 = vmatpush1.bf16.msra.mxu0 %v1079
  %2264 = vmatprep.subr.bf16.mxu0 %v1072
  %2265 = vmatpush1.bf16.msra.mxu0 %v1071
  %2266 = vmatprep.subr.bf16.mxu0 %v1064
  %2267 = vmatpush1.bf16.msra.mxu0 %v1063
  %2268 = vmatprep.subr.bf16.mxu0 %v1056
  %2269 = vmatpush1.bf16.msra.mxu0 %v1055
  %2270 = vmatprep.subr.bf16.mxu0 %v1176
  %2271 = vmatpush2.bf16.msra.mxu0 %v1175
  %2272 = vmatprep.subr.bf16.mxu0 %v1168
  %2273 = vmatpush2.bf16.msra.mxu0 %v1167
  %2274 = vmatprep.subr.bf16.mxu0 %v1160
  %2275 = vmatpush2.bf16.msra.mxu0 %v1159
  %2276 = vmatprep.subr.bf16.mxu0 %v1152
  %2277 = vmatpush2.bf16.msra.mxu0 %v1151
  %2278 = vmatprep.subr.bf16.mxu0 %v1144
  %2279 = vmatpush2.bf16.msra.mxu0 %v1143
  %2280 = vmatprep.subr.bf16.mxu0 %v1136
  %2281 = vmatpush2.bf16.msra.mxu0 %v1135
  %2282 = vmatprep.subr.bf16.mxu0 %v1128
  %2283 = vmatpush2.bf16.msra.mxu0 %v1127
  %2284 = vmatprep.subr.bf16.mxu0 %v1120
  %2285 = vmatpush2.bf16.msra.mxu0 %v1119
  %2286 = vmatprep.mubr.bf16.mxu0 %v2253
  %2287 = vmatmul.mubr.bf16.gmra.mxu0 %v2252
  %v2288 = vpop.f32.mrf.mxu0
  %v2289 = vadd.f32 0.0, %v2288
  %v2290 = vpop.f32.mrf.mxu0
  %v2291 = vadd.f32 0.0, %v2290
  %v2292 = vpop.f32.mrf.mxu0
  %v2293 = vpop.f32.mrf.mxu0
  %2294 = vdwg.mxu0
  %2295 = vmatprep.subr.bf16.mxu0 %v1114
  %2296 = vmatpush1.bf16.msra.mxu0 %v1113
  %2297 = vmatprep.subr.bf16.mxu0 %v1106
  %2298 = vmatpush1.bf16.msra.mxu0 %v1105
  %2299 = vmatprep.subr.bf16.mxu0 %v1098
  %2300 = vmatpush1.bf16.msra.mxu0 %v1097
  %2301 = vmatprep.subr.bf16.mxu0 %v1090
  %2302 = vmatpush1.bf16.msra.mxu0 %v1089
  %2303 = vmatprep.subr.bf16.mxu0 %v1082
  %2304 = vmatpush1.bf16.msra.mxu0 %v1081
  %2305 = vmatprep.subr.bf16.mxu0 %v1074
  %2306 = vmatpush1.bf16.msra.mxu0 %v1073
  %2307 = vmatprep.subr.bf16.mxu0 %v1066
  %2308 = vmatpush1.bf16.msra.mxu0 %v1065
  %2309 = vmatprep.subr.bf16.mxu0 %v1058
  %2310 = vmatpush1.bf16.msra.mxu0 %v1057
  %2311 = vmatprep.subr.bf16.mxu0 %v1178
  %2312 = vmatpush2.bf16.msra.mxu0 %v1177
  %2313 = vmatprep.subr.bf16.mxu0 %v1170
  %2314 = vmatpush2.bf16.msra.mxu0 %v1169
  %2315 = vmatprep.subr.bf16.mxu0 %v1162
  %2316 = vmatpush2.bf16.msra.mxu0 %v1161
  %2317 = vmatprep.subr.bf16.mxu0 %v1154
  %2318 = vmatpush2.bf16.msra.mxu0 %v1153
  %2319 = vmatprep.subr.bf16.mxu0 %v1146
  %2320 = vmatpush2.bf16.msra.mxu0 %v1145
  %2321 = vmatprep.subr.bf16.mxu0 %v1138
  %2322 = vmatpush2.bf16.msra.mxu0 %v1137
  %2323 = vmatprep.subr.bf16.mxu0 %v1130
  %2324 = vmatpush2.bf16.msra.mxu0 %v1129
  %2325 = vmatprep.subr.bf16.mxu0 %v1122
  %2326 = vmatpush2.bf16.msra.mxu0 %v1121
  %2327 = vmatprep.mubr.bf16.mxu0 %v2253
  %2328 = vmatmul.mubr.bf16.gmra.mxu0 %v2252
  %v2329 = vpop.f32.mrf.mxu0
  %v2330 = vadd.f32 0.0, %v2329
  %v2331 = vpop.f32.mrf.mxu0
  %v2332 = vadd.f32 0.0, %v2331
  %v2333 = vpop.f32.mrf.mxu0
  %v2334 = vpop.f32.mrf.mxu0
  %2335 = vdwg.mxu0
  %2336 = vmatprep.subr.bf16.mxu0 %v1116
  %2337 = vmatpush1.bf16.msra.mxu0 %v1115
  %2338 = vmatprep.subr.bf16.mxu0 %v1108
  %2339 = vmatpush1.bf16.msra.mxu0 %v1107
  %2340 = vmatprep.subr.bf16.mxu0 %v1100
  %2341 = vmatpush1.bf16.msra.mxu0 %v1099
  %2342 = vmatprep.subr.bf16.mxu0 %v1092
  %2343 = vmatpush1.bf16.msra.mxu0 %v1091
  %2344 = vmatprep.subr.bf16.mxu0 %v1084
  %2345 = vmatpush1.bf16.msra.mxu0 %v1083
  %2346 = vmatprep.subr.bf16.mxu0 %v1076
  %2347 = vmatpush1.bf16.msra.mxu0 %v1075
  %2348 = vmatprep.subr.bf16.mxu0 %v1068
  %2349 = vmatpush1.bf16.msra.mxu0 %v1067
  %2350 = vmatprep.subr.bf16.mxu0 %v1060
  %2351 = vmatpush1.bf16.msra.mxu0 %v1059
  %2352 = vmatprep.subr.bf16.mxu0 %v1180
  %2353 = vmatpush2.bf16.msra.mxu0 %v1179
  %2354 = vmatprep.subr.bf16.mxu0 %v1172
  %2355 = vmatpush2.bf16.msra.mxu0 %v1171
  %2356 = vmatprep.subr.bf16.mxu0 %v1164
  %2357 = vmatpush2.bf16.msra.mxu0 %v1163
  %2358 = vmatprep.subr.bf16.mxu0 %v1156
  %2359 = vmatpush2.bf16.msra.mxu0 %v1155
  %2360 = vmatprep.subr.bf16.mxu0 %v1148
  %2361 = vmatpush2.bf16.msra.mxu0 %v1147
  %2362 = vmatprep.subr.bf16.mxu0 %v1140
  %2363 = vmatpush2.bf16.msra.mxu0 %v1139
  %2364 = vmatprep.subr.bf16.mxu0 %v1132
  %2365 = vmatpush2.bf16.msra.mxu0 %v1131
  %2366 = vmatprep.subr.bf16.mxu0 %v1124
  %2367 = vmatpush2.bf16.msra.mxu0 %v1123
  %2368 = vmatprep.mubr.bf16.mxu0 %v2253
  %2369 = vmatmul.mubr.bf16.gmra.mxu0 %v2252
  %v2370 = vpop.f32.mrf.mxu0
  %v2371 = vadd.f32 0.0, %v2370
  %v2372 = vpop.f32.mrf.mxu0
  %v2373 = vadd.f32 0.0, %v2372
  %v2374 = vpop.f32.mrf.mxu0
  %v2375 = vpop.f32.mrf.mxu0
  %2376 = vdwg.mxu0
  %2377 = vmatprep.subr.bf16.mxu0 %v1118
  %2378 = vmatpush1.bf16.msra.mxu0 %v1117
  %2379 = vmatprep.subr.bf16.mxu0 %v1110
  %2380 = vmatpush1.bf16.msra.mxu0 %v1109
  %2381 = vmatprep.subr.bf16.mxu0 %v1102
  %2382 = vmatpush1.bf16.msra.mxu0 %v1101
  %2383 = vmatprep.subr.bf16.mxu0 %v1094
  %2384 = vmatpush1.bf16.msra.mxu0 %v1093
  %2385 = vmatprep.subr.bf16.mxu0 %v1086
  %2386 = vmatpush1.bf16.msra.mxu0 %v1085
  %2387 = vmatprep.subr.bf16.mxu0 %v1078
  %2388 = vmatpush1.bf16.msra.mxu0 %v1077
  %2389 = vmatprep.subr.bf16.mxu0 %v1070
  %2390 = vmatpush1.bf16.msra.mxu0 %v1069
  %2391 = vmatprep.subr.bf16.mxu0 %v1062
  %2392 = vmatpush1.bf16.msra.mxu0 %v1061
  %2393 = vmatprep.subr.bf16.mxu0 %v1182
  %2394 = vmatpush2.bf16.msra.mxu0 %v1181
  %2395 = vmatprep.subr.bf16.mxu0 %v1174
  %2396 = vmatpush2.bf16.msra.mxu0 %v1173
  %2397 = vmatprep.subr.bf16.mxu0 %v1166
  %2398 = vmatpush2.bf16.msra.mxu0 %v1165
  %2399 = vmatprep.subr.bf16.mxu0 %v1158
  %2400 = vmatpush2.bf16.msra.mxu0 %v1157
  %2401 = vmatprep.subr.bf16.mxu0 %v1150
  %2402 = vmatpush2.bf16.msra.mxu0 %v1149
  %2403 = vmatprep.subr.bf16.mxu0 %v1142
  %2404 = vmatpush2.bf16.msra.mxu0 %v1141
  %2405 = vmatprep.subr.bf16.mxu0 %v1134
  %2406 = vmatpush2.bf16.msra.mxu0 %v1133
  %2407 = vmatprep.subr.bf16.mxu0 %v1126
  %2408 = vmatpush2.bf16.msra.mxu0 %v1125
  %2409 = vmatprep.mubr.bf16.mxu0 %v2253
  %2410 = vmatmul.mubr.bf16.gmra.mxu0 %v2252
  %v2411 = vpop.f32.mrf.mxu0
  %v2412 = vadd.f32 0.0, %v2411
  %v2413 = vpop.f32.mrf.mxu0
  %v2414 = vadd.f32 0.0, %v2413
  %v2415 = vpop.f32.mrf.mxu0
  %v2416 = vpop.f32.mrf.mxu0
  %2417 = vdwg.mxu0
  %v2418 = vadd.f32 %v2244, %v2289
  %v2419 = vadd.f32 %v2245, %v2291
  %v2420 = vadd.f32 %v2246, %v2330
  %v2421 = vadd.f32 %v2247, %v2332
  %v2422 = vadd.f32 %v2248, %v2371
  %v2423 = vadd.f32 %v2249, %v2373
  %v2424 = vadd.f32 %v2250, %v2412
  %v2425 = vadd.f32 %v2251, %v2414
  %v2426 = vxor.u32 %v2418, 2147483648
  %v2427 = vxor.u32 %v2419, 2147483648
  %v2428 = vxor.u32 %v2420, 2147483648
  %v2429 = vxor.u32 %v2421, 2147483648
  %v2430 = vxor.u32 %v2422, 2147483648
  %v2431 = vxor.u32 %v2423, 2147483648
  %v2432 = vmul.f32 %v2426, 1.442695
  %v2433 = vpow.pop %v2432
  %v2434 = vmul.f32 %v2427, 1.442695
  %v2435 = vpow.pop %v2434
  %v2436 = vmul.f32 %v2428, 1.442695
  %v2437 = vpow.pop %v2436
  %v2438 = vmul.f32 %v2429, 1.442695
  %v2439 = vpow.pop %v2438
  %v2440 = vmul.f32 %v2430, 1.442695
  %v2441 = vpow.pop %v2440
  %v2442 = vmul.f32 %v2431, 1.442695
  %v2443 = vpow.pop %v2442
  %v2444 = vadd.f32 %v2433, 1.0
  %v2445 = vadd.f32 %v2435, 1.0
  %v2446 = vadd.f32 %v2437, 1.0
  %v2447 = vadd.f32 %v2439, 1.0
  %v2448 = vadd.f32 %v2441, 1.0
  %v2449 = vadd.f32 %v2443, 1.0
  %v2450 = vrcp.pop %v2444
  %v2451 = vmul.f32 1.0, %v2450
  %v2452 = vrcp.pop %v2445
  %v2453 = vmul.f32 1.0, %v2452
  %v2454 = vrcp.pop %v2446
  %v2455 = vmul.f32 1.0, %v2454
  %v2456 = vrcp.pop %v2447
  %v2457 = vmul.f32 1.0, %v2456
  %v2458 = vrcp.pop %v2448
  %v2459 = vmul.f32 1.0, %v2458
  %v2460 = vrcp.pop %v2449
  %v2461 = vmul.f32 1.0, %v2460
  %v2462 = vtanh.pop %v2424
  %v2463 = vtanh.pop %v2425
  %v2464 = vmul.f32 %v2455, %v2232
  %v2465 = vmul.f32 %v2457, %v2233
  %v2466 = vmul.f32 %v2451, %v2462
  %v2467 = vmul.f32 %v2453, %v2463
  %v2468 = vadd.f32 %v2464, %v2466
  %v2469 = vadd.f32 %v2465, %v2467
  %v2470 = vtanh.pop %v2468
  %v2471 = vtanh.pop %v2469
  %v2472 = vmul.f32 %v2459, %v2470
  %v2473 = vmul.f32 %v2461, %v2471
  %s2474 = scalar_lea.vmem %s6, 64
  %2475 = vst [vmem:[%s2474] sm:$0xff] %v2472
  %2476 = vst [vmem:[%s2474 + $0x8] sm:$0xff] %v2473
  %s2477 = smul.u32 5, 8
  %s2478 = smul.addr %s2477, 8
  %s2479 = scalar_lea.vmem [#allocation2], %s2478
  %v2480 = vld [vmem:[%s2479] sm:$0xff]
  %v2481 = vld [vmem:[%s2479 + $0x8] sm:$0xff]
  %v2482 = vld [vmem:[%s2479 + $0x10] sm:$0xff]
  %v2483 = vld [vmem:[%s2479 + $0x18] sm:$0xff]
  %v2484 = vld [vmem:[%s2479 + $0x20] sm:$0xff]
  %v2485 = vld [vmem:[%s2479 + $0x28] sm:$0xff]
  %v2486 = vld [vmem:[%s2479 + $0x30] sm:$0xff]
  %v2487 = vld [vmem:[%s2479 + $0x38] sm:$0xff]
  %v2488 = vpack.c.bf16 %v2472, %v2472
  %v2489 = vpack.c.bf16 %v2473, %v2473
  %2490 = vmatprep.subr.bf16.mxu0 %v1112
  %2491 = vmatpush1.bf16.msra.mxu0 %v1111
  %2492 = vmatprep.subr.bf16.mxu0 %v1104
  %2493 = vmatpush1.bf16.msra.mxu0 %v1103
  %2494 = vmatprep.subr.bf16.mxu0 %v1096
  %2495 = vmatpush1.bf16.msra.mxu0 %v1095
  %2496 = vmatprep.subr.bf16.mxu0 %v1088
  %2497 = vmatpush1.bf16.msra.mxu0 %v1087
  %2498 = vmatprep.subr.bf16.mxu0 %v1080
  %2499 = vmatpush1.bf16.msra.mxu0 %v1079
  %2500 = vmatprep.subr.bf16.mxu0 %v1072
  %2501 = vmatpush1.bf16.msra.mxu0 %v1071
  %2502 = vmatprep.subr.bf16.mxu0 %v1064
  %2503 = vmatpush1.bf16.msra.mxu0 %v1063
  %2504 = vmatprep.subr.bf16.mxu0 %v1056
  %2505 = vmatpush1.bf16.msra.mxu0 %v1055
  %2506 = vmatprep.subr.bf16.mxu0 %v1176
  %2507 = vmatpush2.bf16.msra.mxu0 %v1175
  %2508 = vmatprep.subr.bf16.mxu0 %v1168
  %2509 = vmatpush2.bf16.msra.mxu0 %v1167
  %2510 = vmatprep.subr.bf16.mxu0 %v1160
  %2511 = vmatpush2.bf16.msra.mxu0 %v1159
  %2512 = vmatprep.subr.bf16.mxu0 %v1152
  %2513 = vmatpush2.bf16.msra.mxu0 %v1151
  %2514 = vmatprep.subr.bf16.mxu0 %v1144
  %2515 = vmatpush2.bf16.msra.mxu0 %v1143
  %2516 = vmatprep.subr.bf16.mxu0 %v1136
  %2517 = vmatpush2.bf16.msra.mxu0 %v1135
  %2518 = vmatprep.subr.bf16.mxu0 %v1128
  %2519 = vmatpush2.bf16.msra.mxu0 %v1127
  %2520 = vmatprep.subr.bf16.mxu0 %v1120
  %2521 = vmatpush2.bf16.msra.mxu0 %v1119
  %2522 = vmatprep.mubr.bf16.mxu0 %v2489
  %2523 = vmatmul.mubr.bf16.gmra.mxu0 %v2488
  %v2524 = vpop.f32.mrf.mxu0
  %v2525 = vadd.f32 0.0, %v2524
  %v2526 = vpop.f32.mrf.mxu0
  %v2527 = vadd.f32 0.0, %v2526
  %v2528 = vpop.f32.mrf.mxu0
  %v2529 = vpop.f32.mrf.mxu0
  %2530 = vdwg.mxu0
  %2531 = vmatprep.subr.bf16.mxu0 %v1114
  %2532 = vmatpush1.bf16.msra.mxu0 %v1113
  %2533 = vmatprep.subr.bf16.mxu0 %v1106
  %2534 = vmatpush1.bf16.msra.mxu0 %v1105
  %2535 = vmatprep.subr.bf16.mxu0 %v1098
  %2536 = vmatpush1.bf16.msra.mxu0 %v1097
  %2537 = vmatprep.subr.bf16.mxu0 %v1090
  %2538 = vmatpush1.bf16.msra.mxu0 %v1089
  %2539 = vmatprep.subr.bf16.mxu0 %v1082
  %2540 = vmatpush1.bf16.msra.mxu0 %v1081
  %2541 = vmatprep.subr.bf16.mxu0 %v1074
  %2542 = vmatpush1.bf16.msra.mxu0 %v1073
  %2543 = vmatprep.subr.bf16.mxu0 %v1066
  %2544 = vmatpush1.bf16.msra.mxu0 %v1065
  %2545 = vmatprep.subr.bf16.mxu0 %v1058
  %2546 = vmatpush1.bf16.msra.mxu0 %v1057
  %2547 = vmatprep.subr.bf16.mxu0 %v1178
  %2548 = vmatpush2.bf16.msra.mxu0 %v1177
  %2549 = vmatprep.subr.bf16.mxu0 %v1170
  %2550 = vmatpush2.bf16.msra.mxu0 %v1169
  %2551 = vmatprep.subr.bf16.mxu0 %v1162
  %2552 = vmatpush2.bf16.msra.mxu0 %v1161
  %2553 = vmatprep.subr.bf16.mxu0 %v1154
  %2554 = vmatpush2.bf16.msra.mxu0 %v1153
  %2555 = vmatprep.subr.bf16.mxu0 %v1146
  %2556 = vmatpush2.bf16.msra.mxu0 %v1145
  %2557 = vmatprep.subr.bf16.mxu0 %v1138
  %2558 = vmatpush2.bf16.msra.mxu0 %v1137
  %2559 = vmatprep.subr.bf16.mxu0 %v1130
  %2560 = vmatpush2.bf16.msra.mxu0 %v1129
  %2561 = vmatprep.subr.bf16.mxu0 %v1122
  %2562 = vmatpush2.bf16.msra.mxu0 %v1121
  %2563 = vmatprep.mubr.bf16.mxu0 %v2489
  %2564 = vmatmul.mubr.bf16.gmra.mxu0 %v2488
  %v2565 = vpop.f32.mrf.mxu0
  %v2566 = vadd.f32 0.0, %v2565
  %v2567 = vpop.f32.mrf.mxu0
  %v2568 = vadd.f32 0.0, %v2567
  %v2569 = vpop.f32.mrf.mxu0
  %v2570 = vpop.f32.mrf.mxu0
  %2571 = vdwg.mxu0
  %2572 = vmatprep.subr.bf16.mxu0 %v1116
  %2573 = vmatpush1.bf16.msra.mxu0 %v1115
  %2574 = vmatprep.subr.bf16.mxu0 %v1108
  %2575 = vmatpush1.bf16.msra.mxu0 %v1107
  %2576 = vmatprep.subr.bf16.mxu0 %v1100
  %2577 = vmatpush1.bf16.msra.mxu0 %v1099
  %2578 = vmatprep.subr.bf16.mxu0 %v1092
  %2579 = vmatpush1.bf16.msra.mxu0 %v1091
  %2580 = vmatprep.subr.bf16.mxu0 %v1084
  %2581 = vmatpush1.bf16.msra.mxu0 %v1083
  %2582 = vmatprep.subr.bf16.mxu0 %v1076
  %2583 = vmatpush1.bf16.msra.mxu0 %v1075
  %2584 = vmatprep.subr.bf16.mxu0 %v1068
  %2585 = vmatpush1.bf16.msra.mxu0 %v1067
  %2586 = vmatprep.subr.bf16.mxu0 %v1060
  %2587 = vmatpush1.bf16.msra.mxu0 %v1059
  %2588 = vmatprep.subr.bf16.mxu0 %v1180
  %2589 = vmatpush2.bf16.msra.mxu0 %v1179
  %2590 = vmatprep.subr.bf16.mxu0 %v1172
  %2591 = vmatpush2.bf16.msra.mxu0 %v1171
  %2592 = vmatprep.subr.bf16.mxu0 %v1164
  %2593 = vmatpush2.bf16.msra.mxu0 %v1163
  %2594 = vmatprep.subr.bf16.mxu0 %v1156
  %2595 = vmatpush2.bf16.msra.mxu0 %v1155
  %2596 = vmatprep.subr.bf16.mxu0 %v1148
  %2597 = vmatpush2.bf16.msra.mxu0 %v1147
  %2598 = vmatprep.subr.bf16.mxu0 %v1140
  %2599 = vmatpush2.bf16.msra.mxu0 %v1139
  %2600 = vmatprep.subr.bf16.mxu0 %v1132
  %2601 = vmatpush2.bf16.msra.mxu0 %v1131
  %2602 = vmatprep.subr.bf16.mxu0 %v1124
  %2603 = vmatpush2.bf16.msra.mxu0 %v1123
  %2604 = vmatprep.mubr.bf16.mxu0 %v2489
  %2605 = vmatmul.mubr.bf16.gmra.mxu0 %v2488
  %v2606 = vpop.f32.mrf.mxu0
  %v2607 = vadd.f32 0.0, %v2606
  %v2608 = vpop.f32.mrf.mxu0
  %v2609 = vadd.f32 0.0, %v2608
  %v2610 = vpop.f32.mrf.mxu0
  %v2611 = vpop.f32.mrf.mxu0
  %2612 = vdwg.mxu0
  %2613 = vmatprep.subr.bf16.mxu0 %v1118
  %2614 = vmatpush1.bf16.msra.mxu0 %v1117
  %2615 = vmatprep.subr.bf16.mxu0 %v1110
  %2616 = vmatpush1.bf16.msra.mxu0 %v1109
  %2617 = vmatprep.subr.bf16.mxu0 %v1102
  %2618 = vmatpush1.bf16.msra.mxu0 %v1101
  %2619 = vmatprep.subr.bf16.mxu0 %v1094
  %2620 = vmatpush1.bf16.msra.mxu0 %v1093
  %2621 = vmatprep.subr.bf16.mxu0 %v1086
  %2622 = vmatpush1.bf16.msra.mxu0 %v1085
  %2623 = vmatprep.subr.bf16.mxu0 %v1078
  %2624 = vmatpush1.bf16.msra.mxu0 %v1077
  %2625 = vmatprep.subr.bf16.mxu0 %v1070
  %2626 = vmatpush1.bf16.msra.mxu0 %v1069
  %2627 = vmatprep.subr.bf16.mxu0 %v1062
  %2628 = vmatpush1.bf16.msra.mxu0 %v1061
  %2629 = vmatprep.subr.bf16.mxu0 %v1182
  %2630 = vmatpush2.bf16.msra.mxu0 %v1181
  %2631 = vmatprep.subr.bf16.mxu0 %v1174
  %2632 = vmatpush2.bf16.msra.mxu0 %v1173
  %2633 = vmatprep.subr.bf16.mxu0 %v1166
  %2634 = vmatpush2.bf16.msra.mxu0 %v1165
  %2635 = vmatprep.subr.bf16.mxu0 %v1158
  %2636 = vmatpush2.bf16.msra.mxu0 %v1157
  %2637 = vmatprep.subr.bf16.mxu0 %v1150
  %2638 = vmatpush2.bf16.msra.mxu0 %v1149
  %2639 = vmatprep.subr.bf16.mxu0 %v1142
  %2640 = vmatpush2.bf16.msra.mxu0 %v1141
  %2641 = vmatprep.subr.bf16.mxu0 %v1134
  %2642 = vmatpush2.bf16.msra.mxu0 %v1133
  %2643 = vmatprep.subr.bf16.mxu0 %v1126
  %2644 = vmatpush2.bf16.msra.mxu0 %v1125
  %2645 = vmatprep.mubr.bf16.mxu0 %v2489
  %2646 = vmatmul.mubr.bf16.gmra.mxu0 %v2488
  %v2647 = vpop.f32.mrf.mxu0
  %v2648 = vadd.f32 0.0, %v2647
  %v2649 = vpop.f32.mrf.mxu0
  %v2650 = vadd.f32 0.0, %v2649
  %v2651 = vpop.f32.mrf.mxu0
  %v2652 = vpop.f32.mrf.mxu0
  %2653 = vdwg.mxu0
  %v2654 = vadd.f32 %v2480, %v2525
  %v2655 = vadd.f32 %v2481, %v2527
  %v2656 = vadd.f32 %v2482, %v2566
  %v2657 = vadd.f32 %v2483, %v2568
  %v2658 = vadd.f32 %v2484, %v2607
  %v2659 = vadd.f32 %v2485, %v2609
  %v2660 = vadd.f32 %v2486, %v2648
  %v2661 = vadd.f32 %v2487, %v2650
  %v2662 = vxor.u32 %v2654, 2147483648
  %v2663 = vxor.u32 %v2655, 2147483648
  %v2664 = vxor.u32 %v2656, 2147483648
  %v2665 = vxor.u32 %v2657, 2147483648
  %v2666 = vxor.u32 %v2658, 2147483648
  %v2667 = vxor.u32 %v2659, 2147483648
  %v2668 = vmul.f32 %v2662, 1.442695
  %v2669 = vpow.pop %v2668
  %v2670 = vmul.f32 %v2663, 1.442695
  %v2671 = vpow.pop %v2670
  %v2672 = vmul.f32 %v2664, 1.442695
  %v2673 = vpow.pop %v2672
  %v2674 = vmul.f32 %v2665, 1.442695
  %v2675 = vpow.pop %v2674
  %v2676 = vmul.f32 %v2666, 1.442695
  %v2677 = vpow.pop %v2676
  %v2678 = vmul.f32 %v2667, 1.442695
  %v2679 = vpow.pop %v2678
  %v2680 = vadd.f32 %v2669, 1.0
  %v2681 = vadd.f32 %v2671, 1.0
  %v2682 = vadd.f32 %v2673, 1.0
  %v2683 = vadd.f32 %v2675, 1.0
  %v2684 = vadd.f32 %v2677, 1.0
  %v2685 = vadd.f32 %v2679, 1.0
  %v2686 = vrcp.pop %v2680
  %v2687 = vmul.f32 1.0, %v2686
  %v2688 = vrcp.pop %v2681
  %v2689 = vmul.f32 1.0, %v2688
  %v2690 = vrcp.pop %v2682
  %v2691 = vmul.f32 1.0, %v2690
  %v2692 = vrcp.pop %v2683
  %v2693 = vmul.f32 1.0, %v2692
  %v2694 = vrcp.pop %v2684
  %v2695 = vmul.f32 1.0, %v2694
  %v2696 = vrcp.pop %v2685
  %v2697 = vmul.f32 1.0, %v2696
  %v2698 = vtanh.pop %v2660
  %v2699 = vtanh.pop %v2661
  %v2700 = vmul.f32 %v2691, %v2468
  %v2701 = vmul.f32 %v2693, %v2469
  %v2702 = vmul.f32 %v2687, %v2698
  %v2703 = vmul.f32 %v2689, %v2699
  %v2704 = vadd.f32 %v2700, %v2702
  %v2705 = vadd.f32 %v2701, %v2703
  %v2706 = vtanh.pop %v2704
  %v2707 = vtanh.pop %v2705
  %v2708 = vmul.f32 %v2695, %v2706
  %v2709 = vmul.f32 %v2697, %v2707
  %s2710 = scalar_lea.vmem %s6, 80
  %2711 = vst [vmem:[%s2710] sm:$0xff] %v2708
  %2712 = vst [vmem:[%s2710 + $0x8] sm:$0xff] %v2709
  %s2713 = smul.u32 6, 8
  %s2714 = smul.addr %s2713, 8
  %s2715 = scalar_lea.vmem [#allocation2], %s2714
  %v2716 = vld [vmem:[%s2715] sm:$0xff]
  %v2717 = vld [vmem:[%s2715 + $0x8] sm:$0xff]
  %v2718 = vld [vmem:[%s2715 + $0x10] sm:$0xff]
  %v2719 = vld [vmem:[%s2715 + $0x18] sm:$0xff]
  %v2720 = vld [vmem:[%s2715 + $0x20] sm:$0xff]
  %v2721 = vld [vmem:[%s2715 + $0x28] sm:$0xff]
  %v2722 = vld [vmem:[%s2715 + $0x30] sm:$0xff]
  %v2723 = vld [vmem:[%s2715 + $0x38] sm:$0xff]
  %v2724 = vpack.c.bf16 %v2708, %v2708
  %v2725 = vpack.c.bf16 %v2709, %v2709
  %2726 = vmatprep.subr.bf16.mxu0 %v1112
  %2727 = vmatpush1.bf16.msra.mxu0 %v1111
  %2728 = vmatprep.subr.bf16.mxu0 %v1104
  %2729 = vmatpush1.bf16.msra.mxu0 %v1103
  %2730 = vmatprep.subr.bf16.mxu0 %v1096
  %2731 = vmatpush1.bf16.msra.mxu0 %v1095
  %2732 = vmatprep.subr.bf16.mxu0 %v1088
  %2733 = vmatpush1.bf16.msra.mxu0 %v1087
  %2734 = vmatprep.subr.bf16.mxu0 %v1080
  %2735 = vmatpush1.bf16.msra.mxu0 %v1079
  %2736 = vmatprep.subr.bf16.mxu0 %v1072
  %2737 = vmatpush1.bf16.msra.mxu0 %v1071
  %2738 = vmatprep.subr.bf16.mxu0 %v1064
  %2739 = vmatpush1.bf16.msra.mxu0 %v1063
  %2740 = vmatprep.subr.bf16.mxu0 %v1056
  %2741 = vmatpush1.bf16.msra.mxu0 %v1055
  %2742 = vmatprep.subr.bf16.mxu0 %v1176
  %2743 = vmatpush2.bf16.msra.mxu0 %v1175
  %2744 = vmatprep.subr.bf16.mxu0 %v1168
  %2745 = vmatpush2.bf16.msra.mxu0 %v1167
  %2746 = vmatprep.subr.bf16.mxu0 %v1160
  %2747 = vmatpush2.bf16.msra.mxu0 %v1159
  %2748 = vmatprep.subr.bf16.mxu0 %v1152
  %2749 = vmatpush2.bf16.msra.mxu0 %v1151
  %2750 = vmatprep.subr.bf16.mxu0 %v1144
  %2751 = vmatpush2.bf16.msra.mxu0 %v1143
  %2752 = vmatprep.subr.bf16.mxu0 %v1136
  %2753 = vmatpush2.bf16.msra.mxu0 %v1135
  %2754 = vmatprep.subr.bf16.mxu0 %v1128
  %2755 = vmatpush2.bf16.msra.mxu0 %v1127
  %2756 = vmatprep.subr.bf16.mxu0 %v1120
  %2757 = vmatpush2.bf16.msra.mxu0 %v1119
  %2758 = vmatprep.mubr.bf16.mxu0 %v2725
  %2759 = vmatmul.mubr.bf16.gmra.mxu0 %v2724
  %v2760 = vpop.f32.mrf.mxu0
  %v2761 = vadd.f32 0.0, %v2760
  %v2762 = vpop.f32.mrf.mxu0
  %v2763 = vadd.f32 0.0, %v2762
  %v2764 = vpop.f32.mrf.mxu0
  %v2765 = vpop.f32.mrf.mxu0
  %2766 = vdwg.mxu0
  %2767 = vmatprep.subr.bf16.mxu0 %v1114
  %2768 = vmatpush1.bf16.msra.mxu0 %v1113
  %2769 = vmatprep.subr.bf16.mxu0 %v1106
  %2770 = vmatpush1.bf16.msra.mxu0 %v1105
  %2771 = vmatprep.subr.bf16.mxu0 %v1098
  %2772 = vmatpush1.bf16.msra.mxu0 %v1097
  %2773 = vmatprep.subr.bf16.mxu0 %v1090
  %2774 = vmatpush1.bf16.msra.mxu0 %v1089
  %2775 = vmatprep.subr.bf16.mxu0 %v1082
  %2776 = vmatpush1.bf16.msra.mxu0 %v1081
  %2777 = vmatprep.subr.bf16.mxu0 %v1074
  %2778 = vmatpush1.bf16.msra.mxu0 %v1073
  %2779 = vmatprep.subr.bf16.mxu0 %v1066
  %2780 = vmatpush1.bf16.msra.mxu0 %v1065
  %2781 = vmatprep.subr.bf16.mxu0 %v1058
  %2782 = vmatpush1.bf16.msra.mxu0 %v1057
  %2783 = vmatprep.subr.bf16.mxu0 %v1178
  %2784 = vmatpush2.bf16.msra.mxu0 %v1177
  %2785 = vmatprep.subr.bf16.mxu0 %v1170
  %2786 = vmatpush2.bf16.msra.mxu0 %v1169
  %2787 = vmatprep.subr.bf16.mxu0 %v1162
  %2788 = vmatpush2.bf16.msra.mxu0 %v1161
  %2789 = vmatprep.subr.bf16.mxu0 %v1154
  %2790 = vmatpush2.bf16.msra.mxu0 %v1153
  %2791 = vmatprep.subr.bf16.mxu0 %v1146
  %2792 = vmatpush2.bf16.msra.mxu0 %v1145
  %2793 = vmatprep.subr.bf16.mxu0 %v1138
  %2794 = vmatpush2.bf16.msra.mxu0 %v1137
  %2795 = vmatprep.subr.bf16.mxu0 %v1130
  %2796 = vmatpush2.bf16.msra.mxu0 %v1129
  %2797 = vmatprep.subr.bf16.mxu0 %v1122
  %2798 = vmatpush2.bf16.msra.mxu0 %v1121
  %2799 = vmatprep.mubr.bf16.mxu0 %v2725
  %2800 = vmatmul.mubr.bf16.gmra.mxu0 %v2724
  %v2801 = vpop.f32.mrf.mxu0
  %v2802 = vadd.f32 0.0, %v2801
  %v2803 = vpop.f32.mrf.mxu0
  %v2804 = vadd.f32 0.0, %v2803
  %v2805 = vpop.f32.mrf.mxu0
  %v2806 = vpop.f32.mrf.mxu0
  %2807 = vdwg.mxu0
  %2808 = vmatprep.subr.bf16.mxu0 %v1116
  %2809 = vmatpush1.bf16.msra.mxu0 %v1115
  %2810 = vmatprep.subr.bf16.mxu0 %v1108
  %2811 = vmatpush1.bf16.msra.mxu0 %v1107
  %2812 = vmatprep.subr.bf16.mxu0 %v1100
  %2813 = vmatpush1.bf16.msra.mxu0 %v1099
  %2814 = vmatprep.subr.bf16.mxu0 %v1092
  %2815 = vmatpush1.bf16.msra.mxu0 %v1091
  %2816 = vmatprep.subr.bf16.mxu0 %v1084
  %2817 = vmatpush1.bf16.msra.mxu0 %v1083
  %2818 = vmatprep.subr.bf16.mxu0 %v1076
  %2819 = vmatpush1.bf16.msra.mxu0 %v1075
  %2820 = vmatprep.subr.bf16.mxu0 %v1068
  %2821 = vmatpush1.bf16.msra.mxu0 %v1067
  %2822 = vmatprep.subr.bf16.mxu0 %v1060
  %2823 = vmatpush1.bf16.msra.mxu0 %v1059
  %2824 = vmatprep.subr.bf16.mxu0 %v1180
  %2825 = vmatpush2.bf16.msra.mxu0 %v1179
  %2826 = vmatprep.subr.bf16.mxu0 %v1172
  %2827 = vmatpush2.bf16.msra.mxu0 %v1171
  %2828 = vmatprep.subr.bf16.mxu0 %v1164
  %2829 = vmatpush2.bf16.msra.mxu0 %v1163
  %2830 = vmatprep.subr.bf16.mxu0 %v1156
  %2831 = vmatpush2.bf16.msra.mxu0 %v1155
  %2832 = vmatprep.subr.bf16.mxu0 %v1148
  %2833 = vmatpush2.bf16.msra.mxu0 %v1147
  %2834 = vmatprep.subr.bf16.mxu0 %v1140
  %2835 = vmatpush2.bf16.msra.mxu0 %v1139
  %2836 = vmatprep.subr.bf16.mxu0 %v1132
  %2837 = vmatpush2.bf16.msra.mxu0 %v1131
  %2838 = vmatprep.subr.bf16.mxu0 %v1124
  %2839 = vmatpush2.bf16.msra.mxu0 %v1123
  %2840 = vmatprep.mubr.bf16.mxu0 %v2725
  %2841 = vmatmul.mubr.bf16.gmra.mxu0 %v2724
  %v2842 = vpop.f32.mrf.mxu0
  %v2843 = vadd.f32 0.0, %v2842
  %v2844 = vpop.f32.mrf.mxu0
  %v2845 = vadd.f32 0.0, %v2844
  %v2846 = vpop.f32.mrf.mxu0
  %v2847 = vpop.f32.mrf.mxu0
  %2848 = vdwg.mxu0
  %2849 = vmatprep.subr.bf16.mxu0 %v1118
  %2850 = vmatpush1.bf16.msra.mxu0 %v1117
  %2851 = vmatprep.subr.bf16.mxu0 %v1110
  %2852 = vmatpush1.bf16.msra.mxu0 %v1109
  %2853 = vmatprep.subr.bf16.mxu0 %v1102
  %2854 = vmatpush1.bf16.msra.mxu0 %v1101
  %2855 = vmatprep.subr.bf16.mxu0 %v1094
  %2856 = vmatpush1.bf16.msra.mxu0 %v1093
  %2857 = vmatprep.subr.bf16.mxu0 %v1086
  %2858 = vmatpush1.bf16.msra.mxu0 %v1085
  %2859 = vmatprep.subr.bf16.mxu0 %v1078
  %2860 = vmatpush1.bf16.msra.mxu0 %v1077
  %2861 = vmatprep.subr.bf16.mxu0 %v1070
  %2862 = vmatpush1.bf16.msra.mxu0 %v1069
  %2863 = vmatprep.subr.bf16.mxu0 %v1062
  %2864 = vmatpush1.bf16.msra.mxu0 %v1061
  %2865 = vmatprep.subr.bf16.mxu0 %v1182
  %2866 = vmatpush2.bf16.msra.mxu0 %v1181
  %2867 = vmatprep.subr.bf16.mxu0 %v1174
  %2868 = vmatpush2.bf16.msra.mxu0 %v1173
  %2869 = vmatprep.subr.bf16.mxu0 %v1166
  %2870 = vmatpush2.bf16.msra.mxu0 %v1165
  %2871 = vmatprep.subr.bf16.mxu0 %v1158
  %2872 = vmatpush2.bf16.msra.mxu0 %v1157
  %2873 = vmatprep.subr.bf16.mxu0 %v1150
  %2874 = vmatpush2.bf16.msra.mxu0 %v1149
  %2875 = vmatprep.subr.bf16.mxu0 %v1142
  %2876 = vmatpush2.bf16.msra.mxu0 %v1141
  %2877 = vmatprep.subr.bf16.mxu0 %v1134
  %2878 = vmatpush2.bf16.msra.mxu0 %v1133
  %2879 = vmatprep.subr.bf16.mxu0 %v1126
  %2880 = vmatpush2.bf16.msra.mxu0 %v1125
  %2881 = vmatprep.mubr.bf16.mxu0 %v2725
  %2882 = vmatmul.mubr.bf16.gmra.mxu0 %v2724
  %v2883 = vpop.f32.mrf.mxu0
  %v2884 = vadd.f32 0.0, %v2883
  %v2885 = vpop.f32.mrf.mxu0
  %v2886 = vadd.f32 0.0, %v2885
  %v2887 = vpop.f32.mrf.mxu0
  %v2888 = vpop.f32.mrf.mxu0
  %2889 = vdwg.mxu0
  %v2890 = vadd.f32 %v2716, %v2761
  %v2891 = vadd.f32 %v2717, %v2763
  %v2892 = vadd.f32 %v2718, %v2802
  %v2893 = vadd.f32 %v2719, %v2804
  %v2894 = vadd.f32 %v2720, %v2843
  %v2895 = vadd.f32 %v2721, %v2845
  %v2896 = vadd.f32 %v2722, %v2884
  %v2897 = vadd.f32 %v2723, %v2886
  %v2898 = vxor.u32 %v2890, 2147483648
  %v2899 = vxor.u32 %v2891, 2147483648
  %v2900 = vxor.u32 %v2892, 2147483648
  %v2901 = vxor.u32 %v2893, 2147483648
  %v2902 = vxor.u32 %v2894, 2147483648
  %v2903 = vxor.u32 %v2895, 2147483648
  %v2904 = vmul.f32 %v2898, 1.442695
  %v2905 = vpow.pop %v2904
  %v2906 = vmul.f32 %v2899, 1.442695
  %v2907 = vpow.pop %v2906
  %v2908 = vmul.f32 %v2900, 1.442695
  %v2909 = vpow.pop %v2908
  %v2910 = vmul.f32 %v2901, 1.442695
  %v2911 = vpow.pop %v2910
  %v2912 = vmul.f32 %v2902, 1.442695
  %v2913 = vpow.pop %v2912
  %v2914 = vmul.f32 %v2903, 1.442695
  %v2915 = vpow.pop %v2914
  %v2916 = vadd.f32 %v2905, 1.0
  %v2917 = vadd.f32 %v2907, 1.0
  %v2918 = vadd.f32 %v2909, 1.0
  %v2919 = vadd.f32 %v2911, 1.0
  %v2920 = vadd.f32 %v2913, 1.0
  %v2921 = vadd.f32 %v2915, 1.0
  %v2922 = vrcp.pop %v2916
  %v2923 = vmul.f32 1.0, %v2922
  %v2924 = vrcp.pop %v2917
  %v2925 = vmul.f32 1.0, %v2924
  %v2926 = vrcp.pop %v2918
  %v2927 = vmul.f32 1.0, %v2926
  %v2928 = vrcp.pop %v2919
  %v2929 = vmul.f32 1.0, %v2928
  %v2930 = vrcp.pop %v2920
  %v2931 = vmul.f32 1.0, %v2930
  %v2932 = vrcp.pop %v2921
  %v2933 = vmul.f32 1.0, %v2932
  %v2934 = vtanh.pop %v2896
  %v2935 = vtanh.pop %v2897
  %v2936 = vmul.f32 %v2927, %v2704
  %v2937 = vmul.f32 %v2929, %v2705
  %v2938 = vmul.f32 %v2923, %v2934
  %v2939 = vmul.f32 %v2925, %v2935
  %v2940 = vadd.f32 %v2936, %v2938
  %v2941 = vadd.f32 %v2937, %v2939
  %v2942 = vtanh.pop %v2940
  %v2943 = vtanh.pop %v2941
  %v2944 = vmul.f32 %v2931, %v2942
  %v2945 = vmul.f32 %v2933, %v2943
  %s2946 = scalar_lea.vmem %s6, 96
  %2947 = vst [vmem:[%s2946] sm:$0xff] %v2944
  %2948 = vst [vmem:[%s2946 + $0x8] sm:$0xff] %v2945
  %s2949 = smul.u32 7, 8
  %s2950 = smul.addr %s2949, 8
  %s2951 = scalar_lea.vmem [#allocation2], %s2950
  %v2952 = vld [vmem:[%s2951] sm:$0xff]
  %v2953 = vld [vmem:[%s2951 + $0x8] sm:$0xff]
  %v2954 = vld [vmem:[%s2951 + $0x10] sm:$0xff]
  %v2955 = vld [vmem:[%s2951 + $0x18] sm:$0xff]
  %v2956 = vld [vmem:[%s2951 + $0x20] sm:$0xff]
  %v2957 = vld [vmem:[%s2951 + $0x28] sm:$0xff]
  %v2958 = vld [vmem:[%s2951 + $0x30] sm:$0xff]
  %v2959 = vld [vmem:[%s2951 + $0x38] sm:$0xff]
  %v2960 = vpack.c.bf16 %v2944, %v2944
  %v2961 = vpack.c.bf16 %v2945, %v2945
  %2962 = vmatprep.subr.bf16.mxu0 %v1112
  %2963 = vmatpush1.bf16.msra.mxu0 %v1111
  %2964 = vmatprep.subr.bf16.mxu0 %v1104
  %2965 = vmatpush1.bf16.msra.mxu0 %v1103
  %2966 = vmatprep.subr.bf16.mxu0 %v1096
  %2967 = vmatpush1.bf16.msra.mxu0 %v1095
  %2968 = vmatprep.subr.bf16.mxu0 %v1088
  %2969 = vmatpush1.bf16.msra.mxu0 %v1087
  %2970 = vmatprep.subr.bf16.mxu0 %v1080
  %2971 = vmatpush1.bf16.msra.mxu0 %v1079
  %2972 = vmatprep.subr.bf16.mxu0 %v1072
  %2973 = vmatpush1.bf16.msra.mxu0 %v1071
  %2974 = vmatprep.subr.bf16.mxu0 %v1064
  %2975 = vmatpush1.bf16.msra.mxu0 %v1063
  %2976 = vmatprep.subr.bf16.mxu0 %v1056
  %2977 = vmatpush1.bf16.msra.mxu0 %v1055
  %2978 = vmatprep.subr.bf16.mxu0 %v1176
  %2979 = vmatpush2.bf16.msra.mxu0 %v1175
  %2980 = vmatprep.subr.bf16.mxu0 %v1168
  %2981 = vmatpush2.bf16.msra.mxu0 %v1167
  %2982 = vmatprep.subr.bf16.mxu0 %v1160
  %2983 = vmatpush2.bf16.msra.mxu0 %v1159
  %2984 = vmatprep.subr.bf16.mxu0 %v1152
  %2985 = vmatpush2.bf16.msra.mxu0 %v1151
  %2986 = vmatprep.subr.bf16.mxu0 %v1144
  %2987 = vmatpush2.bf16.msra.mxu0 %v1143
  %2988 = vmatprep.subr.bf16.mxu0 %v1136
  %2989 = vmatpush2.bf16.msra.mxu0 %v1135
  %2990 = vmatprep.subr.bf16.mxu0 %v1128
  %2991 = vmatpush2.bf16.msra.mxu0 %v1127
  %2992 = vmatprep.subr.bf16.mxu0 %v1120
  %2993 = vmatpush2.bf16.msra.mxu0 %v1119
  %2994 = vmatprep.mubr.bf16.mxu0 %v2961
  %2995 = vmatmul.mubr.bf16.gmra.mxu0 %v2960
  %v2996 = vpop.f32.mrf.mxu0
  %v2997 = vadd.f32 0.0, %v2996
  %v2998 = vpop.f32.mrf.mxu0
  %v2999 = vadd.f32 0.0, %v2998
  %v3000 = vpop.f32.mrf.mxu0
  %v3001 = vpop.f32.mrf.mxu0
  %3002 = vdwg.mxu0
  %3003 = vmatprep.subr.bf16.mxu0 %v1114
  %3004 = vmatpush1.bf16.msra.mxu0 %v1113
  %3005 = vmatprep.subr.bf16.mxu0 %v1106
  %3006 = vmatpush1.bf16.msra.mxu0 %v1105
  %3007 = vmatprep.subr.bf16.mxu0 %v1098
  %3008 = vmatpush1.bf16.msra.mxu0 %v1097
  %3009 = vmatprep.subr.bf16.mxu0 %v1090
  %3010 = vmatpush1.bf16.msra.mxu0 %v1089
  %3011 = vmatprep.subr.bf16.mxu0 %v1082
  %3012 = vmatpush1.bf16.msra.mxu0 %v1081
  %3013 = vmatprep.subr.bf16.mxu0 %v1074
  %3014 = vmatpush1.bf16.msra.mxu0 %v1073
  %3015 = vmatprep.subr.bf16.mxu0 %v1066
  %3016 = vmatpush1.bf16.msra.mxu0 %v1065
  %3017 = vmatprep.subr.bf16.mxu0 %v1058
  %3018 = vmatpush1.bf16.msra.mxu0 %v1057
  %3019 = vmatprep.subr.bf16.mxu0 %v1178
  %3020 = vmatpush2.bf16.msra.mxu0 %v1177
  %3021 = vmatprep.subr.bf16.mxu0 %v1170
  %3022 = vmatpush2.bf16.msra.mxu0 %v1169
  %3023 = vmatprep.subr.bf16.mxu0 %v1162
  %3024 = vmatpush2.bf16.msra.mxu0 %v1161
  %3025 = vmatprep.subr.bf16.mxu0 %v1154
  %3026 = vmatpush2.bf16.msra.mxu0 %v1153
  %3027 = vmatprep.subr.bf16.mxu0 %v1146
  %3028 = vmatpush2.bf16.msra.mxu0 %v1145
  %3029 = vmatprep.subr.bf16.mxu0 %v1138
  %3030 = vmatpush2.bf16.msra.mxu0 %v1137
  %3031 = vmatprep.subr.bf16.mxu0 %v1130
  %3032 = vmatpush2.bf16.msra.mxu0 %v1129
  %3033 = vmatprep.subr.bf16.mxu0 %v1122
  %3034 = vmatpush2.bf16.msra.mxu0 %v1121
  %3035 = vmatprep.mubr.bf16.mxu0 %v2961
  %3036 = vmatmul.mubr.bf16.gmra.mxu0 %v2960
  %v3037 = vpop.f32.mrf.mxu0
  %v3038 = vadd.f32 0.0, %v3037
  %v3039 = vpop.f32.mrf.mxu0
  %v3040 = vadd.f32 0.0, %v3039
  %v3041 = vpop.f32.mrf.mxu0
  %v3042 = vpop.f32.mrf.mxu0
  %3043 = vdwg.mxu0
  %3044 = vmatprep.subr.bf16.mxu0 %v1116
  %3045 = vmatpush1.bf16.msra.mxu0 %v1115
  %3046 = vmatprep.subr.bf16.mxu0 %v1108
  %3047 = vmatpush1.bf16.msra.mxu0 %v1107
  %3048 = vmatprep.subr.bf16.mxu0 %v1100
  %3049 = vmatpush1.bf16.msra.mxu0 %v1099
  %3050 = vmatprep.subr.bf16.mxu0 %v1092
  %3051 = vmatpush1.bf16.msra.mxu0 %v1091
  %3052 = vmatprep.subr.bf16.mxu0 %v1084
  %3053 = vmatpush1.bf16.msra.mxu0 %v1083
  %3054 = vmatprep.subr.bf16.mxu0 %v1076
  %3055 = vmatpush1.bf16.msra.mxu0 %v1075
  %3056 = vmatprep.subr.bf16.mxu0 %v1068
  %3057 = vmatpush1.bf16.msra.mxu0 %v1067
  %3058 = vmatprep.subr.bf16.mxu0 %v1060
  %3059 = vmatpush1.bf16.msra.mxu0 %v1059
  %3060 = vmatprep.subr.bf16.mxu0 %v1180
  %3061 = vmatpush2.bf16.msra.mxu0 %v1179
  %3062 = vmatprep.subr.bf16.mxu0 %v1172
  %3063 = vmatpush2.bf16.msra.mxu0 %v1171
  %3064 = vmatprep.subr.bf16.mxu0 %v1164
  %3065 = vmatpush2.bf16.msra.mxu0 %v1163
  %3066 = vmatprep.subr.bf16.mxu0 %v1156
  %3067 = vmatpush2.bf16.msra.mxu0 %v1155
  %3068 = vmatprep.subr.bf16.mxu0 %v1148
  %3069 = vmatpush2.bf16.msra.mxu0 %v1147
  %3070 = vmatprep.subr.bf16.mxu0 %v1140
  %3071 = vmatpush2.bf16.msra.mxu0 %v1139
  %3072 = vmatprep.subr.bf16.mxu0 %v1132
  %3073 = vmatpush2.bf16.msra.mxu0 %v1131
  %3074 = vmatprep.subr.bf16.mxu0 %v1124
  %3075 = vmatpush2.bf16.msra.mxu0 %v1123
  %3076 = vmatprep.mubr.bf16.mxu0 %v2961
  %3077 = vmatmul.mubr.bf16.gmra.mxu0 %v2960
  %v3078 = vpop.f32.mrf.mxu0
  %v3079 = vadd.f32 0.0, %v3078
  %v3080 = vpop.f32.mrf.mxu0
  %v3081 = vadd.f32 0.0, %v3080
  %v3082 = vpop.f32.mrf.mxu0
  %v3083 = vpop.f32.mrf.mxu0
  %3084 = vdwg.mxu0
  %3085 = vmatprep.subr.bf16.mxu0 %v1118
  %3086 = vmatpush1.bf16.msra.mxu0 %v1117
  %3087 = vmatprep.subr.bf16.mxu0 %v1110
  %3088 = vmatpush1.bf16.msra.mxu0 %v1109
  %3089 = vmatprep.subr.bf16.mxu0 %v1102
  %3090 = vmatpush1.bf16.msra.mxu0 %v1101
  %3091 = vmatprep.subr.bf16.mxu0 %v1094
  %3092 = vmatpush1.bf16.msra.mxu0 %v1093
  %3093 = vmatprep.subr.bf16.mxu0 %v1086
  %3094 = vmatpush1.bf16.msra.mxu0 %v1085
  %3095 = vmatprep.subr.bf16.mxu0 %v1078
  %3096 = vmatpush1.bf16.msra.mxu0 %v1077
  %3097 = vmatprep.subr.bf16.mxu0 %v1070
  %3098 = vmatpush1.bf16.msra.mxu0 %v1069
  %3099 = vmatprep.subr.bf16.mxu0 %v1062
  %3100 = vmatpush1.bf16.msra.mxu0 %v1061
  %3101 = vmatprep.subr.bf16.mxu0 %v1182
  %3102 = vmatpush2.bf16.msra.mxu0 %v1181
  %3103 = vmatprep.subr.bf16.mxu0 %v1174
  %3104 = vmatpush2.bf16.msra.mxu0 %v1173
  %3105 = vmatprep.subr.bf16.mxu0 %v1166
  %3106 = vmatpush2.bf16.msra.mxu0 %v1165
  %3107 = vmatprep.subr.bf16.mxu0 %v1158
  %3108 = vmatpush2.bf16.msra.mxu0 %v1157
  %3109 = vmatprep.subr.bf16.mxu0 %v1150
  %3110 = vmatpush2.bf16.msra.mxu0 %v1149
  %3111 = vmatprep.subr.bf16.mxu0 %v1142
  %3112 = vmatpush2.bf16.msra.mxu0 %v1141
  %3113 = vmatprep.subr.bf16.mxu0 %v1134
  %3114 = vmatpush2.bf16.msra.mxu0 %v1133
  %3115 = vmatprep.subr.bf16.mxu0 %v1126
  %3116 = vmatpush2.bf16.msra.mxu0 %v1125
  %3117 = vmatprep.mubr.bf16.mxu0 %v2961
  %3118 = vmatmul.mubr.bf16.gmra.mxu0 %v2960
  %v3119 = vpop.f32.mrf.mxu0
  %v3120 = vadd.f32 0.0, %v3119
  %v3121 = vpop.f32.mrf.mxu0
  %v3122 = vadd.f32 0.0, %v3121
  %v3123 = vpop.f32.mrf.mxu0
  %v3124 = vpop.f32.mrf.mxu0
  %3125 = vdwg.mxu0
  %v3126 = vadd.f32 %v2952, %v2997
  %v3127 = vadd.f32 %v2953, %v2999
  %v3128 = vadd.f32 %v2954, %v3038
  %v3129 = vadd.f32 %v2955, %v3040
  %v3130 = vadd.f32 %v2956, %v3079
  %v3131 = vadd.f32 %v2957, %v3081
  %v3132 = vadd.f32 %v2958, %v3120
  %v3133 = vadd.f32 %v2959, %v3122
  %v3134 = vxor.u32 %v3126, 2147483648
  %v3135 = vxor.u32 %v3127, 2147483648
  %v3136 = vxor.u32 %v3128, 2147483648
  %v3137 = vxor.u32 %v3129, 2147483648
  %v3138 = vxor.u32 %v3130, 2147483648
  %v3139 = vxor.u32 %v3131, 2147483648
  %v3140 = vmul.f32 %v3134, 1.442695
  %v3141 = vpow.pop %v3140
  %v3142 = vmul.f32 %v3135, 1.442695
  %v3143 = vpow.pop %v3142
  %v3144 = vmul.f32 %v3136, 1.442695
  %v3145 = vpow.pop %v3144
  %v3146 = vmul.f32 %v3137, 1.442695
  %v3147 = vpow.pop %v3146
  %v3148 = vmul.f32 %v3138, 1.442695
  %v3149 = vpow.pop %v3148
  %v3150 = vmul.f32 %v3139, 1.442695
  %v3151 = vpow.pop %v3150
  %v3152 = vadd.f32 %v3141, 1.0
  %v3153 = vadd.f32 %v3143, 1.0
  %v3154 = vadd.f32 %v3145, 1.0
  %v3155 = vadd.f32 %v3147, 1.0
  %v3156 = vadd.f32 %v3149, 1.0
  %v3157 = vadd.f32 %v3151, 1.0
  %v3158 = vrcp.pop %v3152
  %v3159 = vmul.f32 1.0, %v3158
  %v3160 = vrcp.pop %v3153
  %v3161 = vmul.f32 1.0, %v3160
  %v3162 = vrcp.pop %v3154
  %v3163 = vmul.f32 1.0, %v3162
  %v3164 = vrcp.pop %v3155
  %v3165 = vmul.f32 1.0, %v3164
  %v3166 = vrcp.pop %v3156
  %v3167 = vmul.f32 1.0, %v3166
  %v3168 = vrcp.pop %v3157
  %v3169 = vmul.f32 1.0, %v3168
  %v3170 = vtanh.pop %v3132
  %v3171 = vtanh.pop %v3133
  %v3172 = vmul.f32 %v3163, %v2940
  %v3173 = vmul.f32 %v3165, %v2941
  %v3174 = vmul.f32 %v3159, %v3170
  %v3175 = vmul.f32 %v3161, %v3171
  %v3176 = vadd.f32 %v3172, %v3174
  %v3177 = vadd.f32 %v3173, %v3175
  %v3178 = vtanh.pop %v3176
  %v3179 = vtanh.pop %v3177
  %v3180 = vmul.f32 %v3167, %v3178
  %v3181 = vmul.f32 %v3169, %v3179
  %s3182 = scalar_lea.vmem %s6, 112
  %3183 = vst [vmem:[%s3182] sm:$0xff] %v3180
  %3184 = vst [vmem:[%s3182 + $0x8] sm:$0xff] %v3181
  %3185 = vst [vmem:[#allocation3] sm:$0xff] %v3180
  %3186 = vst [vmem:[#allocation3 + $0x8] sm:$0xff] %v3181
  %3187 = vst [vmem:[#allocation4] sm:$0xff] %v3176
  %3188 = vst [vmem:[#allocation4 + $0x8] sm:$0xff] %v3177
  // Predicated region
  $region30: #{lstm_forward_pallas.1} parent=0 // pred_check
    %p3189 = pneg %p27
  $region31: #{lstm_forward_pallas.1} parent=0 // pred_check_branch
    %3191 = sbr.rel (%p3189) target = $region33
  $region32: #{lstm_forward_pallas.1} parent=0 // pred_region
    %3192 = vst [vmem:[%s7] sm:$0xff] %v3180
    %3193 = vst [vmem:[%s7 + $0x8] sm:$0xff] %v3181
    %3194 = vst [vmem:[%s8] sm:$0xff] %v3176
    %3195 = vst [vmem:[%s8 + $0x8] sm:$0xff] %v3177
  $region33: #{lstm_forward_pallas.1} parent=0 // pred_fallthru
    _
  // Predicated region
  $region34: #{lstm_forward_pallas.1} parent=0 // pred_check
    _
  $region35: #{lstm_forward_pallas.1} parent=0 // pred_check_branch
    %3197 = sbr.rel (0) target = $region37
  $region36: #{lstm_forward_pallas.1} parent=0 // pred_region
    _
  $region37: #{lstm_forward_pallas.1} parent=0 // pred_fallthru
    _
  // Predicated region
  $region38: #{lstm_forward_pallas.1} parent=0 // pred_check
    _
  $region39: #{lstm_forward_pallas.1} parent=0 // pred_check_branch
    %3199 = sbr.rel (0) target = $region41
  $region40: #{lstm_forward_pallas.1} parent=0 // pred_region
    _
  $region41: #{lstm_forward_pallas.1} parent=0 // pred_fallthru
    _
  // Predicated region
  $region42: #{lstm_forward_pallas.1} parent=0 // pred_check
    _
  $region43: #{lstm_forward_pallas.1} parent=0 // pred_check_branch
    %3201 = sbr.rel (0) target = $region45
  $region44: #{lstm_forward_pallas.1} parent=0 // pred_region
    _
  $region45: #{lstm_forward_pallas.1} parent=0 // pred_fallthru
    _
  // Predicated region
  $region46: #{lstm_forward_pallas.1} parent=0 // pred_check
    _
  $region47: #{lstm_forward_pallas.1} parent=0 // pred_check_branch
    %3203 = sbr.rel (0) target = $region49
  $region48: #{lstm_forward_pallas.1} parent=0 // pred_region
    _
  $region49: #{lstm_forward_pallas.1} parent=0 // pred_fallthru
    _
  // Predicated region
  $region50: #{lstm_forward_pallas.1} parent=0 // pred_check
    _
  $region51: #{lstm_forward_pallas.1} parent=0 // pred_check_branch
    %3205 = sbr.rel (0) target = $region53
  $region52: #{lstm_forward_pallas.1} parent=0 // pred_region
    _
  $region53: #{lstm_forward_pallas.1} parent=0 // pred_fallthru
    _
  // Predicated region
  $region54: #{lstm_forward_pallas.1} parent=0 // pred_check
    _
  $region55: #{lstm_forward_pallas.1} parent=0 // pred_check_branch
    %3207 = sbr.rel (0) target = $region57
  $region56: #{lstm_forward_pallas.1} parent=0 // pred_region
    _
  $region57: #{lstm_forward_pallas.1} parent=0 // pred_fallthru
    _

</llo_original>
